<compile_context>
chip_gen: v5e
topology: v5e:2x2
jax: 0.10.0
libtpu: 0.0.40
codegen_flags: <defaults>
</compile_context>

<pallas_src>
import functools

import numpy as np

import jax
import jax.numpy as jnp
from jax.experimental import pallas as pl
from jax.experimental.pallas import tpu as pltpu

_LANES = 128


# ---------------------------------------------------------------------------
# The single fused kernel (one image per grid step)
# ---------------------------------------------------------------------------

def _fused_net_kernel(x_ref, g_ref, s_ref, wstem_ref, w1x1_ref, wt_ref,
                      wdw_ref, b_ref, whead_ref, o_ref, *, n_blocks, p):
    f32 = jnp.float32
    bf16 = jnp.bfloat16

    def dot32(a, b):
        return jnp.dot(a, b, preferred_element_type=f32)

    # ---- Stem: 3x3 / stride-2 conv + BN + ReLU --------------------------------
    # Per tap t=(di,dj): gather the strided window with the constant 0/1 matrix
    # g[t] (P x Hin*Win) and contract channels on the MXU.  Gather is exact.
    x = x_ref[...]                                          # (S_in, Cin_pad) bf16
    acc = jnp.zeros((p, _LANES), f32)
    for t in range(9):
        patch = dot32(g_ref[t], x).astype(bf16)             # (P, Cin_pad), exact
        acc = acc + dot32(patch, wstem_ref[t])               # (P, 128)
    act = jnp.maximum(acc + b_ref[0], 0.0)                   # f32

    # ---- helper ops on flat (P, 128) activations ------------------------------
    def conv1x1(a, w, bias=None, residual=None, relu=False):
        y = dot32(a.astype(bf16), w)
        if bias is not None:
            y = y + bias
        if residual is not None:
            y = y + residual
        if relu:
            y = jnp.maximum(y, 0.0)
        return y

    def conv_dw3x3(a, dw_idx, bias):
        # depthwise 3x3 (stride 1, pad 1) + BN + ReLU:
        # 9 shift-matmuls (exact shifted copies) + per-channel f32 FMAs.
        ab = a.astype(bf16)
        acc = jnp.zeros((p, _LANES), f32)
        for t in range(9):
            sh = dot32(s_ref[t], ab)                          # (P, 128) f32
            acc = acc + sh * wdw_ref[dw_idx, t]               # (1, 128) broadcast
        return jnp.maximum(acc + bias, 0.0)

    def conv3x3(a, wt_base, bias):
        # dense 3x3 (stride 1, pad 1) + BN + ReLU (Transit).
        ab = a.astype(bf16)
        acc = jnp.zeros((p, _LANES), f32)
        for t in range(9):
            sh = dot32(s_ref[t], ab).astype(bf16)             # exact shifted copy
            acc = acc + dot32(sh, wt_ref[wt_base + t])
        return jnp.maximum(acc + bias, 0.0)

    # ---- Blocks ----------------------------------------------------------------
    bi = 1                                                   # bias index (0 = stem)
    for blk in range(n_blocks):
        w_off = 7 * blk
        t_off = 9 * blk
        d_off = 2 * blk
        x_in = act
        # InvertedBottleneck 1
        o = conv1x1(x_in, w1x1_ref[w_off + 0], b_ref[bi + 0], relu=True)
        o = conv_dw3x3(o, d_off + 0, b_ref[bi + 1])
        o = conv1x1(o, w1x1_ref[w_off + 1], b_ref[bi + 2], relu=True)
        o = conv1x1(o, w1x1_ref[w_off + 2], b_ref[bi + 3], residual=x_in)
        # Transit (3x3 conv + BN + ReLU)
        tr = conv3x3(o, t_off, b_ref[bi + 4])
        # InvertedBottleneck 2
        o = conv1x1(tr, w1x1_ref[w_off + 3], b_ref[bi + 5], relu=True)
        o = conv_dw3x3(o, d_off + 1, b_ref[bi + 6])
        o = conv1x1(o, w1x1_ref[w_off + 4], b_ref[bi + 7], relu=True)
        o = conv1x1(o, w1x1_ref[w_off + 5], b_ref[bi + 8], residual=tr)
        # block output = IB2 out + 1x1 shortcut of the block input (no BN/bias)
        act = o + conv1x1(x_in, w1x1_ref[w_off + 6])
        bi += 9

    # ---- Global average pool fused with the heads (f32) -----------------------
    # mean(act) @ W == mean(act @ W): do the matmul at M = P (well-filled MXU
    # pass), then reduce, so `feat` never leaves the kernel.
    hw_full = jnp.dot(act, whead_ref[...], preferred_element_type=f32)  # (P, 128)
    heads = jnp.sum(hw_full, axis=0, keepdims=True) * (1.0 / p)          # (1, 128)
    heads = heads + b_ref[bi]                                            # label bias / norm
    mask = b_ref[bi + 1]                                                 # 1.0 on closs cols
    heads = jnp.where(mask > 0.0, jnp.maximum(heads, 0.0), heads)
    o_ref[...] = heads


# ---------------------------------------------------------------------------
# One-time host-side weight / geometry preparation
# ---------------------------------------------------------------------------

def _fold_bn(bn, eps=1e-5):
    scale = bn["gamma"] / jnp.sqrt(bn["var"] + eps)
    bias = bn["beta"] - bn["mean"] * scale
    return scale.astype(jnp.float32), bias.astype(jnp.float32)


def _pad2(a, rows, cols):
    return jnp.pad(a, ((0, rows - a.shape[0]), (0, cols - a.shape[1])))


def _pack_1x1(w, scale=None):
    cout, cin = w.shape[0], w.shape[1]
    w2 = w.reshape(cout, cin).T.astype(jnp.float32)          # (Cin, Cout)
    if scale is not None:
        w2 = w2 * scale[None, :]
    return _pad2(w2, _LANES, _LANES).astype(jnp.bfloat16)


def _pack_3x3(w, scale, cin_pad):
    cout, cin = w.shape[0], w.shape[1]
    w9 = jnp.transpose(w, (2, 3, 1, 0)).reshape(9, cin, cout).astype(jnp.float32)
    w9 = w9 * scale[None, None, :]
    w9 = jnp.pad(w9, ((0, 0), (0, cin_pad - cin), (0, _LANES - cout)))
    return w9.astype(jnp.bfloat16)


def _pack_dw(w, scale):
    c = w.shape[0]
    w9 = w.reshape(c, 9).T.astype(jnp.float32) * scale[None, :]    # (9, C)
    w9 = jnp.pad(w9, ((0, 0), (0, _LANES - c)))
    return w9.reshape(9, 1, _LANES).astype(jnp.float32)


def _pack_bias(b):
    b = jnp.asarray(b, jnp.float32)
    return jnp.pad(b, (0, _LANES - b.shape[0]))


def _stem_gather_mats(h_in, w_in, h_out, w_out, stride):
    # G[t, (h,w), (stride*h+di, stride*w+dj)] = 1   (3x3, stride `stride`, pad 0)
    g = np.zeros((9, h_out * w_out, h_in * w_in), np.float32)
    for di in range(3):
        for dj in range(3):
            t = di * 3 + dj
            for ho in range(h_out):
                for wo in range(w_out):
                    src = (stride * ho + di) * w_in + (stride * wo + dj)
                    g[t, ho * w_out + wo, src] = 1.0
    return jnp.asarray(g, jnp.bfloat16)


def _shift_mats(h, w):
    # S[t, (h,w), (h+di-1, w+dj-1)] = 1 when in bounds (3x3, stride 1, pad 1);
    # out-of-bounds rows are all-zero == zero padding.
    s = np.zeros((9, h * w, h * w), np.float32)
    for di in range(3):
        for dj in range(3):
            t = di * 3 + dj
            for ho in range(h):
                for wo in range(w):
                    hs, ws = ho + di - 1, wo + dj - 1
                    if 0 <= hs < h and 0 <= ws < w:
                        s[t, ho * w + wo, hs * w + ws] = 1.0
    return jnp.asarray(s, jnp.bfloat16)


def prepare_model(params, img_hw):
    """Fold BN, pad all channels to 128 lanes, pack weights / geometry once."""
    h_in, w_in = img_hw
    cin = params["w0"].shape[1]
    c_stem = params["w0"].shape[0]
    h_out = (h_in - 3) // 2 + 1
    w_out = (w_in - 3) // 2 + 1
    p = h_out * w_out
    s_in = h_in * w_in
    cin_pad = max(8, ((cin + 7) // 8) * 8)
    n_blocks = len(params["blocks"])

    max_c = c_stem
    for bp in params["blocks"]:
        max_c = max(max_c, bp["w_t"].shape[0],
                    bp["ib1"]["w1"].shape[0], bp["ib2"]["w1"].shape[0])
    assert max_c <= _LANES, "fused kernel assumes all channel widths <= 128"

    scale0, bias0 = _fold_bn(params["bn0"])
    wstem = _pack_3x3(params["w0"], scale0, cin_pad)

    w1x1, wt, wdw, biases = [], [], [], [_pack_bias(bias0)]

    def pack_ib(ib):
        s1, b1 = _fold_bn(ib["bn1"])
        s2, b2 = _fold_bn(ib["bn2"])
        s3, b3 = _fold_bn(ib["bn3"])
        s4, b4 = _fold_bn(ib["bn_out"])
        return ([_pack_1x1(ib["w1"], s1), _pack_1x1(ib["w3"], s3),
                 _pack_1x1(ib["w4"], s4)],
                _pack_dw(ib["w2"], s2),
                [_pack_bias(b1), _pack_bias(b2), _pack_bias(b3), _pack_bias(b4)])

    for bp in params["blocks"]:
        w_ib1, dw1, b_ib1 = pack_ib(bp["ib1"])
        w_ib2, dw2, b_ib2 = pack_ib(bp["ib2"])
        st, bt = _fold_bn(bp["bn_t"])
        w1x1 += w_ib1 + w_ib2 + [_pack_1x1(bp["w_sc"], None)]
        wt.append(_pack_3x3(bp["w_t"], st, _LANES))
        wdw += [dw1, dw2]
        biases += b_ib1 + [_pack_bias(bt)] + b_ib2

    # Heads: label = (feat @ Wl.T + bl) / ||Wl||_row ; closs = relu(feat @ Wc.T)
    Wl = params["w_label"].astype(jnp.float32)
    bl = params["b_label"].astype(jnp.float32)
    Wc = params["w_closs"].astype(jnp.float32)
    ncls, c_feat = Wl.shape
    fd = Wc.shape[0]
    assert ncls + fd <= _LANES
    norm = jnp.sqrt(jnp.sum(Wl * Wl, axis=1))
    whead = jnp.zeros((_LANES, _LANES), jnp.float32)
    whead = whead.at[:c_feat, :ncls].set((Wl / norm[:, None]).T)
    whead = whead.at[:c_feat, ncls:ncls + fd].set(Wc.T)
    bhead = jnp.zeros((_LANES,), jnp.float32).at[:ncls].set(bl / norm)
    mask = jnp.zeros((_LANES,), jnp.float32).at[ncls:ncls + fd].set(1.0)
    biases += [bhead, mask]

    arrays = dict(
        g=_stem_gather_mats(h_in, w_in, h_out, w_out, 2),
        s=_shift_mats(h_out, w_out),
        wstem=wstem,
        w1x1=jnp.stack(w1x1),
        wt=jnp.concatenate(wt, axis=0),
        wdw=jnp.stack(wdw),
        bias=jnp.stack(biases)[:, None, :],
        whead=whead,
    )
    cfg = dict(n_blocks=n_blocks, p=p, s_in=s_in, cin=cin, cin_pad=cin_pad,
               ncls=ncls, fd=fd, nb=len(biases))
    return arrays, cfg


# ---------------------------------------------------------------------------
# Jitted forward (input re-layout + one fused pallas_call)
# ---------------------------------------------------------------------------

def make_forward(cfg):
    n_blocks = cfg["n_blocks"]
    p = cfg["p"]
    s_in = cfg["s_in"]
    cin = cfg["cin"]
    cin_pad = cfg["cin_pad"]
    ncls, fd, nb = cfg["ncls"], cfg["fd"], cfg["nb"]

    kernel = functools.partial(_fused_net_kernel, n_blocks=n_blocks, p=p)
    n_w1 = 7 * n_blocks
    n_wt = 9 * n_blocks
    n_dw = 2 * n_blocks

    def fwd(x_nchw, arrs):
        n = x_nchw.shape[0]
        # NCHW -> flat (N, H*W, Cin_pad) bf16 (channels on the lane axis).
        xf = jnp.transpose(x_nchw, (0, 2, 3, 1)).reshape(n, s_in, cin)
        xf = jnp.pad(xf, ((0, 0), (0, 0), (0, cin_pad - cin))).astype(jnp.bfloat16)

        out = pl.pallas_call(
            kernel,
            out_shape=jax.ShapeDtypeStruct((n, 1, _LANES), jnp.float32),
            grid=(n,),
            in_specs=[
                pl.BlockSpec((None, s_in, cin_pad), lambda b: (b, 0, 0)),     # x
                pl.BlockSpec((9, p, s_in), lambda b: (0, 0, 0)),              # stem gather
                pl.BlockSpec((9, p, p), lambda b: (0, 0, 0)),                 # 3x3 shifts
                pl.BlockSpec((9, cin_pad, _LANES), lambda b: (0, 0, 0)),      # stem W
                pl.BlockSpec((n_w1, _LANES, _LANES), lambda b: (0, 0, 0)),    # 1x1 Ws
                pl.BlockSpec((n_wt, _LANES, _LANES), lambda b: (0, 0, 0)),    # transit Ws
                pl.BlockSpec((n_dw, 9, 1, _LANES), lambda b: (0, 0, 0, 0)),   # depthwise Ws
                pl.BlockSpec((nb, 1, _LANES), lambda b: (0, 0, 0)),           # biases/mask
                pl.BlockSpec((_LANES, _LANES), lambda b: (0, 0)),             # head W (f32)
            ],
            out_specs=pl.BlockSpec((None, 1, _LANES), lambda b: (b, 0, 0)),
            compiler_params=pltpu.CompilerParams(
                dimension_semantics=("parallel",)),
        )(xf, arrs["g"], arrs["s"], arrs["wstem"], arrs["w1x1"], arrs["wt"],
          arrs["wdw"], arrs["bias"], arrs["whead"])

        heads = out[:, 0, :]
        label = heads[:, :ncls]
        closs = heads[:, ncls:ncls + fd]
        return closs, label

    return jax.jit(fwd)


# ---------------------------------------------------------------------------
# Deterministic parameter initialization (shapes per the PyTorch __init__)
# ---------------------------------------------------------------------------

def init_params(key, num_feats, hidden_sizes, num_classes, feat_dim):
    hs = [num_feats] + hidden_sizes + [num_classes]
    key_iter = iter(jax.random.split(key, 512))

    def nk():
        return next(key_iter)

    def conv_w(out_c, in_c, k):
        return 0.1 * jax.random.normal(nk(), (out_c, in_c, k, k), jnp.float32)

    def bn(c):
        return dict(
            gamma=1.0 + 0.1 * jax.random.normal(nk(), (c,), jnp.float32),
            beta=0.1 * jax.random.normal(nk(), (c,), jnp.float32),
            mean=0.1 * jax.random.normal(nk(), (c,), jnp.float32),
            var=1.0 + 0.1 * jax.random.uniform(nk(), (c,), jnp.float32),
        )

    def ib(in_c, inter_c):
        return dict(
            w1=conv_w(inter_c, in_c, 1), bn1=bn(inter_c),
            w2=0.1 * jax.random.normal(nk(), (inter_c, 1, 3, 3), jnp.float32),
            bn2=bn(inter_c),
            w3=conv_w(inter_c, inter_c, 1), bn3=bn(inter_c),
            w4=conv_w(in_c, inter_c, 1), bn_out=bn(in_c),
        )

    params = dict(
        w0=conv_w(hs[1], hs[0], 3),
        bn0=bn(hs[1]),
        blocks=[],
        w_label=0.1 * jax.random.normal(nk(), (hs[-1], hs[-2]), jnp.float32),
        b_label=0.1 * jax.random.normal(nk(), (hs[-1],), jnp.float32),
        w_closs=0.1 * jax.random.normal(nk(), (feat_dim, hs[-2]), jnp.float32),
    )
    for idx in range(1, len(hs) - 2):
        in_c, out_c = hs[idx], hs[idx + 1]
        params["blocks"].append(dict(
            ib1=ib(in_c, 4 * in_c),
            w_t=conv_w(out_c, in_c, 3), bn_t=bn(out_c),
            ib2=ib(out_c, 4 * out_c),
            w_sc=conv_w(out_c, in_c, 1),
        ))
    return params


# ---------------------------------------------------------------------------
# Main
# ---------------------------------------------------------------------------

if __name__ == "__main__":
    key = jax.random.PRNGKey(0)
    kx, kp = jax.random.split(key)

    num_feats, hidden_sizes, num_classes, feat_dim = 4, [8, 16], 6, 10
    x = jax.random.normal(kx, (2, num_feats, 16, 16), jnp.float32)  # NCHW

    params = init_params(kp, num_feats, hidden_sizes, num_classes, feat_dim)

    # One-time weight / geometry prep (BN folding, 128-lane padding, packing).
    arrays, cfg = prepare_model(params, (16, 16))
    forward = make_forward(cfg)

    closs_out, label_out = forward(x, arrays)
    jax.block_until_ready((closs_out, label_out))

    assert closs_out.shape == (2, feat_dim), closs_out.shape
    assert label_out.shape == (2, num_classes), label_out.shape
    assert bool(jnp.all(jnp.isfinite(closs_out)))
    assert bool(jnp.all(jnp.isfinite(label_out)))
    print("KERNEL_OK")
</pallas_src>

<mosaic_0001>
module attributes {stable_mosaic.version = 11 : i64} {
  func.func @_fused_net_kernel(%arg0: i32, %arg1: memref<1x256x8xbf16, #tpu.memory_space<vmem>>, %arg2: memref<9x49x256xbf16, #tpu.memory_space<vmem>>, %arg3: memref<9x49x49xbf16, #tpu.memory_space<vmem>>, %arg4: memref<9x8x128xbf16, #tpu.memory_space<vmem>>, %arg5: memref<7x128x128xbf16, #tpu.memory_space<vmem>>, %arg6: memref<9x128x128xbf16, #tpu.memory_space<vmem>>, %arg7: memref<2x9x1x128xf32, #tpu.memory_space<vmem>>, %arg8: memref<12x1x128xf32, #tpu.memory_space<vmem>>, %arg9: memref<128x128xf32, #tpu.memory_space<vmem>>, %arg10: memref<1x1x128xf32, #tpu.memory_space<vmem>>) attributes {dimension_semantics = [#tpu.dimension_semantics<parallel>], iteration_bounds = array<i64: 2>, scalar_prefetch = 0 : i64, scratch_operands = 0 : i64, tpu.core_type = #tpu.core_type<tc>, window_params = [{transform_indices = @transform_0, window_bounds = array<i64: 1, 256, 8>}, {pipeline_mode = #tpu.pipeline_mode<synchronous>, transform_indices = @transform_1, window_bounds = array<i64: 9, 49, 256>}, {pipeline_mode = #tpu.pipeline_mode<synchronous>, transform_indices = @transform_2, window_bounds = array<i64: 9, 49, 49>}, {pipeline_mode = #tpu.pipeline_mode<synchronous>, transform_indices = @transform_3, window_bounds = array<i64: 9, 8, 128>}, {pipeline_mode = #tpu.pipeline_mode<synchronous>, transform_indices = @transform_4, window_bounds = array<i64: 7, 128, 128>}, {pipeline_mode = #tpu.pipeline_mode<synchronous>, transform_indices = @transform_5, window_bounds = array<i64: 9, 128, 128>}, {pipeline_mode = #tpu.pipeline_mode<synchronous>, transform_indices = @transform_6, window_bounds = array<i64: 2, 9, 1, 128>}, {pipeline_mode = #tpu.pipeline_mode<synchronous>, transform_indices = @transform_7, window_bounds = array<i64: 12, 1, 128>}, {pipeline_mode = #tpu.pipeline_mode<synchronous>, transform_indices = @transform_8, window_bounds = array<i64: 128, 128>}, {transform_indices = @transform_9, window_bounds = array<i64: 1, 1, 128>}]} {
    %c0 = arith.constant 0 : index
    %c0_0 = arith.constant 0 : index
    %c0_1 = arith.constant 0 : index
    %0 = vector.load %arg1[%c0, %c0_0, %c0_1] : memref<1x256x8xbf16, #tpu.memory_space<vmem>>, vector<1x256x8xbf16>
    %1 = vector.shape_cast %0 : vector<1x256x8xbf16> to vector<256x8xbf16>
    %cst = arith.constant 0.000000e+00 : f32
    %2 = vector.broadcast %cst : f32 to vector<49x128xf32>
    %c0_2 = arith.constant 0 : index
    %c0_3 = arith.constant 0 : index
    %c0_4 = arith.constant 0 : index
    %3 = vector.load %arg2[%c0_2, %c0_3, %c0_4] : memref<9x49x256xbf16, #tpu.memory_space<vmem>>, vector<1x49x256xbf16>
    %4 = vector.shape_cast %3 : vector<1x49x256xbf16> to vector<49x256xbf16>
    %cst_5 = arith.constant dense<0.000000e+00> : vector<49x8xf32>
    %5 = tpu.matmul %4, %1, %cst_5 {dimension_numbers = #tpu.dot_dimension_numbers<[1], [0], [0], [1], [0, 0, 1, 1], [], []>} : vector<49x256xbf16>, vector<256x8xbf16>, vector<49x8xf32> -> vector<49x8xf32>
    %6 = arith.truncf %5 : vector<49x8xf32> to vector<49x8xbf16>
    %c0_6 = arith.constant 0 : index
    %c0_7 = arith.constant 0 : index
    %c0_8 = arith.constant 0 : index
    %7 = vector.load %arg4[%c0_6, %c0_7, %c0_8] : memref<9x8x128xbf16, #tpu.memory_space<vmem>>, vector<1x8x128xbf16>
    %8 = vector.shape_cast %7 : vector<1x8x128xbf16> to vector<8x128xbf16>
    %cst_9 = arith.constant dense<0.000000e+00> : vector<49x128xf32>
    %9 = tpu.matmul %6, %8, %cst_9 {dimension_numbers = #tpu.dot_dimension_numbers<[1], [0], [0], [1], [0, 0, 1, 1], [], []>} : vector<49x8xbf16>, vector<8x128xbf16>, vector<49x128xf32> -> vector<49x128xf32>
    %10 = arith.addf %2, %9 : vector<49x128xf32>
    %c1 = arith.constant 1 : index
    %c0_10 = arith.constant 0 : index
    %c0_11 = arith.constant 0 : index
    %11 = vector.load %arg2[%c1, %c0_10, %c0_11] : memref<9x49x256xbf16, #tpu.memory_space<vmem>>, vector<1x49x256xbf16>
    %12 = vector.shape_cast %11 : vector<1x49x256xbf16> to vector<49x256xbf16>
    %cst_12 = arith.constant dense<0.000000e+00> : vector<49x8xf32>
    %13 = tpu.matmul %12, %1, %cst_12 {dimension_numbers = #tpu.dot_dimension_numbers<[1], [0], [0], [1], [0, 0, 1, 1], [], []>} : vector<49x256xbf16>, vector<256x8xbf16>, vector<49x8xf32> -> vector<49x8xf32>
    %14 = arith.truncf %13 : vector<49x8xf32> to vector<49x8xbf16>
    %c1_13 = arith.constant 1 : index
    %c0_14 = arith.constant 0 : index
    %c0_15 = arith.constant 0 : index
    %15 = vector.load %arg4[%c1_13, %c0_14, %c0_15] : memref<9x8x128xbf16, #tpu.memory_space<vmem>>, vector<1x8x128xbf16>
    %16 = vector.shape_cast %15 : vector<1x8x128xbf16> to vector<8x128xbf16>
    %cst_16 = arith.constant dense<0.000000e+00> : vector<49x128xf32>
    %17 = tpu.matmul %14, %16, %cst_16 {dimension_numbers = #tpu.dot_dimension_numbers<[1], [0], [0], [1], [0, 0, 1, 1], [], []>} : vector<49x8xbf16>, vector<8x128xbf16>, vector<49x128xf32> -> vector<49x128xf32>
    %18 = arith.addf %10, %17 : vector<49x128xf32>
    %c2 = arith.constant 2 : index
    %c0_17 = arith.constant 0 : index
    %c0_18 = arith.constant 0 : index
    %19 = vector.load %arg2[%c2, %c0_17, %c0_18] : memref<9x49x256xbf16, #tpu.memory_space<vmem>>, vector<1x49x256xbf16>
    %20 = vector.shape_cast %19 : vector<1x49x256xbf16> to vector<49x256xbf16>
    %cst_19 = arith.constant dense<0.000000e+00> : vector<49x8xf32>
    %21 = tpu.matmul %20, %1, %cst_19 {dimension_numbers = #tpu.dot_dimension_numbers<[1], [0], [0], [1], [0, 0, 1, 1], [], []>} : vector<49x256xbf16>, vector<256x8xbf16>, vector<49x8xf32> -> vector<49x8xf32>
    %22 = arith.truncf %21 : vector<49x8xf32> to vector<49x8xbf16>
    %c2_20 = arith.constant 2 : index
    %c0_21 = arith.constant 0 : index
    %c0_22 = arith.constant 0 : index
    %23 = vector.load %arg4[%c2_20, %c0_21, %c0_22] : memref<9x8x128xbf16, #tpu.memory_space<vmem>>, vector<1x8x128xbf16>
    %24 = vector.shape_cast %23 : vector<1x8x128xbf16> to vector<8x128xbf16>
    %cst_23 = arith.constant dense<0.000000e+00> : vector<49x128xf32>
    %25 = tpu.matmul %22, %24, %cst_23 {dimension_numbers = #tpu.dot_dimension_numbers<[1], [0], [0], [1], [0, 0, 1, 1], [], []>} : vector<49x8xbf16>, vector<8x128xbf16>, vector<49x128xf32> -> vector<49x128xf32>
    %26 = arith.addf %18, %25 : vector<49x128xf32>
    %c3 = arith.constant 3 : index
    %c0_24 = arith.constant 0 : index
    %c0_25 = arith.constant 0 : index
    %27 = vector.load %arg2[%c3, %c0_24, %c0_25] : memref<9x49x256xbf16, #tpu.memory_space<vmem>>, vector<1x49x256xbf16>
    %28 = vector.shape_cast %27 : vector<1x49x256xbf16> to vector<49x256xbf16>
    %cst_26 = arith.constant dense<0.000000e+00> : vector<49x8xf32>
    %29 = tpu.matmul %28, %1, %cst_26 {dimension_numbers = #tpu.dot_dimension_numbers<[1], [0], [0], [1], [0, 0, 1, 1], [], []>} : vector<49x256xbf16>, vector<256x8xbf16>, vector<49x8xf32> -> vector<49x8xf32>
    %30 = arith.truncf %29 : vector<49x8xf32> to vector<49x8xbf16>
    %c3_27 = arith.constant 3 : index
    %c0_28 = arith.constant 0 : index
    %c0_29 = arith.constant 0 : index
    %31 = vector.load %arg4[%c3_27, %c0_28, %c0_29] : memref<9x8x128xbf16, #tpu.memory_space<vmem>>, vector<1x8x128xbf16>
    %32 = vector.shape_cast %31 : vector<1x8x128xbf16> to vector<8x128xbf16>
    %cst_30 = arith.constant dense<0.000000e+00> : vector<49x128xf32>
    %33 = tpu.matmul %30, %32, %cst_30 {dimension_numbers = #tpu.dot_dimension_numbers<[1], [0], [0], [1], [0, 0, 1, 1], [], []>} : vector<49x8xbf16>, vector<8x128xbf16>, vector<49x128xf32> -> vector<49x128xf32>
    %34 = arith.addf %26, %33 : vector<49x128xf32>
    %c4 = arith.constant 4 : index
    %c0_31 = arith.constant 0 : index
    %c0_32 = arith.constant 0 : index
    %35 = vector.load %arg2[%c4, %c0_31, %c0_32] : memref<9x49x256xbf16, #tpu.memory_space<vmem>>, vector<1x49x256xbf16>
    %36 = vector.shape_cast %35 : vector<1x49x256xbf16> to vector<49x256xbf16>
    %cst_33 = arith.constant dense<0.000000e+00> : vector<49x8xf32>
    %37 = tpu.matmul %36, %1, %cst_33 {dimension_numbers = #tpu.dot_dimension_numbers<[1], [0], [0], [1], [0, 0, 1, 1], [], []>} : vector<49x256xbf16>, vector<256x8xbf16>, vector<49x8xf32> -> vector<49x8xf32>
    %38 = arith.truncf %37 : vector<49x8xf32> to vector<49x8xbf16>
    %c4_34 = arith.constant 4 : index
    %c0_35 = arith.constant 0 : index
    %c0_36 = arith.constant 0 : index
    %39 = vector.load %arg4[%c4_34, %c0_35, %c0_36] : memref<9x8x128xbf16, #tpu.memory_space<vmem>>, vector<1x8x128xbf16>
    %40 = vector.shape_cast %39 : vector<1x8x128xbf16> to vector<8x128xbf16>
    %cst_37 = arith.constant dense<0.000000e+00> : vector<49x128xf32>
    %41 = tpu.matmul %38, %40, %cst_37 {dimension_numbers = #tpu.dot_dimension_numbers<[1], [0], [0], [1], [0, 0, 1, 1], [], []>} : vector<49x8xbf16>, vector<8x128xbf16>, vector<49x128xf32> -> vector<49x128xf32>
    %42 = arith.addf %34, %41 : vector<49x128xf32>
    %c5 = arith.constant 5 : index
    %c0_38 = arith.constant 0 : index
    %c0_39 = arith.constant 0 : index
    %43 = vector.load %arg2[%c5, %c0_38, %c0_39] : memref<9x49x256xbf16, #tpu.memory_space<vmem>>, vector<1x49x256xbf16>
    %44 = vector.shape_cast %43 : vector<1x49x256xbf16> to vector<49x256xbf16>
    %cst_40 = arith.constant dense<0.000000e+00> : vector<49x8xf32>
    %45 = tpu.matmul %44, %1, %cst_40 {dimension_numbers = #tpu.dot_dimension_numbers<[1], [0], [0], [1], [0, 0, 1, 1], [], []>} : vector<49x256xbf16>, vector<256x8xbf16>, vector<49x8xf32> -> vector<49x8xf32>
    %46 = arith.truncf %45 : vector<49x8xf32> to vector<49x8xbf16>
    %c5_41 = arith.constant 5 : index
    %c0_42 = arith.constant 0 : index
    %c0_43 = arith.constant 0 : index
    %47 = vector.load %arg4[%c5_41, %c0_42, %c0_43] : memref<9x8x128xbf16, #tpu.memory_space<vmem>>, vector<1x8x128xbf16>
    %48 = vector.shape_cast %47 : vector<1x8x128xbf16> to vector<8x128xbf16>
    %cst_44 = arith.constant dense<0.000000e+00> : vector<49x128xf32>
    %49 = tpu.matmul %46, %48, %cst_44 {dimension_numbers = #tpu.dot_dimension_numbers<[1], [0], [0], [1], [0, 0, 1, 1], [], []>} : vector<49x8xbf16>, vector<8x128xbf16>, vector<49x128xf32> -> vector<49x128xf32>
    %50 = arith.addf %42, %49 : vector<49x128xf32>
    %c6 = arith.constant 6 : index
    %c0_45 = arith.constant 0 : index
    %c0_46 = arith.constant 0 : index
    %51 = vector.load %arg2[%c6, %c0_45, %c0_46] : memref<9x49x256xbf16, #tpu.memory_space<vmem>>, vector<1x49x256xbf16>
    %52 = vector.shape_cast %51 : vector<1x49x256xbf16> to vector<49x256xbf16>
    %cst_47 = arith.constant dense<0.000000e+00> : vector<49x8xf32>
    %53 = tpu.matmul %52, %1, %cst_47 {dimension_numbers = #tpu.dot_dimension_numbers<[1], [0], [0], [1], [0, 0, 1, 1], [], []>} : vector<49x256xbf16>, vector<256x8xbf16>, vector<49x8xf32> -> vector<49x8xf32>
    %54 = arith.truncf %53 : vector<49x8xf32> to vector<49x8xbf16>
    %c6_48 = arith.constant 6 : index
    %c0_49 = arith.constant 0 : index
    %c0_50 = arith.constant 0 : index
    %55 = vector.load %arg4[%c6_48, %c0_49, %c0_50] : memref<9x8x128xbf16, #tpu.memory_space<vmem>>, vector<1x8x128xbf16>
    %56 = vector.shape_cast %55 : vector<1x8x128xbf16> to vector<8x128xbf16>
    %cst_51 = arith.constant dense<0.000000e+00> : vector<49x128xf32>
    %57 = tpu.matmul %54, %56, %cst_51 {dimension_numbers = #tpu.dot_dimension_numbers<[1], [0], [0], [1], [0, 0, 1, 1], [], []>} : vector<49x8xbf16>, vector<8x128xbf16>, vector<49x128xf32> -> vector<49x128xf32>
    %58 = arith.addf %50, %57 : vector<49x128xf32>
    %c7 = arith.constant 7 : index
    %c0_52 = arith.constant 0 : index
    %c0_53 = arith.constant 0 : index
    %59 = vector.load %arg2[%c7, %c0_52, %c0_53] : memref<9x49x256xbf16, #tpu.memory_space<vmem>>, vector<1x49x256xbf16>
    %60 = vector.shape_cast %59 : vector<1x49x256xbf16> to vector<49x256xbf16>
    %cst_54 = arith.constant dense<0.000000e+00> : vector<49x8xf32>
    %61 = tpu.matmul %60, %1, %cst_54 {dimension_numbers = #tpu.dot_dimension_numbers<[1], [0], [0], [1], [0, 0, 1, 1], [], []>} : vector<49x256xbf16>, vector<256x8xbf16>, vector<49x8xf32> -> vector<49x8xf32>
    %62 = arith.truncf %61 : vector<49x8xf32> to vector<49x8xbf16>
    %c7_55 = arith.constant 7 : index
    %c0_56 = arith.constant 0 : index
    %c0_57 = arith.constant 0 : index
    %63 = vector.load %arg4[%c7_55, %c0_56, %c0_57] : memref<9x8x128xbf16, #tpu.memory_space<vmem>>, vector<1x8x128xbf16>
    %64 = vector.shape_cast %63 : vector<1x8x128xbf16> to vector<8x128xbf16>
    %cst_58 = arith.constant dense<0.000000e+00> : vector<49x128xf32>
    %65 = tpu.matmul %62, %64, %cst_58 {dimension_numbers = #tpu.dot_dimension_numbers<[1], [0], [0], [1], [0, 0, 1, 1], [], []>} : vector<49x8xbf16>, vector<8x128xbf16>, vector<49x128xf32> -> vector<49x128xf32>
    %66 = arith.addf %58, %65 : vector<49x128xf32>
    %c8 = arith.constant 8 : index
    %c0_59 = arith.constant 0 : index
    %c0_60 = arith.constant 0 : index
    %67 = vector.load %arg2[%c8, %c0_59, %c0_60] : memref<9x49x256xbf16, #tpu.memory_space<vmem>>, vector<1x49x256xbf16>
    %68 = vector.shape_cast %67 : vector<1x49x256xbf16> to vector<49x256xbf16>
    %cst_61 = arith.constant dense<0.000000e+00> : vector<49x8xf32>
    %69 = tpu.matmul %68, %1, %cst_61 {dimension_numbers = #tpu.dot_dimension_numbers<[1], [0], [0], [1], [0, 0, 1, 1], [], []>} : vector<49x256xbf16>, vector<256x8xbf16>, vector<49x8xf32> -> vector<49x8xf32>
    %70 = arith.truncf %69 : vector<49x8xf32> to vector<49x8xbf16>
    %c8_62 = arith.constant 8 : index
    %c0_63 = arith.constant 0 : index
    %c0_64 = arith.constant 0 : index
    %71 = vector.load %arg4[%c8_62, %c0_63, %c0_64] : memref<9x8x128xbf16, #tpu.memory_space<vmem>>, vector<1x8x128xbf16>
    %72 = vector.shape_cast %71 : vector<1x8x128xbf16> to vector<8x128xbf16>
    %cst_65 = arith.constant dense<0.000000e+00> : vector<49x128xf32>
    %73 = tpu.matmul %70, %72, %cst_65 {dimension_numbers = #tpu.dot_dimension_numbers<[1], [0], [0], [1], [0, 0, 1, 1], [], []>} : vector<49x8xbf16>, vector<8x128xbf16>, vector<49x128xf32> -> vector<49x128xf32>
    %74 = arith.addf %66, %73 : vector<49x128xf32>
    %c0_66 = arith.constant 0 : index
    %c0_67 = arith.constant 0 : index
    %c0_68 = arith.constant 0 : index
    %75 = vector.load %arg8[%c0_66, %c0_67, %c0_68] : memref<12x1x128xf32, #tpu.memory_space<vmem>>, vector<1x1x128xf32>
    %76 = vector.shape_cast %75 : vector<1x1x128xf32> to vector<1x128xf32>
    %77 = vector.broadcast %76 : vector<1x128xf32> to vector<49x128xf32>
    %78 = arith.addf %74, %77 : vector<49x128xf32>
    %cst_69 = arith.constant 0.000000e+00 : f32
    %79 = vector.broadcast %cst_69 : f32 to vector<49x128xf32>
    %80 = arith.maximumf %78, %79 : vector<49x128xf32>
    %c0_70 = arith.constant 0 : index
    %c0_71 = arith.constant 0 : index
    %c0_72 = arith.constant 0 : index
    %81 = vector.load %arg5[%c0_70, %c0_71, %c0_72] : memref<7x128x128xbf16, #tpu.memory_space<vmem>>, vector<1x128x128xbf16>
    %82 = vector.shape_cast %81 : vector<1x128x128xbf16> to vector<128x128xbf16>
    %c1_73 = arith.constant 1 : index
    %c0_74 = arith.constant 0 : index
    %c0_75 = arith.constant 0 : index
    %83 = vector.load %arg8[%c1_73, %c0_74, %c0_75] : memref<12x1x128xf32, #tpu.memory_space<vmem>>, vector<1x1x128xf32>
    %84 = vector.shape_cast %83 : vector<1x1x128xf32> to vector<1x128xf32>
    %85 = arith.truncf %80 : vector<49x128xf32> to vector<49x128xbf16>
    %cst_76 = arith.constant dense<0.000000e+00> : vector<49x128xf32>
    %86 = tpu.matmul %85, %82, %cst_76 {dimension_numbers = #tpu.dot_dimension_numbers<[1], [0], [0], [1], [0, 0, 1, 1], [], []>} : vector<49x128xbf16>, vector<128x128xbf16>, vector<49x128xf32> -> vector<49x128xf32>
    %87 = vector.broadcast %84 : vector<1x128xf32> to vector<49x128xf32>
    %88 = arith.addf %86, %87 : vector<49x128xf32>
    %cst_77 = arith.constant 0.000000e+00 : f32
    %89 = vector.broadcast %cst_77 : f32 to vector<49x128xf32>
    %90 = arith.maximumf %88, %89 : vector<49x128xf32>
    %c2_78 = arith.constant 2 : index
    %c0_79 = arith.constant 0 : index
    %c0_80 = arith.constant 0 : index
    %91 = vector.load %arg8[%c2_78, %c0_79, %c0_80] : memref<12x1x128xf32, #tpu.memory_space<vmem>>, vector<1x1x128xf32>
    %92 = vector.shape_cast %91 : vector<1x1x128xf32> to vector<1x128xf32>
    %93 = arith.truncf %90 : vector<49x128xf32> to vector<49x128xbf16>
    %cst_81 = arith.constant 0.000000e+00 : f32
    %94 = vector.broadcast %cst_81 : f32 to vector<49x128xf32>
    %c0_82 = arith.constant 0 : index
    %c0_83 = arith.constant 0 : index
    %c0_84 = arith.constant 0 : index
    %95 = vector.load %arg3[%c0_82, %c0_83, %c0_84] : memref<9x49x49xbf16, #tpu.memory_space<vmem>>, vector<1x49x49xbf16>
    %96 = vector.shape_cast %95 : vector<1x49x49xbf16> to vector<49x49xbf16>
    %cst_85 = arith.constant dense<0.000000e+00> : vector<49x128xf32>
    %97 = tpu.matmul %96, %93, %cst_85 {dimension_numbers = #tpu.dot_dimension_numbers<[1], [0], [0], [1], [0, 0, 1, 1], [], []>} : vector<49x49xbf16>, vector<49x128xbf16>, vector<49x128xf32> -> vector<49x128xf32>
    %c0_86 = arith.constant 0 : index
    %c0_87 = arith.constant 0 : index
    %c0_88 = arith.constant 0 : index
    %c0_89 = arith.constant 0 : index
    %98 = vector.load %arg7[%c0_86, %c0_87, %c0_88, %c0_89] : memref<2x9x1x128xf32, #tpu.memory_space<vmem>>, vector<1x1x1x128xf32>
    %99 = vector.shape_cast %98 : vector<1x1x1x128xf32> to vector<1x128xf32>
    %100 = vector.broadcast %99 : vector<1x128xf32> to vector<49x128xf32>
    %101 = arith.mulf %97, %100 : vector<49x128xf32>
    %102 = arith.addf %94, %101 : vector<49x128xf32>
    %c1_90 = arith.constant 1 : index
    %c0_91 = arith.constant 0 : index
    %c0_92 = arith.constant 0 : index
    %103 = vector.load %arg3[%c1_90, %c0_91, %c0_92] : memref<9x49x49xbf16, #tpu.memory_space<vmem>>, vector<1x49x49xbf16>
    %104 = vector.shape_cast %103 : vector<1x49x49xbf16> to vector<49x49xbf16>
    %cst_93 = arith.constant dense<0.000000e+00> : vector<49x128xf32>
    %105 = tpu.matmul %104, %93, %cst_93 {dimension_numbers = #tpu.dot_dimension_numbers<[1], [0], [0], [1], [0, 0, 1, 1], [], []>} : vector<49x49xbf16>, vector<49x128xbf16>, vector<49x128xf32> -> vector<49x128xf32>
    %c0_94 = arith.constant 0 : index
    %c1_95 = arith.constant 1 : index
    %c0_96 = arith.constant 0 : index
    %c0_97 = arith.constant 0 : index
    %106 = vector.load %arg7[%c0_94, %c1_95, %c0_96, %c0_97] : memref<2x9x1x128xf32, #tpu.memory_space<vmem>>, vector<1x1x1x128xf32>
    %107 = vector.shape_cast %106 : vector<1x1x1x128xf32> to vector<1x128xf32>
    %108 = vector.broadcast %107 : vector<1x128xf32> to vector<49x128xf32>
    %109 = arith.mulf %105, %108 : vector<49x128xf32>
    %110 = arith.addf %102, %109 : vector<49x128xf32>
    %c2_98 = arith.constant 2 : index
    %c0_99 = arith.constant 0 : index
    %c0_100 = arith.constant 0 : index
    %111 = vector.load %arg3[%c2_98, %c0_99, %c0_100] : memref<9x49x49xbf16, #tpu.memory_space<vmem>>, vector<1x49x49xbf16>
    %112 = vector.shape_cast %111 : vector<1x49x49xbf16> to vector<49x49xbf16>
    %cst_101 = arith.constant dense<0.000000e+00> : vector<49x128xf32>
    %113 = tpu.matmul %112, %93, %cst_101 {dimension_numbers = #tpu.dot_dimension_numbers<[1], [0], [0], [1], [0, 0, 1, 1], [], []>} : vector<49x49xbf16>, vector<49x128xbf16>, vector<49x128xf32> -> vector<49x128xf32>
    %c0_102 = arith.constant 0 : index
    %c2_103 = arith.constant 2 : index
    %c0_104 = arith.constant 0 : index
    %c0_105 = arith.constant 0 : index
    %114 = vector.load %arg7[%c0_102, %c2_103, %c0_104, %c0_105] : memref<2x9x1x128xf32, #tpu.memory_space<vmem>>, vector<1x1x1x128xf32>
    %115 = vector.shape_cast %114 : vector<1x1x1x128xf32> to vector<1x128xf32>
    %116 = vector.broadcast %115 : vector<1x128xf32> to vector<49x128xf32>
    %117 = arith.mulf %113, %116 : vector<49x128xf32>
    %118 = arith.addf %110, %117 : vector<49x128xf32>
    %c3_106 = arith.constant 3 : index
    %c0_107 = arith.constant 0 : index
    %c0_108 = arith.constant 0 : index
    %119 = vector.load %arg3[%c3_106, %c0_107, %c0_108] : memref<9x49x49xbf16, #tpu.memory_space<vmem>>, vector<1x49x49xbf16>
    %120 = vector.shape_cast %119 : vector<1x49x49xbf16> to vector<49x49xbf16>
    %cst_109 = arith.constant dense<0.000000e+00> : vector<49x128xf32>
    %121 = tpu.matmul %120, %93, %cst_109 {dimension_numbers = #tpu.dot_dimension_numbers<[1], [0], [0], [1], [0, 0, 1, 1], [], []>} : vector<49x49xbf16>, vector<49x128xbf16>, vector<49x128xf32> -> vector<49x128xf32>
    %c0_110 = arith.constant 0 : index
    %c3_111 = arith.constant 3 : index
    %c0_112 = arith.constant 0 : index
    %c0_113 = arith.constant 0 : index
    %122 = vector.load %arg7[%c0_110, %c3_111, %c0_112, %c0_113] : memref<2x9x1x128xf32, #tpu.memory_space<vmem>>, vector<1x1x1x128xf32>
    %123 = vector.shape_cast %122 : vector<1x1x1x128xf32> to vector<1x128xf32>
    %124 = vector.broadcast %123 : vector<1x128xf32> to vector<49x128xf32>
    %125 = arith.mulf %121, %124 : vector<49x128xf32>
    %126 = arith.addf %118, %125 : vector<49x128xf32>
    %c4_114 = arith.constant 4 : index
    %c0_115 = arith.constant 0 : index
    %c0_116 = arith.constant 0 : index
    %127 = vector.load %arg3[%c4_114, %c0_115, %c0_116] : memref<9x49x49xbf16, #tpu.memory_space<vmem>>, vector<1x49x49xbf16>
    %128 = vector.shape_cast %127 : vector<1x49x49xbf16> to vector<49x49xbf16>
    %cst_117 = arith.constant dense<0.000000e+00> : vector<49x128xf32>
    %129 = tpu.matmul %128, %93, %cst_117 {dimension_numbers = #tpu.dot_dimension_numbers<[1], [0], [0], [1], [0, 0, 1, 1], [], []>} : vector<49x49xbf16>, vector<49x128xbf16>, vector<49x128xf32> -> vector<49x128xf32>
    %c0_118 = arith.constant 0 : index
    %c4_119 = arith.constant 4 : index
    %c0_120 = arith.constant 0 : index
    %c0_121 = arith.constant 0 : index
    %130 = vector.load %arg7[%c0_118, %c4_119, %c0_120, %c0_121] : memref<2x9x1x128xf32, #tpu.memory_space<vmem>>, vector<1x1x1x128xf32>
    %131 = vector.shape_cast %130 : vector<1x1x1x128xf32> to vector<1x128xf32>
    %132 = vector.broadcast %131 : vector<1x128xf32> to vector<49x128xf32>
    %133 = arith.mulf %129, %132 : vector<49x128xf32>
    %134 = arith.addf %126, %133 : vector<49x128xf32>
    %c5_122 = arith.constant 5 : index
    %c0_123 = arith.constant 0 : index
    %c0_124 = arith.constant 0 : index
    %135 = vector.load %arg3[%c5_122, %c0_123, %c0_124] : memref<9x49x49xbf16, #tpu.memory_space<vmem>>, vector<1x49x49xbf16>
    %136 = vector.shape_cast %135 : vector<1x49x49xbf16> to vector<49x49xbf16>
    %cst_125 = arith.constant dense<0.000000e+00> : vector<49x128xf32>
    %137 = tpu.matmul %136, %93, %cst_125 {dimension_numbers = #tpu.dot_dimension_numbers<[1], [0], [0], [1], [0, 0, 1, 1], [], []>} : vector<49x49xbf16>, vector<49x128xbf16>, vector<49x128xf32> -> vector<49x128xf32>
    %c0_126 = arith.constant 0 : index
    %c5_127 = arith.constant 5 : index
    %c0_128 = arith.constant 0 : index
    %c0_129 = arith.constant 0 : index
    %138 = vector.load %arg7[%c0_126, %c5_127, %c0_128, %c0_129] : memref<2x9x1x128xf32, #tpu.memory_space<vmem>>, vector<1x1x1x128xf32>
    %139 = vector.shape_cast %138 : vector<1x1x1x128xf32> to vector<1x128xf32>
    %140 = vector.broadcast %139 : vector<1x128xf32> to vector<49x128xf32>
    %141 = arith.mulf %137, %140 : vector<49x128xf32>
    %142 = arith.addf %134, %141 : vector<49x128xf32>
    %c6_130 = arith.constant 6 : index
    %c0_131 = arith.constant 0 : index
    %c0_132 = arith.constant 0 : index
    %143 = vector.load %arg3[%c6_130, %c0_131, %c0_132] : memref<9x49x49xbf16, #tpu.memory_space<vmem>>, vector<1x49x49xbf16>
    %144 = vector.shape_cast %143 : vector<1x49x49xbf16> to vector<49x49xbf16>
    %cst_133 = arith.constant dense<0.000000e+00> : vector<49x128xf32>
    %145 = tpu.matmul %144, %93, %cst_133 {dimension_numbers = #tpu.dot_dimension_numbers<[1], [0], [0], [1], [0, 0, 1, 1], [], []>} : vector<49x49xbf16>, vector<49x128xbf16>, vector<49x128xf32> -> vector<49x128xf32>
    %c0_134 = arith.constant 0 : index
    %c6_135 = arith.constant 6 : index
    %c0_136 = arith.constant 0 : index
    %c0_137 = arith.constant 0 : index
    %146 = vector.load %arg7[%c0_134, %c6_135, %c0_136, %c0_137] : memref<2x9x1x128xf32, #tpu.memory_space<vmem>>, vector<1x1x1x128xf32>
    %147 = vector.shape_cast %146 : vector<1x1x1x128xf32> to vector<1x128xf32>
    %148 = vector.broadcast %147 : vector<1x128xf32> to vector<49x128xf32>
    %149 = arith.mulf %145, %148 : vector<49x128xf32>
    %150 = arith.addf %142, %149 : vector<49x128xf32>
    %c7_138 = arith.constant 7 : index
    %c0_139 = arith.constant 0 : index
    %c0_140 = arith.constant 0 : index
    %151 = vector.load %arg3[%c7_138, %c0_139, %c0_140] : memref<9x49x49xbf16, #tpu.memory_space<vmem>>, vector<1x49x49xbf16>
    %152 = vector.shape_cast %151 : vector<1x49x49xbf16> to vector<49x49xbf16>
    %cst_141 = arith.constant dense<0.000000e+00> : vector<49x128xf32>
    %153 = tpu.matmul %152, %93, %cst_141 {dimension_numbers = #tpu.dot_dimension_numbers<[1], [0], [0], [1], [0, 0, 1, 1], [], []>} : vector<49x49xbf16>, vector<49x128xbf16>, vector<49x128xf32> -> vector<49x128xf32>
    %c0_142 = arith.constant 0 : index
    %c7_143 = arith.constant 7 : index
    %c0_144 = arith.constant 0 : index
    %c0_145 = arith.constant 0 : index
    %154 = vector.load %arg7[%c0_142, %c7_143, %c0_144, %c0_145] : memref<2x9x1x128xf32, #tpu.memory_space<vmem>>, vector<1x1x1x128xf32>
    %155 = vector.shape_cast %154 : vector<1x1x1x128xf32> to vector<1x128xf32>
    %156 = vector.broadcast %155 : vector<1x128xf32> to vector<49x128xf32>
    %157 = arith.mulf %153, %156 : vector<49x128xf32>
    %158 = arith.addf %150, %157 : vector<49x128xf32>
    %c8_146 = arith.constant 8 : index
    %c0_147 = arith.constant 0 : index
    %c0_148 = arith.constant 0 : index
    %159 = vector.load %arg3[%c8_146, %c0_147, %c0_148] : memref<9x49x49xbf16, #tpu.memory_space<vmem>>, vector<1x49x49xbf16>
    %160 = vector.shape_cast %159 : vector<1x49x49xbf16> to vector<49x49xbf16>
    %cst_149 = arith.constant dense<0.000000e+00> : vector<49x128xf32>
    %161 = tpu.matmul %160, %93, %cst_149 {dimension_numbers = #tpu.dot_dimension_numbers<[1], [0], [0], [1], [0, 0, 1, 1], [], []>} : vector<49x49xbf16>, vector<49x128xbf16>, vector<49x128xf32> -> vector<49x128xf32>
    %c0_150 = arith.constant 0 : index
    %c8_151 = arith.constant 8 : index
    %c0_152 = arith.constant 0 : index
    %c0_153 = arith.constant 0 : index
    %162 = vector.load %arg7[%c0_150, %c8_151, %c0_152, %c0_153] : memref<2x9x1x128xf32, #tpu.memory_space<vmem>>, vector<1x1x1x128xf32>
    %163 = vector.shape_cast %162 : vector<1x1x1x128xf32> to vector<1x128xf32>
    %164 = vector.broadcast %163 : vector<1x128xf32> to vector<49x128xf32>
    %165 = arith.mulf %161, %164 : vector<49x128xf32>
    %166 = arith.addf %158, %165 : vector<49x128xf32>
    %167 = vector.broadcast %92 : vector<1x128xf32> to vector<49x128xf32>
    %168 = arith.addf %166, %167 : vector<49x128xf32>
    %cst_154 = arith.constant 0.000000e+00 : f32
    %169 = vector.broadcast %cst_154 : f32 to vector<49x128xf32>
    %170 = arith.maximumf %168, %169 : vector<49x128xf32>
    %c1_155 = arith.constant 1 : index
    %c0_156 = arith.constant 0 : index
    %c0_157 = arith.constant 0 : index
    %171 = vector.load %arg5[%c1_155, %c0_156, %c0_157] : memref<7x128x128xbf16, #tpu.memory_space<vmem>>, vector<1x128x128xbf16>
    %172 = vector.shape_cast %171 : vector<1x128x128xbf16> to vector<128x128xbf16>
    %c3_158 = arith.constant 3 : index
    %c0_159 = arith.constant 0 : index
    %c0_160 = arith.constant 0 : index
    %173 = vector.load %arg8[%c3_158, %c0_159, %c0_160] : memref<12x1x128xf32, #tpu.memory_space<vmem>>, vector<1x1x128xf32>
    %174 = vector.shape_cast %173 : vector<1x1x128xf32> to vector<1x128xf32>
    %175 = arith.truncf %170 : vector<49x128xf32> to vector<49x128xbf16>
    %cst_161 = arith.constant dense<0.000000e+00> : vector<49x128xf32>
    %176 = tpu.matmul %175, %172, %cst_161 {dimension_numbers = #tpu.dot_dimension_numbers<[1], [0], [0], [1], [0, 0, 1, 1], [], []>} : vector<49x128xbf16>, vector<128x128xbf16>, vector<49x128xf32> -> vector<49x128xf32>
    %177 = vector.broadcast %174 : vector<1x128xf32> to vector<49x128xf32>
    %178 = arith.addf %176, %177 : vector<49x128xf32>
    %cst_162 = arith.constant 0.000000e+00 : f32
    %179 = vector.broadcast %cst_162 : f32 to vector<49x128xf32>
    %180 = arith.maximumf %178, %179 : vector<49x128xf32>
    %c2_163 = arith.constant 2 : index
    %c0_164 = arith.constant 0 : index
    %c0_165 = arith.constant 0 : index
    %181 = vector.load %arg5[%c2_163, %c0_164, %c0_165] : memref<7x128x128xbf16, #tpu.memory_space<vmem>>, vector<1x128x128xbf16>
    %182 = vector.shape_cast %181 : vector<1x128x128xbf16> to vector<128x128xbf16>
    %c4_166 = arith.constant 4 : index
    %c0_167 = arith.constant 0 : index
    %c0_168 = arith.constant 0 : index
    %183 = vector.load %arg8[%c4_166, %c0_167, %c0_168] : memref<12x1x128xf32, #tpu.memory_space<vmem>>, vector<1x1x128xf32>
    %184 = vector.shape_cast %183 : vector<1x1x128xf32> to vector<1x128xf32>
    %185 = arith.truncf %180 : vector<49x128xf32> to vector<49x128xbf16>
    %cst_169 = arith.constant dense<0.000000e+00> : vector<49x128xf32>
    %186 = tpu.matmul %185, %182, %cst_169 {dimension_numbers = #tpu.dot_dimension_numbers<[1], [0], [0], [1], [0, 0, 1, 1], [], []>} : vector<49x128xbf16>, vector<128x128xbf16>, vector<49x128xf32> -> vector<49x128xf32>
    %187 = vector.broadcast %184 : vector<1x128xf32> to vector<49x128xf32>
    %188 = arith.addf %186, %187 : vector<49x128xf32>
    %189 = arith.addf %188, %80 : vector<49x128xf32>
    %c5_170 = arith.constant 5 : index
    %c0_171 = arith.constant 0 : index
    %c0_172 = arith.constant 0 : index
    %190 = vector.load %arg8[%c5_170, %c0_171, %c0_172] : memref<12x1x128xf32, #tpu.memory_space<vmem>>, vector<1x1x128xf32>
    %191 = vector.shape_cast %190 : vector<1x1x128xf32> to vector<1x128xf32>
    %192 = arith.truncf %189 : vector<49x128xf32> to vector<49x128xbf16>
    %cst_173 = arith.constant 0.000000e+00 : f32
    %193 = vector.broadcast %cst_173 : f32 to vector<49x128xf32>
    %c0_174 = arith.constant 0 : index
    %c0_175 = arith.constant 0 : index
    %c0_176 = arith.constant 0 : index
    %194 = vector.load %arg3[%c0_174, %c0_175, %c0_176] : memref<9x49x49xbf16, #tpu.memory_space<vmem>>, vector<1x49x49xbf16>
    %195 = vector.shape_cast %194 : vector<1x49x49xbf16> to vector<49x49xbf16>
    %cst_177 = arith.constant dense<0.000000e+00> : vector<49x128xf32>
    %196 = tpu.matmul %195, %192, %cst_177 {dimension_numbers = #tpu.dot_dimension_numbers<[1], [0], [0], [1], [0, 0, 1, 1], [], []>} : vector<49x49xbf16>, vector<49x128xbf16>, vector<49x128xf32> -> vector<49x128xf32>
    %197 = arith.truncf %196 : vector<49x128xf32> to vector<49x128xbf16>
    %c0_178 = arith.constant 0 : index
    %c0_179 = arith.constant 0 : index
    %c0_180 = arith.constant 0 : index
    %198 = vector.load %arg6[%c0_178, %c0_179, %c0_180] : memref<9x128x128xbf16, #tpu.memory_space<vmem>>, vector<1x128x128xbf16>
    %199 = vector.shape_cast %198 : vector<1x128x128xbf16> to vector<128x128xbf16>
    %cst_181 = arith.constant dense<0.000000e+00> : vector<49x128xf32>
    %200 = tpu.matmul %197, %199, %cst_181 {dimension_numbers = #tpu.dot_dimension_numbers<[1], [0], [0], [1], [0, 0, 1, 1], [], []>} : vector<49x128xbf16>, vector<128x128xbf16>, vector<49x128xf32> -> vector<49x128xf32>
    %201 = arith.addf %193, %200 : vector<49x128xf32>
    %c1_182 = arith.constant 1 : index
    %c0_183 = arith.constant 0 : index
    %c0_184 = arith.constant 0 : index
    %202 = vector.load %arg3[%c1_182, %c0_183, %c0_184] : memref<9x49x49xbf16, #tpu.memory_space<vmem>>, vector<1x49x49xbf16>
    %203 = vector.shape_cast %202 : vector<1x49x49xbf16> to vector<49x49xbf16>
    %cst_185 = arith.constant dense<0.000000e+00> : vector<49x128xf32>
    %204 = tpu.matmul %203, %192, %cst_185 {dimension_numbers = #tpu.dot_dimension_numbers<[1], [0], [0], [1], [0, 0, 1, 1], [], []>} : vector<49x49xbf16>, vector<49x128xbf16>, vector<49x128xf32> -> vector<49x128xf32>
    %205 = arith.truncf %204 : vector<49x128xf32> to vector<49x128xbf16>
    %c1_186 = arith.constant 1 : index
    %c0_187 = arith.constant 0 : index
    %c0_188 = arith.constant 0 : index
    %206 = vector.load %arg6[%c1_186, %c0_187, %c0_188] : memref<9x128x128xbf16, #tpu.memory_space<vmem>>, vector<1x128x128xbf16>
    %207 = vector.shape_cast %206 : vector<1x128x128xbf16> to vector<128x128xbf16>
    %cst_189 = arith.constant dense<0.000000e+00> : vector<49x128xf32>
    %208 = tpu.matmul %205, %207, %cst_189 {dimension_numbers = #tpu.dot_dimension_numbers<[1], [0], [0], [1], [0, 0, 1, 1], [], []>} : vector<49x128xbf16>, vector<128x128xbf16>, vector<49x128xf32> -> vector<49x128xf32>
    %209 = arith.addf %201, %208 : vector<49x128xf32>
    %c2_190 = arith.constant 2 : index
    %c0_191 = arith.constant 0 : index
    %c0_192 = arith.constant 0 : index
    %210 = vector.load %arg3[%c2_190, %c0_191, %c0_192] : memref<9x49x49xbf16, #tpu.memory_space<vmem>>, vector<1x49x49xbf16>
    %211 = vector.shape_cast %210 : vector<1x49x49xbf16> to vector<49x49xbf16>
    %cst_193 = arith.constant dense<0.000000e+00> : vector<49x128xf32>
    %212 = tpu.matmul %211, %192, %cst_193 {dimension_numbers = #tpu.dot_dimension_numbers<[1], [0], [0], [1], [0, 0, 1, 1], [], []>} : vector<49x49xbf16>, vector<49x128xbf16>, vector<49x128xf32> -> vector<49x128xf32>
    %213 = arith.truncf %212 : vector<49x128xf32> to vector<49x128xbf16>
    %c2_194 = arith.constant 2 : index
    %c0_195 = arith.constant 0 : index
    %c0_196 = arith.constant 0 : index
    %214 = vector.load %arg6[%c2_194, %c0_195, %c0_196] : memref<9x128x128xbf16, #tpu.memory_space<vmem>>, vector<1x128x128xbf16>
    %215 = vector.shape_cast %214 : vector<1x128x128xbf16> to vector<128x128xbf16>
    %cst_197 = arith.constant dense<0.000000e+00> : vector<49x128xf32>
    %216 = tpu.matmul %213, %215, %cst_197 {dimension_numbers = #tpu.dot_dimension_numbers<[1], [0], [0], [1], [0, 0, 1, 1], [], []>} : vector<49x128xbf16>, vector<128x128xbf16>, vector<49x128xf32> -> vector<49x128xf32>
    %217 = arith.addf %209, %216 : vector<49x128xf32>
    %c3_198 = arith.constant 3 : index
    %c0_199 = arith.constant 0 : index
    %c0_200 = arith.constant 0 : index
    %218 = vector.load %arg3[%c3_198, %c0_199, %c0_200] : memref<9x49x49xbf16, #tpu.memory_space<vmem>>, vector<1x49x49xbf16>
    %219 = vector.shape_cast %218 : vector<1x49x49xbf16> to vector<49x49xbf16>
    %cst_201 = arith.constant dense<0.000000e+00> : vector<49x128xf32>
    %220 = tpu.matmul %219, %192, %cst_201 {dimension_numbers = #tpu.dot_dimension_numbers<[1], [0], [0], [1], [0, 0, 1, 1], [], []>} : vector<49x49xbf16>, vector<49x128xbf16>, vector<49x128xf32> -> vector<49x128xf32>
    %221 = arith.truncf %220 : vector<49x128xf32> to vector<49x128xbf16>
    %c3_202 = arith.constant 3 : index
    %c0_203 = arith.constant 0 : index
    %c0_204 = arith.constant 0 : index
    %222 = vector.load %arg6[%c3_202, %c0_203, %c0_204] : memref<9x128x128xbf16, #tpu.memory_space<vmem>>, vector<1x128x128xbf16>
    %223 = vector.shape_cast %222 : vector<1x128x128xbf16> to vector<128x128xbf16>
    %cst_205 = arith.constant dense<0.000000e+00> : vector<49x128xf32>
    %224 = tpu.matmul %221, %223, %cst_205 {dimension_numbers = #tpu.dot_dimension_numbers<[1], [0], [0], [1], [0, 0, 1, 1], [], []>} : vector<49x128xbf16>, vector<128x128xbf16>, vector<49x128xf32> -> vector<49x128xf32>
    %225 = arith.addf %217, %224 : vector<49x128xf32>
    %c4_206 = arith.constant 4 : index
    %c0_207 = arith.constant 0 : index
    %c0_208 = arith.constant 0 : index
    %226 = vector.load %arg3[%c4_206, %c0_207, %c0_208] : memref<9x49x49xbf16, #tpu.memory_space<vmem>>, vector<1x49x49xbf16>
    %227 = vector.shape_cast %226 : vector<1x49x49xbf16> to vector<49x49xbf16>
    %cst_209 = arith.constant dense<0.000000e+00> : vector<49x128xf32>
    %228 = tpu.matmul %227, %192, %cst_209 {dimension_numbers = #tpu.dot_dimension_numbers<[1], [0], [0], [1], [0, 0, 1, 1], [], []>} : vector<49x49xbf16>, vector<49x128xbf16>, vector<49x128xf32> -> vector<49x128xf32>
    %229 = arith.truncf %228 : vector<49x128xf32> to vector<49x128xbf16>
    %c4_210 = arith.constant 4 : index
    %c0_211 = arith.constant 0 : index
    %c0_212 = arith.constant 0 : index
    %230 = vector.load %arg6[%c4_210, %c0_211, %c0_212] : memref<9x128x128xbf16, #tpu.memory_space<vmem>>, vector<1x128x128xbf16>
    %231 = vector.shape_cast %230 : vector<1x128x128xbf16> to vector<128x128xbf16>
    %cst_213 = arith.constant dense<0.000000e+00> : vector<49x128xf32>
    %232 = tpu.matmul %229, %231, %cst_213 {dimension_numbers = #tpu.dot_dimension_numbers<[1], [0], [0], [1], [0, 0, 1, 1], [], []>} : vector<49x128xbf16>, vector<128x128xbf16>, vector<49x128xf32> -> vector<49x128xf32>
    %233 = arith.addf %225, %232 : vector<49x128xf32>
    %c5_214 = arith.constant 5 : index
    %c0_215 = arith.constant 0 : index
    %c0_216 = arith.constant 0 : index
    %234 = vector.load %arg3[%c5_214, %c0_215, %c0_216] : memref<9x49x49xbf16, #tpu.memory_space<vmem>>, vector<1x49x49xbf16>
    %235 = vector.shape_cast %234 : vector<1x49x49xbf16> to vector<49x49xbf16>
    %cst_217 = arith.constant dense<0.000000e+00> : vector<49x128xf32>
    %236 = tpu.matmul %235, %192, %cst_217 {dimension_numbers = #tpu.dot_dimension_numbers<[1], [0], [0], [1], [0, 0, 1, 1], [], []>} : vector<49x49xbf16>, vector<49x128xbf16>, vector<49x128xf32> -> vector<49x128xf32>
    %237 = arith.truncf %236 : vector<49x128xf32> to vector<49x128xbf16>
    %c5_218 = arith.constant 5 : index
    %c0_219 = arith.constant 0 : index
    %c0_220 = arith.constant 0 : index
    %238 = vector.load %arg6[%c5_218, %c0_219, %c0_220] : memref<9x128x128xbf16, #tpu.memory_space<vmem>>, vector<1x128x128xbf16>
    %239 = vector.shape_cast %238 : vector<1x128x128xbf16> to vector<128x128xbf16>
    %cst_221 = arith.constant dense<0.000000e+00> : vector<49x128xf32>
    %240 = tpu.matmul %237, %239, %cst_221 {dimension_numbers = #tpu.dot_dimension_numbers<[1], [0], [0], [1], [0, 0, 1, 1], [], []>} : vector<49x128xbf16>, vector<128x128xbf16>, vector<49x128xf32> -> vector<49x128xf32>
    %241 = arith.addf %233, %240 : vector<49x128xf32>
    %c6_222 = arith.constant 6 : index
    %c0_223 = arith.constant 0 : index
    %c0_224 = arith.constant 0 : index
    %242 = vector.load %arg3[%c6_222, %c0_223, %c0_224] : memref<9x49x49xbf16, #tpu.memory_space<vmem>>, vector<1x49x49xbf16>
    %243 = vector.shape_cast %242 : vector<1x49x49xbf16> to vector<49x49xbf16>
    %cst_225 = arith.constant dense<0.000000e+00> : vector<49x128xf32>
    %244 = tpu.matmul %243, %192, %cst_225 {dimension_numbers = #tpu.dot_dimension_numbers<[1], [0], [0], [1], [0, 0, 1, 1], [], []>} : vector<49x49xbf16>, vector<49x128xbf16>, vector<49x128xf32> -> vector<49x128xf32>
    %245 = arith.truncf %244 : vector<49x128xf32> to vector<49x128xbf16>
    %c6_226 = arith.constant 6 : index
    %c0_227 = arith.constant 0 : index
    %c0_228 = arith.constant 0 : index
    %246 = vector.load %arg6[%c6_226, %c0_227, %c0_228] : memref<9x128x128xbf16, #tpu.memory_space<vmem>>, vector<1x128x128xbf16>
    %247 = vector.shape_cast %246 : vector<1x128x128xbf16> to vector<128x128xbf16>
    %cst_229 = arith.constant dense<0.000000e+00> : vector<49x128xf32>
    %248 = tpu.matmul %245, %247, %cst_229 {dimension_numbers = #tpu.dot_dimension_numbers<[1], [0], [0], [1], [0, 0, 1, 1], [], []>} : vector<49x128xbf16>, vector<128x128xbf16>, vector<49x128xf32> -> vector<49x128xf32>
    %249 = arith.addf %241, %248 : vector<49x128xf32>
    %c7_230 = arith.constant 7 : index
    %c0_231 = arith.constant 0 : index
    %c0_232 = arith.constant 0 : index
    %250 = vector.load %arg3[%c7_230, %c0_231, %c0_232] : memref<9x49x49xbf16, #tpu.memory_space<vmem>>, vector<1x49x49xbf16>
    %251 = vector.shape_cast %250 : vector<1x49x49xbf16> to vector<49x49xbf16>
    %cst_233 = arith.constant dense<0.000000e+00> : vector<49x128xf32>
    %252 = tpu.matmul %251, %192, %cst_233 {dimension_numbers = #tpu.dot_dimension_numbers<[1], [0], [0], [1], [0, 0, 1, 1], [], []>} : vector<49x49xbf16>, vector<49x128xbf16>, vector<49x128xf32> -> vector<49x128xf32>
    %253 = arith.truncf %252 : vector<49x128xf32> to vector<49x128xbf16>
    %c7_234 = arith.constant 7 : index
    %c0_235 = arith.constant 0 : index
    %c0_236 = arith.constant 0 : index
    %254 = vector.load %arg6[%c7_234, %c0_235, %c0_236] : memref<9x128x128xbf16, #tpu.memory_space<vmem>>, vector<1x128x128xbf16>
    %255 = vector.shape_cast %254 : vector<1x128x128xbf16> to vector<128x128xbf16>
    %cst_237 = arith.constant dense<0.000000e+00> : vector<49x128xf32>
    %256 = tpu.matmul %253, %255, %cst_237 {dimension_numbers = #tpu.dot_dimension_numbers<[1], [0], [0], [1], [0, 0, 1, 1], [], []>} : vector<49x128xbf16>, vector<128x128xbf16>, vector<49x128xf32> -> vector<49x128xf32>
    %257 = arith.addf %249, %256 : vector<49x128xf32>
    %c8_238 = arith.constant 8 : index
    %c0_239 = arith.constant 0 : index
    %c0_240 = arith.constant 0 : index
    %258 = vector.load %arg3[%c8_238, %c0_239, %c0_240] : memref<9x49x49xbf16, #tpu.memory_space<vmem>>, vector<1x49x49xbf16>
    %259 = vector.shape_cast %258 : vector<1x49x49xbf16> to vector<49x49xbf16>
    %cst_241 = arith.constant dense<0.000000e+00> : vector<49x128xf32>
    %260 = tpu.matmul %259, %192, %cst_241 {dimension_numbers = #tpu.dot_dimension_numbers<[1], [0], [0], [1], [0, 0, 1, 1], [], []>} : vector<49x49xbf16>, vector<49x128xbf16>, vector<49x128xf32> -> vector<49x128xf32>
    %261 = arith.truncf %260 : vector<49x128xf32> to vector<49x128xbf16>
    %c8_242 = arith.constant 8 : index
    %c0_243 = arith.constant 0 : index
    %c0_244 = arith.constant 0 : index
    %262 = vector.load %arg6[%c8_242, %c0_243, %c0_244] : memref<9x128x128xbf16, #tpu.memory_space<vmem>>, vector<1x128x128xbf16>
    %263 = vector.shape_cast %262 : vector<1x128x128xbf16> to vector<128x128xbf16>
    %cst_245 = arith.constant dense<0.000000e+00> : vector<49x128xf32>
    %264 = tpu.matmul %261, %263, %cst_245 {dimension_numbers = #tpu.dot_dimension_numbers<[1], [0], [0], [1], [0, 0, 1, 1], [], []>} : vector<49x128xbf16>, vector<128x128xbf16>, vector<49x128xf32> -> vector<49x128xf32>
    %265 = arith.addf %257, %264 : vector<49x128xf32>
    %266 = vector.broadcast %191 : vector<1x128xf32> to vector<49x128xf32>
    %267 = arith.addf %265, %266 : vector<49x128xf32>
    %cst_246 = arith.constant 0.000000e+00 : f32
    %268 = vector.broadcast %cst_246 : f32 to vector<49x128xf32>
    %269 = arith.maximumf %267, %268 : vector<49x128xf32>
    %c3_247 = arith.constant 3 : index
    %c0_248 = arith.constant 0 : index
    %c0_249 = arith.constant 0 : index
    %270 = vector.load %arg5[%c3_247, %c0_248, %c0_249] : memref<7x128x128xbf16, #tpu.memory_space<vmem>>, vector<1x128x128xbf16>
    %271 = vector.shape_cast %270 : vector<1x128x128xbf16> to vector<128x128xbf16>
    %c6_250 = arith.constant 6 : index
    %c0_251 = arith.constant 0 : index
    %c0_252 = arith.constant 0 : index
    %272 = vector.load %arg8[%c6_250, %c0_251, %c0_252] : memref<12x1x128xf32, #tpu.memory_space<vmem>>, vector<1x1x128xf32>
    %273 = vector.shape_cast %272 : vector<1x1x128xf32> to vector<1x128xf32>
    %274 = arith.truncf %269 : vector<49x128xf32> to vector<49x128xbf16>
    %cst_253 = arith.constant dense<0.000000e+00> : vector<49x128xf32>
    %275 = tpu.matmul %274, %271, %cst_253 {dimension_numbers = #tpu.dot_dimension_numbers<[1], [0], [0], [1], [0, 0, 1, 1], [], []>} : vector<49x128xbf16>, vector<128x128xbf16>, vector<49x128xf32> -> vector<49x128xf32>
    %276 = vector.broadcast %273 : vector<1x128xf32> to vector<49x128xf32>
    %277 = arith.addf %275, %276 : vector<49x128xf32>
    %cst_254 = arith.constant 0.000000e+00 : f32
    %278 = vector.broadcast %cst_254 : f32 to vector<49x128xf32>
    %279 = arith.maximumf %277, %278 : vector<49x128xf32>
    %c7_255 = arith.constant 7 : index
    %c0_256 = arith.constant 0 : index
    %c0_257 = arith.constant 0 : index
    %280 = vector.load %arg8[%c7_255, %c0_256, %c0_257] : memref<12x1x128xf32, #tpu.memory_space<vmem>>, vector<1x1x128xf32>
    %281 = vector.shape_cast %280 : vector<1x1x128xf32> to vector<1x128xf32>
    %282 = arith.truncf %279 : vector<49x128xf32> to vector<49x128xbf16>
    %cst_258 = arith.constant 0.000000e+00 : f32
    %283 = vector.broadcast %cst_258 : f32 to vector<49x128xf32>
    %c0_259 = arith.constant 0 : index
    %c0_260 = arith.constant 0 : index
    %c0_261 = arith.constant 0 : index
    %284 = vector.load %arg3[%c0_259, %c0_260, %c0_261] : memref<9x49x49xbf16, #tpu.memory_space<vmem>>, vector<1x49x49xbf16>
    %285 = vector.shape_cast %284 : vector<1x49x49xbf16> to vector<49x49xbf16>
    %cst_262 = arith.constant dense<0.000000e+00> : vector<49x128xf32>
    %286 = tpu.matmul %285, %282, %cst_262 {dimension_numbers = #tpu.dot_dimension_numbers<[1], [0], [0], [1], [0, 0, 1, 1], [], []>} : vector<49x49xbf16>, vector<49x128xbf16>, vector<49x128xf32> -> vector<49x128xf32>
    %c1_263 = arith.constant 1 : index
    %c0_264 = arith.constant 0 : index
    %c0_265 = arith.constant 0 : index
    %c0_266 = arith.constant 0 : index
    %287 = vector.load %arg7[%c1_263, %c0_264, %c0_265, %c0_266] : memref<2x9x1x128xf32, #tpu.memory_space<vmem>>, vector<1x1x1x128xf32>
    %288 = vector.shape_cast %287 : vector<1x1x1x128xf32> to vector<1x128xf32>
    %289 = vector.broadcast %288 : vector<1x128xf32> to vector<49x128xf32>
    %290 = arith.mulf %286, %289 : vector<49x128xf32>
    %291 = arith.addf %283, %290 : vector<49x128xf32>
    %c1_267 = arith.constant 1 : index
    %c0_268 = arith.constant 0 : index
    %c0_269 = arith.constant 0 : index
    %292 = vector.load %arg3[%c1_267, %c0_268, %c0_269] : memref<9x49x49xbf16, #tpu.memory_space<vmem>>, vector<1x49x49xbf16>
    %293 = vector.shape_cast %292 : vector<1x49x49xbf16> to vector<49x49xbf16>
    %cst_270 = arith.constant dense<0.000000e+00> : vector<49x128xf32>
    %294 = tpu.matmul %293, %282, %cst_270 {dimension_numbers = #tpu.dot_dimension_numbers<[1], [0], [0], [1], [0, 0, 1, 1], [], []>} : vector<49x49xbf16>, vector<49x128xbf16>, vector<49x128xf32> -> vector<49x128xf32>
    %c1_271 = arith.constant 1 : index
    %c1_272 = arith.constant 1 : index
    %c0_273 = arith.constant 0 : index
    %c0_274 = arith.constant 0 : index
    %295 = vector.load %arg7[%c1_271, %c1_272, %c0_273, %c0_274] : memref<2x9x1x128xf32, #tpu.memory_space<vmem>>, vector<1x1x1x128xf32>
    %296 = vector.shape_cast %295 : vector<1x1x1x128xf32> to vector<1x128xf32>
    %297 = vector.broadcast %296 : vector<1x128xf32> to vector<49x128xf32>
    %298 = arith.mulf %294, %297 : vector<49x128xf32>
    %299 = arith.addf %291, %298 : vector<49x128xf32>
    %c2_275 = arith.constant 2 : index
    %c0_276 = arith.constant 0 : index
    %c0_277 = arith.constant 0 : index
    %300 = vector.load %arg3[%c2_275, %c0_276, %c0_277] : memref<9x49x49xbf16, #tpu.memory_space<vmem>>, vector<1x49x49xbf16>
    %301 = vector.shape_cast %300 : vector<1x49x49xbf16> to vector<49x49xbf16>
    %cst_278 = arith.constant dense<0.000000e+00> : vector<49x128xf32>
    %302 = tpu.matmul %301, %282, %cst_278 {dimension_numbers = #tpu.dot_dimension_numbers<[1], [0], [0], [1], [0, 0, 1, 1], [], []>} : vector<49x49xbf16>, vector<49x128xbf16>, vector<49x128xf32> -> vector<49x128xf32>
    %c1_279 = arith.constant 1 : index
    %c2_280 = arith.constant 2 : index
    %c0_281 = arith.constant 0 : index
    %c0_282 = arith.constant 0 : index
    %303 = vector.load %arg7[%c1_279, %c2_280, %c0_281, %c0_282] : memref<2x9x1x128xf32, #tpu.memory_space<vmem>>, vector<1x1x1x128xf32>
    %304 = vector.shape_cast %303 : vector<1x1x1x128xf32> to vector<1x128xf32>
    %305 = vector.broadcast %304 : vector<1x128xf32> to vector<49x128xf32>
    %306 = arith.mulf %302, %305 : vector<49x128xf32>
    %307 = arith.addf %299, %306 : vector<49x128xf32>
    %c3_283 = arith.constant 3 : index
    %c0_284 = arith.constant 0 : index
    %c0_285 = arith.constant 0 : index
    %308 = vector.load %arg3[%c3_283, %c0_284, %c0_285] : memref<9x49x49xbf16, #tpu.memory_space<vmem>>, vector<1x49x49xbf16>
    %309 = vector.shape_cast %308 : vector<1x49x49xbf16> to vector<49x49xbf16>
    %cst_286 = arith.constant dense<0.000000e+00> : vector<49x128xf32>
    %310 = tpu.matmul %309, %282, %cst_286 {dimension_numbers = #tpu.dot_dimension_numbers<[1], [0], [0], [1], [0, 0, 1, 1], [], []>} : vector<49x49xbf16>, vector<49x128xbf16>, vector<49x128xf32> -> vector<49x128xf32>
    %c1_287 = arith.constant 1 : index
    %c3_288 = arith.constant 3 : index
    %c0_289 = arith.constant 0 : index
    %c0_290 = arith.constant 0 : index
    %311 = vector.load %arg7[%c1_287, %c3_288, %c0_289, %c0_290] : memref<2x9x1x128xf32, #tpu.memory_space<vmem>>, vector<1x1x1x128xf32>
    %312 = vector.shape_cast %311 : vector<1x1x1x128xf32> to vector<1x128xf32>
    %313 = vector.broadcast %312 : vector<1x128xf32> to vector<49x128xf32>
    %314 = arith.mulf %310, %313 : vector<49x128xf32>
    %315 = arith.addf %307, %314 : vector<49x128xf32>
    %c4_291 = arith.constant 4 : index
    %c0_292 = arith.constant 0 : index
    %c0_293 = arith.constant 0 : index
    %316 = vector.load %arg3[%c4_291, %c0_292, %c0_293] : memref<9x49x49xbf16, #tpu.memory_space<vmem>>, vector<1x49x49xbf16>
    %317 = vector.shape_cast %316 : vector<1x49x49xbf16> to vector<49x49xbf16>
    %cst_294 = arith.constant dense<0.000000e+00> : vector<49x128xf32>
    %318 = tpu.matmul %317, %282, %cst_294 {dimension_numbers = #tpu.dot_dimension_numbers<[1], [0], [0], [1], [0, 0, 1, 1], [], []>} : vector<49x49xbf16>, vector<49x128xbf16>, vector<49x128xf32> -> vector<49x128xf32>
    %c1_295 = arith.constant 1 : index
    %c4_296 = arith.constant 4 : index
    %c0_297 = arith.constant 0 : index
    %c0_298 = arith.constant 0 : index
    %319 = vector.load %arg7[%c1_295, %c4_296, %c0_297, %c0_298] : memref<2x9x1x128xf32, #tpu.memory_space<vmem>>, vector<1x1x1x128xf32>
    %320 = vector.shape_cast %319 : vector<1x1x1x128xf32> to vector<1x128xf32>
    %321 = vector.broadcast %320 : vector<1x128xf32> to vector<49x128xf32>
    %322 = arith.mulf %318, %321 : vector<49x128xf32>
    %323 = arith.addf %315, %322 : vector<49x128xf32>
    %c5_299 = arith.constant 5 : index
    %c0_300 = arith.constant 0 : index
    %c0_301 = arith.constant 0 : index
    %324 = vector.load %arg3[%c5_299, %c0_300, %c0_301] : memref<9x49x49xbf16, #tpu.memory_space<vmem>>, vector<1x49x49xbf16>
    %325 = vector.shape_cast %324 : vector<1x49x49xbf16> to vector<49x49xbf16>
    %cst_302 = arith.constant dense<0.000000e+00> : vector<49x128xf32>
    %326 = tpu.matmul %325, %282, %cst_302 {dimension_numbers = #tpu.dot_dimension_numbers<[1], [0], [0], [1], [0, 0, 1, 1], [], []>} : vector<49x49xbf16>, vector<49x128xbf16>, vector<49x128xf32> -> vector<49x128xf32>
    %c1_303 = arith.constant 1 : index
    %c5_304 = arith.constant 5 : index
    %c0_305 = arith.constant 0 : index
    %c0_306 = arith.constant 0 : index
    %327 = vector.load %arg7[%c1_303, %c5_304, %c0_305, %c0_306] : memref<2x9x1x128xf32, #tpu.memory_space<vmem>>, vector<1x1x1x128xf32>
    %328 = vector.shape_cast %327 : vector<1x1x1x128xf32> to vector<1x128xf32>
    %329 = vector.broadcast %328 : vector<1x128xf32> to vector<49x128xf32>
    %330 = arith.mulf %326, %329 : vector<49x128xf32>
    %331 = arith.addf %323, %330 : vector<49x128xf32>
    %c6_307 = arith.constant 6 : index
    %c0_308 = arith.constant 0 : index
    %c0_309 = arith.constant 0 : index
    %332 = vector.load %arg3[%c6_307, %c0_308, %c0_309] : memref<9x49x49xbf16, #tpu.memory_space<vmem>>, vector<1x49x49xbf16>
    %333 = vector.shape_cast %332 : vector<1x49x49xbf16> to vector<49x49xbf16>
    %cst_310 = arith.constant dense<0.000000e+00> : vector<49x128xf32>
    %334 = tpu.matmul %333, %282, %cst_310 {dimension_numbers = #tpu.dot_dimension_numbers<[1], [0], [0], [1], [0, 0, 1, 1], [], []>} : vector<49x49xbf16>, vector<49x128xbf16>, vector<49x128xf32> -> vector<49x128xf32>
    %c1_311 = arith.constant 1 : index
    %c6_312 = arith.constant 6 : index
    %c0_313 = arith.constant 0 : index
    %c0_314 = arith.constant 0 : index
    %335 = vector.load %arg7[%c1_311, %c6_312, %c0_313, %c0_314] : memref<2x9x1x128xf32, #tpu.memory_space<vmem>>, vector<1x1x1x128xf32>
    %336 = vector.shape_cast %335 : vector<1x1x1x128xf32> to vector<1x128xf32>
    %337 = vector.broadcast %336 : vector<1x128xf32> to vector<49x128xf32>
    %338 = arith.mulf %334, %337 : vector<49x128xf32>
    %339 = arith.addf %331, %338 : vector<49x128xf32>
    %c7_315 = arith.constant 7 : index
    %c0_316 = arith.constant 0 : index
    %c0_317 = arith.constant 0 : index
    %340 = vector.load %arg3[%c7_315, %c0_316, %c0_317] : memref<9x49x49xbf16, #tpu.memory_space<vmem>>, vector<1x49x49xbf16>
    %341 = vector.shape_cast %340 : vector<1x49x49xbf16> to vector<49x49xbf16>
    %cst_318 = arith.constant dense<0.000000e+00> : vector<49x128xf32>
    %342 = tpu.matmul %341, %282, %cst_318 {dimension_numbers = #tpu.dot_dimension_numbers<[1], [0], [0], [1], [0, 0, 1, 1], [], []>} : vector<49x49xbf16>, vector<49x128xbf16>, vector<49x128xf32> -> vector<49x128xf32>
    %c1_319 = arith.constant 1 : index
    %c7_320 = arith.constant 7 : index
    %c0_321 = arith.constant 0 : index
    %c0_322 = arith.constant 0 : index
    %343 = vector.load %arg7[%c1_319, %c7_320, %c0_321, %c0_322] : memref<2x9x1x128xf32, #tpu.memory_space<vmem>>, vector<1x1x1x128xf32>
    %344 = vector.shape_cast %343 : vector<1x1x1x128xf32> to vector<1x128xf32>
    %345 = vector.broadcast %344 : vector<1x128xf32> to vector<49x128xf32>
    %346 = arith.mulf %342, %345 : vector<49x128xf32>
    %347 = arith.addf %339, %346 : vector<49x128xf32>
    %c8_323 = arith.constant 8 : index
    %c0_324 = arith.constant 0 : index
    %c0_325 = arith.constant 0 : index
    %348 = vector.load %arg3[%c8_323, %c0_324, %c0_325] : memref<9x49x49xbf16, #tpu.memory_space<vmem>>, vector<1x49x49xbf16>
    %349 = vector.shape_cast %348 : vector<1x49x49xbf16> to vector<49x49xbf16>
    %cst_326 = arith.constant dense<0.000000e+00> : vector<49x128xf32>
    %350 = tpu.matmul %349, %282, %cst_326 {dimension_numbers = #tpu.dot_dimension_numbers<[1], [0], [0], [1], [0, 0, 1, 1], [], []>} : vector<49x49xbf16>, vector<49x128xbf16>, vector<49x128xf32> -> vector<49x128xf32>
    %c1_327 = arith.constant 1 : index
    %c8_328 = arith.constant 8 : index
    %c0_329 = arith.constant 0 : index
    %c0_330 = arith.constant 0 : index
    %351 = vector.load %arg7[%c1_327, %c8_328, %c0_329, %c0_330] : memref<2x9x1x128xf32, #tpu.memory_space<vmem>>, vector<1x1x1x128xf32>
    %352 = vector.shape_cast %351 : vector<1x1x1x128xf32> to vector<1x128xf32>
    %353 = vector.broadcast %352 : vector<1x128xf32> to vector<49x128xf32>
    %354 = arith.mulf %350, %353 : vector<49x128xf32>
    %355 = arith.addf %347, %354 : vector<49x128xf32>
    %356 = vector.broadcast %281 : vector<1x128xf32> to vector<49x128xf32>
    %357 = arith.addf %355, %356 : vector<49x128xf32>
    %cst_331 = arith.constant 0.000000e+00 : f32
    %358 = vector.broadcast %cst_331 : f32 to vector<49x128xf32>
    %359 = arith.maximumf %357, %358 : vector<49x128xf32>
    %c4_332 = arith.constant 4 : index
    %c0_333 = arith.constant 0 : index
    %c0_334 = arith.constant 0 : index
    %360 = vector.load %arg5[%c4_332, %c0_333, %c0_334] : memref<7x128x128xbf16, #tpu.memory_space<vmem>>, vector<1x128x128xbf16>
    %361 = vector.shape_cast %360 : vector<1x128x128xbf16> to vector<128x128xbf16>
    %c8_335 = arith.constant 8 : index
    %c0_336 = arith.constant 0 : index
    %c0_337 = arith.constant 0 : index
    %362 = vector.load %arg8[%c8_335, %c0_336, %c0_337] : memref<12x1x128xf32, #tpu.memory_space<vmem>>, vector<1x1x128xf32>
    %363 = vector.shape_cast %362 : vector<1x1x128xf32> to vector<1x128xf32>
    %364 = arith.truncf %359 : vector<49x128xf32> to vector<49x128xbf16>
    %cst_338 = arith.constant dense<0.000000e+00> : vector<49x128xf32>
    %365 = tpu.matmul %364, %361, %cst_338 {dimension_numbers = #tpu.dot_dimension_numbers<[1], [0], [0], [1], [0, 0, 1, 1], [], []>} : vector<49x128xbf16>, vector<128x128xbf16>, vector<49x128xf32> -> vector<49x128xf32>
    %366 = vector.broadcast %363 : vector<1x128xf32> to vector<49x128xf32>
    %367 = arith.addf %365, %366 : vector<49x128xf32>
    %cst_339 = arith.constant 0.000000e+00 : f32
    %368 = vector.broadcast %cst_339 : f32 to vector<49x128xf32>
    %369 = arith.maximumf %367, %368 : vector<49x128xf32>
    %c5_340 = arith.constant 5 : index
    %c0_341 = arith.constant 0 : index
    %c0_342 = arith.constant 0 : index
    %370 = vector.load %arg5[%c5_340, %c0_341, %c0_342] : memref<7x128x128xbf16, #tpu.memory_space<vmem>>, vector<1x128x128xbf16>
    %371 = vector.shape_cast %370 : vector<1x128x128xbf16> to vector<128x128xbf16>
    %c9 = arith.constant 9 : index
    %c0_343 = arith.constant 0 : index
    %c0_344 = arith.constant 0 : index
    %372 = vector.load %arg8[%c9, %c0_343, %c0_344] : memref<12x1x128xf32, #tpu.memory_space<vmem>>, vector<1x1x128xf32>
    %373 = vector.shape_cast %372 : vector<1x1x128xf32> to vector<1x128xf32>
    %374 = arith.truncf %369 : vector<49x128xf32> to vector<49x128xbf16>
    %cst_345 = arith.constant dense<0.000000e+00> : vector<49x128xf32>
    %375 = tpu.matmul %374, %371, %cst_345 {dimension_numbers = #tpu.dot_dimension_numbers<[1], [0], [0], [1], [0, 0, 1, 1], [], []>} : vector<49x128xbf16>, vector<128x128xbf16>, vector<49x128xf32> -> vector<49x128xf32>
    %376 = vector.broadcast %373 : vector<1x128xf32> to vector<49x128xf32>
    %377 = arith.addf %375, %376 : vector<49x128xf32>
    %378 = arith.addf %377, %269 : vector<49x128xf32>
    %c6_346 = arith.constant 6 : index
    %c0_347 = arith.constant 0 : index
    %c0_348 = arith.constant 0 : index
    %379 = vector.load %arg5[%c6_346, %c0_347, %c0_348] : memref<7x128x128xbf16, #tpu.memory_space<vmem>>, vector<1x128x128xbf16>
    %380 = vector.shape_cast %379 : vector<1x128x128xbf16> to vector<128x128xbf16>
    %381 = arith.truncf %80 : vector<49x128xf32> to vector<49x128xbf16>
    %cst_349 = arith.constant dense<0.000000e+00> : vector<49x128xf32>
    %382 = tpu.matmul %381, %380, %cst_349 {dimension_numbers = #tpu.dot_dimension_numbers<[1], [0], [0], [1], [0, 0, 1, 1], [], []>} : vector<49x128xbf16>, vector<128x128xbf16>, vector<49x128xf32> -> vector<49x128xf32>
    %383 = arith.addf %378, %382 : vector<49x128xf32>
    %c0_350 = arith.constant 0 : index
    %c0_351 = arith.constant 0 : index
    %384 = vector.load %arg9[%c0_350, %c0_351] : memref<128x128xf32, #tpu.memory_space<vmem>>, vector<128x128xf32>
    %cst_352 = arith.constant dense<0.000000e+00> : vector<49x128xf32>
    %385 = tpu.matmul %383, %384, %cst_352 {dimension_numbers = #tpu.dot_dimension_numbers<[1], [0], [0], [1], [0, 0, 1, 1], [], []>} : vector<49x128xf32>, vector<128x128xf32>, vector<49x128xf32> -> vector<49x128xf32>
    %cst_353 = arith.constant dense<0.000000e+00> : vector<128xf32>
    %386 = vector.multi_reduction <add>, %385, %cst_353 [0] : vector<49x128xf32> to vector<128xf32>
    %387 = vector.shape_cast %386 : vector<128xf32> to vector<1x128xf32>
    %cst_354 = arith.constant 0.0204081628 : f32
    %388 = vector.broadcast %cst_354 : f32 to vector<1x128xf32>
    %389 = arith.mulf %387, %388 : vector<1x128xf32>
    %c10 = arith.constant 10 : index
    %c0_355 = arith.constant 0 : index
    %c0_356 = arith.constant 0 : index
    %390 = vector.load %arg8[%c10, %c0_355, %c0_356] : memref<12x1x128xf32, #tpu.memory_space<vmem>>, vector<1x1x128xf32>
    %391 = vector.shape_cast %390 : vector<1x1x128xf32> to vector<1x128xf32>
    %392 = arith.addf %389, %391 : vector<1x128xf32>
    %c11 = arith.constant 11 : index
    %c0_357 = arith.constant 0 : index
    %c0_358 = arith.constant 0 : index
    %393 = vector.load %arg8[%c11, %c0_357, %c0_358] : memref<12x1x128xf32, #tpu.memory_space<vmem>>, vector<1x1x128xf32>
    %394 = vector.shape_cast %393 : vector<1x1x128xf32> to vector<1x128xf32>
    %cst_359 = arith.constant 0.000000e+00 : f32
    %395 = vector.broadcast %cst_359 : f32 to vector<1x128xf32>
    %396 = arith.cmpf ogt, %394, %395 : vector<1x128xf32>
    %cst_360 = arith.constant 0.000000e+00 : f32
    %397 = vector.broadcast %cst_360 : f32 to vector<1x128xf32>
    %398 = arith.maximumf %392, %397 : vector<1x128xf32>
    %399 = arith.select %396, %398, %392 : vector<1x128xi1>, vector<1x128xf32>
    %c0_361 = arith.constant 0 : index
    %c0_362 = arith.constant 0 : index
    %c0_363 = arith.constant 0 : index
    %400 = vector.load %arg10[%c0_361, %c0_362, %c0_363] : memref<1x1x128xf32, #tpu.memory_space<vmem>>, vector<1x1x128xf32>
    %401 = vector.shape_cast %400 : vector<1x1x128xf32> to vector<1x128xf32>
    %402 = vector.shape_cast %399 : vector<1x128xf32> to vector<1x1x128xf32>
    tpu.vector_store %arg10[%c0_361, %c0_362, %c0_363], %402 {strides = array<i32>} : memref<1x1x128xf32, #tpu.memory_space<vmem>>, vector<1x1x128xf32>,
    return
  }
  func.func @transform_0(%arg0: i32) -> (i32, i32, i32) {
    %c0_i32 = arith.constant 0 : i32
    %c0_i32_0 = arith.constant 0 : i32
    %c0_i32_1 = arith.constant 0 : i32
    return %arg0, %c0_i32, %c0_i32_0 : i32, i32, i32
  }
  func.func @transform_1(%arg0: i32) -> (i32, i32, i32) {
    %c0_i32 = arith.constant 0 : i32
    %c0_i32_0 = arith.constant 0 : i32
    %c0_i32_1 = arith.constant 0 : i32
    %c0_i32_2 = arith.constant 0 : i32
    return %c0_i32, %c0_i32_0, %c0_i32_1 : i32, i32, i32
  }
  func.func @transform_2(%arg0: i32) -> (i32, i32, i32) {
    %c0_i32 = arith.constant 0 : i32
    %c0_i32_0 = arith.constant 0 : i32
    %c0_i32_1 = arith.constant 0 : i32
    %c0_i32_2 = arith.constant 0 : i32
    return %c0_i32, %c0_i32_0, %c0_i32_1 : i32, i32, i32
  }
  func.func @transform_3(%arg0: i32) -> (i32, i32, i32) {
    %c0_i32 = arith.constant 0 : i32
    %c0_i32_0 = arith.constant 0 : i32
    %c0_i32_1 = arith.constant 0 : i32
    %c0_i32_2 = arith.constant 0 : i32
    return %c0_i32, %c0_i32_0, %c0_i32_1 : i32, i32, i32
  }
  func.func @transform_4(%arg0: i32) -> (i32, i32, i32) {
    %c0_i32 = arith.constant 0 : i32
    %c0_i32_0 = arith.constant 0 : i32
    %c0_i32_1 = arith.constant 0 : i32
    %c0_i32_2 = arith.constant 0 : i32
    return %c0_i32, %c0_i32_0, %c0_i32_1 : i32, i32, i32
  }
  func.func @transform_5(%arg0: i32) -> (i32, i32, i32) {
    %c0_i32 = arith.constant 0 : i32
    %c0_i32_0 = arith.constant 0 : i32
    %c0_i32_1 = arith.constant 0 : i32
    %c0_i32_2 = arith.constant 0 : i32
    return %c0_i32, %c0_i32_0, %c0_i32_1 : i32, i32, i32
  }
  func.func @transform_6(%arg0: i32) -> (i32, i32, i32, i32) {
    %c0_i32 = arith.constant 0 : i32
    %c0_i32_0 = arith.constant 0 : i32
    %c0_i32_1 = arith.constant 0 : i32
    %c0_i32_2 = arith.constant 0 : i32
    %c0_i32_3 = arith.constant 0 : i32
    return %c0_i32, %c0_i32_0, %c0_i32_1, %c0_i32_2 : i32, i32, i32, i32
  }
  func.func @transform_7(%arg0: i32) -> (i32, i32, i32) {
    %c0_i32 = arith.constant 0 : i32
    %c0_i32_0 = arith.constant 0 : i32
    %c0_i32_1 = arith.constant 0 : i32
    %c0_i32_2 = arith.constant 0 : i32
    return %c0_i32, %c0_i32_0, %c0_i32_1 : i32, i32, i32
  }
  func.func @transform_8(%arg0: i32) -> (i32, i32) {
    %c0_i32 = arith.constant 0 : i32
    %c0_i32_0 = arith.constant 0 : i32
    %c0_i32_1 = arith.constant 0 : i32
    return %c0_i32, %c0_i32_0 : i32, i32
  }
  func.func @transform_9(%arg0: i32) -> (i32, i32, i32) {
    %c0_i32 = arith.constant 0 : i32
    %c0_i32_0 = arith.constant 0 : i32
    %c0_i32_1 = arith.constant 0 : i32
    return %arg0, %c0_i32, %c0_i32_0 : i32, i32, i32
  }
}

</mosaic_0001>

<llo_original>
// kernel: fwd.1
$region0: #{fwd.1}
  #allocation0 [shape = 'u32[]', space=smem, size = 0x4, offset = 0x4, fixed_abs, tag = 'smem constant byte address 0x4 - core index']
  #allocation1 [shape = 'u32[72,128]{1,0:T(1,128)}', space=vmem, size = 0x9000, scoped, tag = 'internal scratch']
  %s0 = inlined_call_operand.vmem [shape: bf16[2,256,8], index: 0, kind: input, shape index: {}]
  %s1 = inlined_call_operand.hbm [shape: bf16[9,49,256], index: 1, kind: input, shape index: {}]
  %s2 = inlined_call_operand.hbm [shape: bf16[9,49,49], index: 2, kind: input, shape index: {}]
  %s3 = inlined_call_operand.hbm [shape: bf16[9,8,128], index: 3, kind: input, shape index: {}]
  %s4 = inlined_call_operand.vmem [shape: bf16[7,128,128], index: 4, kind: input, shape index: {}]
  %s5 = inlined_call_operand.vmem [shape: bf16[9,128,128], index: 5, kind: input, shape index: {}]
  %s6 = inlined_call_operand.hbm [shape: f32[2,9,1,128], index: 6, kind: input, shape index: {}]
  %s7 = inlined_call_operand.hbm [shape: f32[12,1,128], index: 7, kind: input, shape index: {}]
  %s8 = inlined_call_operand.hbm [shape: f32[128,128], index: 8, kind: input, shape index: {}]
  %s9 = inlined_call_operand.vmem [shape: f32[2,1,128], index: 9, kind: output, shape index: {}]
  %s10 = sld [smem:[#allocation0]]
  $region93: #{fwd.1} parent=0
    _
  %s12 = ssub.s32 1, %s10
  %s13 = scalar_select 0, %s12, %s10
  $region1: #{fwd.1} parent=0
    #allocation2 [shape = 'u8[258048]{0}', space=vmem, size = 0x3f000, scoped, tag = 'input window, operand 1, single buffered']
    #allocation3 [shape = 's32[2]{0}', space=sflag, size = 0x8, scoped, tag = 'scoped memory for fwd.1']
    #allocation4 [shape = 'u8[129024]{0}', space=vmem, size = 0x1f800, scoped, tag = 'input window, operand 2, single buffered']
    #allocation5 [shape = 's32[1]{0}', space=sflag, size = 0x4, scoped, tag = 'scoped memory for fwd.1']
    #allocation6 [shape = 'u8[18432]{0}', space=vmem, size = 0x4800, scoped, tag = 'input window, operand 3, single buffered']
    #allocation7 [shape = 'u8[9216]{0}', space=vmem, size = 0x2400, scoped, tag = 'input window, operand 6, single buffered']
    #allocation8 [shape = 's32[1]{0}', space=sflag, size = 0x4, scoped, tag = 'scoped memory for fwd.1']
    #allocation9 [shape = 'u8[6144]{0}', space=vmem, size = 0x1800, scoped, tag = 'input window, operand 7, single buffered']
    #allocation10 [shape = 'u8[65536]{0}', space=vmem, size = 0x10000, scoped, tag = 'input window, operand 8, single buffered']
    #allocation11 [shape = 's32[1]{0}', space=sflag, size = 0x4, scoped, tag = 'scoped memory for fwd.1']
    %14 = vsyncpa [#allocation3], 0
    %15 = vsyncpa [#allocation5], 0
    %16 = vsyncpa [#allocation8], 0
    %17 = vsyncpa [#allocation11], 0
    loop: start=0, step=1, limit=4
    $region2: #{fwd.1} parent=1 // loop_pre_header
      _
    $region3: #{fwd.1} parent=1 // loop_header
      %s19 = sphi 0, %s23
      %p20 = scmp.ge.s32.totalorder %s19, 4
      %s29 = sphi 0, %s31
      %s32 = sphi 0, %s29
      %s33 = sphi 0, %s32
      %s49 = sphi 0, %s33
      %s53 = sphi 0, %s53
      %s55 = sphi 0, %s53
      %s56 = sphi 0, %s55
      %s70 = sphi 0, %s56
      %s74 = sphi 0, %s74
      %s76 = sphi 0, %s74
      %s77 = sphi 0, %s76
      %s91 = sphi 0, %s77
      %s95 = sphi 0, %s95
      %s97 = sphi 0, %s95
      %s98 = sphi 0, %s97
      %s112 = sphi 0, %s98
      %s116 = sphi 0, %s116
      %s118 = sphi 0, %s116
      %s119 = sphi 0, %s118
      %s133 = sphi 0, %s119
      %s137 = sphi 0, %s137
      %s139 = sphi 0, %s137
      %s140 = sphi 0, %s139
      %s154 = sphi 0, %s140
      %s158 = sphi 0, %s158
      %s160 = sphi 0, %s158
      %s161 = sphi 0, %s160
      %s175 = sphi 0, %s161
      %s179 = sphi 0, %s179
      %s181 = sphi 0, %s179
      %s182 = sphi 0, %s181
      %s196 = sphi 0, %s182
      %s200 = sphi 0, %s200
      %s202 = sphi 0, %s200
      %s203 = sphi 0, %s202
      %s217 = sphi 0, %s203
      %s223 = sphi 0, %s225
      %s226 = sphi 0, %s223
      %s227 = sphi 0, %s226
      %s243 = sphi 0, %s227
    $region4: #{fwd.1} parent=1 // loop_header_branch
      %22 = sbr.rel (%p20) target = $region8
    $region5: #{fwd.1} parent=1 // loop_body
      %s24 = ssub.s32 %s19, 1
      %s25 = ssub.s32 %s19, 2
      %s26 = sadd.s32 %s19, 1
      %s27 = ssub.s32 %s19, %s26
      %p28 = scmp.eq.s32.totalorder %s27, 0
      %s30 = sadd.s32 %s29, 1
      %s31 = scalar_select %p28, %s29, %s30
      %p34 = pneg %p28
      %p35 = scmp.eq.s32.totalorder %s19, 1
      %p36 = por %p34, %p35
      %p37 = scmp.ne.s32.totalorder %s29, %s32
      %p38 = scmp.eq.s32.totalorder %s19, 0
      %p39 = por %p37, %p38
      %p40 = scmp.ne.s32.totalorder %s29, %s32
      %p41 = scmp.eq.s32.totalorder %s24, 1
      %p42 = por %p40, %p41
      %p43 = scmp.ne.s32.totalorder %s32, %s33
      %p44 = scmp.eq.s32.totalorder %s24, 0
      %p45 = por %p43, %p44
      %p46 = scmp.ne.s32.totalorder %s32, %s33
      %p47 = scmp.eq.s32.totalorder %s25, 1
      %p48 = por %p46, %p47
      %p50 = scmp.ne.s32.totalorder %s33, %s49
      %p51 = scmp.eq.s32.totalorder %s25, 0
      %p52 = por %p50, %p51
      %s54 = sadd.s32 %s53, 1
      %p57 = scmp.eq.s32.totalorder %s19, 1
      %p58 = scmp.ne.s32.totalorder %s53, %s55
      %p59 = scmp.eq.s32.totalorder %s19, 0
      %p60 = por %p58, %p59
      %p61 = scmp.ne.s32.totalorder %s53, %s55
      %p62 = scmp.eq.s32.totalorder %s24, 1
      %p63 = por %p61, %p62
      %p64 = scmp.ne.s32.totalorder %s55, %s56
      %p65 = scmp.eq.s32.totalorder %s24, 0
      %p66 = por %p64, %p65
      %p67 = scmp.ne.s32.totalorder %s55, %s56
      %p68 = scmp.eq.s32.totalorder %s25, 1
      %p69 = por %p67, %p68
      %p71 = scmp.ne.s32.totalorder %s56, %s70
      %p72 = scmp.eq.s32.totalorder %s25, 0
      %p73 = por %p71, %p72
      %s75 = sadd.s32 %s74, 1
      %p78 = scmp.eq.s32.totalorder %s19, 1
      %p79 = scmp.ne.s32.totalorder %s74, %s76
      %p80 = scmp.eq.s32.totalorder %s19, 0
      %p81 = por %p79, %p80
      %p82 = scmp.ne.s32.totalorder %s74, %s76
      %p83 = scmp.eq.s32.totalorder %s24, 1
      %p84 = por %p82, %p83
      %p85 = scmp.ne.s32.totalorder %s76, %s77
      %p86 = scmp.eq.s32.totalorder %s24, 0
      %p87 = por %p85, %p86
      %p88 = scmp.ne.s32.totalorder %s76, %s77
      %p89 = scmp.eq.s32.totalorder %s25, 1
      %p90 = por %p88, %p89
      %p92 = scmp.ne.s32.totalorder %s77, %s91
      %p93 = scmp.eq.s32.totalorder %s25, 0
      %p94 = por %p92, %p93
      %s96 = sadd.s32 %s95, 1
      %p99 = scmp.eq.s32.totalorder %s19, 1
      %p100 = scmp.ne.s32.totalorder %s95, %s97
      %p101 = scmp.eq.s32.totalorder %s19, 0
      %p102 = por %p100, %p101
      %p103 = scmp.ne.s32.totalorder %s95, %s97
      %p104 = scmp.eq.s32.totalorder %s24, 1
      %p105 = por %p103, %p104
      %p106 = scmp.ne.s32.totalorder %s97, %s98
      %p107 = scmp.eq.s32.totalorder %s24, 0
      %p108 = por %p106, %p107
      %p109 = scmp.ne.s32.totalorder %s97, %s98
      %p110 = scmp.eq.s32.totalorder %s25, 1
      %p111 = por %p109, %p110
      %p113 = scmp.ne.s32.totalorder %s98, %s112
      %p114 = scmp.eq.s32.totalorder %s25, 0
      %p115 = por %p113, %p114
      %s117 = sadd.s32 %s116, 1
      %p120 = scmp.eq.s32.totalorder %s19, 1
      %p121 = scmp.ne.s32.totalorder %s116, %s118
      %p122 = scmp.eq.s32.totalorder %s19, 0
      %p123 = por %p121, %p122
      %p124 = scmp.ne.s32.totalorder %s116, %s118
      %p125 = scmp.eq.s32.totalorder %s24, 1
      %p126 = por %p124, %p125
      %p127 = scmp.ne.s32.totalorder %s118, %s119
      %p128 = scmp.eq.s32.totalorder %s24, 0
      %p129 = por %p127, %p128
      %p130 = scmp.ne.s32.totalorder %s118, %s119
      %p131 = scmp.eq.s32.totalorder %s25, 1
      %p132 = por %p130, %p131
      %p134 = scmp.ne.s32.totalorder %s119, %s133
      %p135 = scmp.eq.s32.totalorder %s25, 0
      %p136 = por %p134, %p135
      %s138 = sadd.s32 %s137, 1
      %p141 = scmp.eq.s32.totalorder %s19, 1
      %p142 = scmp.ne.s32.totalorder %s137, %s139
      %p143 = scmp.eq.s32.totalorder %s19, 0
      %p144 = por %p142, %p143
      %p145 = scmp.ne.s32.totalorder %s137, %s139
      %p146 = scmp.eq.s32.totalorder %s24, 1
      %p147 = por %p145, %p146
      %p148 = scmp.ne.s32.totalorder %s139, %s140
      %p149 = scmp.eq.s32.totalorder %s24, 0
      %p150 = por %p148, %p149
      %p151 = scmp.ne.s32.totalorder %s139, %s140
      %p152 = scmp.eq.s32.totalorder %s25, 1
      %p153 = por %p151, %p152
      %p155 = scmp.ne.s32.totalorder %s140, %s154
      %p156 = scmp.eq.s32.totalorder %s25, 0
      %p157 = por %p155, %p156
      %s159 = sadd.s32 %s158, 1
      %p162 = scmp.eq.s32.totalorder %s19, 1
      %p163 = scmp.ne.s32.totalorder %s158, %s160
      %p164 = scmp.eq.s32.totalorder %s19, 0
      %p165 = por %p163, %p164
      %p166 = scmp.ne.s32.totalorder %s158, %s160
      %p167 = scmp.eq.s32.totalorder %s24, 1
      %p168 = por %p166, %p167
      %p169 = scmp.ne.s32.totalorder %s160, %s161
      %p170 = scmp.eq.s32.totalorder %s24, 0
      %p171 = por %p169, %p170
      %p172 = scmp.ne.s32.totalorder %s160, %s161
      %p173 = scmp.eq.s32.totalorder %s25, 1
      %p174 = por %p172, %p173
      %p176 = scmp.ne.s32.totalorder %s161, %s175
      %p177 = scmp.eq.s32.totalorder %s25, 0
      %p178 = por %p176, %p177
      %s180 = sadd.s32 %s179, 1
      %p183 = scmp.eq.s32.totalorder %s19, 1
      %p184 = scmp.ne.s32.totalorder %s179, %s181
      %p185 = scmp.eq.s32.totalorder %s19, 0
      %p186 = por %p184, %p185
      %p187 = scmp.ne.s32.totalorder %s179, %s181
      %p188 = scmp.eq.s32.totalorder %s24, 1
      %p189 = por %p187, %p188
      %p190 = scmp.ne.s32.totalorder %s181, %s182
      %p191 = scmp.eq.s32.totalorder %s24, 0
      %p192 = por %p190, %p191
      %p193 = scmp.ne.s32.totalorder %s181, %s182
      %p194 = scmp.eq.s32.totalorder %s25, 1
      %p195 = por %p193, %p194
      %p197 = scmp.ne.s32.totalorder %s182, %s196
      %p198 = scmp.eq.s32.totalorder %s25, 0
      %p199 = por %p197, %p198
      %s201 = sadd.s32 %s200, 1
      %p204 = scmp.eq.s32.totalorder %s19, 1
      %p205 = scmp.ne.s32.totalorder %s200, %s202
      %p206 = scmp.eq.s32.totalorder %s19, 0
      %p207 = por %p205, %p206
      %p208 = scmp.ne.s32.totalorder %s200, %s202
      %p209 = scmp.eq.s32.totalorder %s24, 1
      %p210 = por %p208, %p209
      %p211 = scmp.ne.s32.totalorder %s202, %s203
      %p212 = scmp.eq.s32.totalorder %s24, 0
      %p213 = por %p211, %p212
      %p214 = scmp.ne.s32.totalorder %s202, %s203
      %p215 = scmp.eq.s32.totalorder %s25, 1
      %p216 = por %p214, %p215
      %p218 = scmp.ne.s32.totalorder %s203, %s217
      %p219 = scmp.eq.s32.totalorder %s25, 0
      %p220 = por %p218, %p219
      %s221 = ssub.s32 %s19, %s26
      %p222 = scmp.eq.s32.totalorder %s221, 0
      %s224 = sadd.s32 %s223, 1
      %s225 = scalar_select %p222, %s223, %s224
      %p228 = pneg %p222
      %p229 = scmp.eq.s32.totalorder %s19, 1
      %p230 = por %p228, %p229
      %p231 = scmp.ne.s32.totalorder %s223, %s226
      %p232 = scmp.eq.s32.totalorder %s19, 0
      %p233 = por %p231, %p232
      %p234 = scmp.ne.s32.totalorder %s223, %s226
      %p235 = scmp.eq.s32.totalorder %s24, 1
      %p236 = por %p234, %p235
      %p237 = scmp.ne.s32.totalorder %s226, %s227
      %p238 = scmp.eq.s32.totalorder %s24, 0
      %p239 = por %p237, %p238
      %p240 = scmp.ne.s32.totalorder %s226, %s227
      %p241 = scmp.eq.s32.totalorder %s25, 1
      %p242 = por %p240, %p241
      %p244 = scmp.ne.s32.totalorder %s227, %s243
      %p245 = scmp.eq.s32.totalorder %s25, 0
      %p246 = por %p244, %p245
      %p247 = scmp.le.s32.totalorder 1, %s19
      %p248 = scmp.lt.s32.totalorder %s19, 3
      %p249 = pnand %p247, %p248
      %p250 = pneg %p249
      // Predicated region
      $region9: #{fwd.1} parent=5 // pred_check
        _
      $region10: #{fwd.1} parent=5 // pred_check_branch
        %252 = sbr.rel (%p249) target = $region12
      $region11: #{fwd.1} parent=5 // pred_region
        %s253 = ssub.s32 %s19, 1
        // Predicated region
        $region13: #{fwd.1} parent=11 // pred_check
          %p254 = pneg %p66
        $region14: #{fwd.1} parent=11 // pred_check_branch
          %256 = sbr.rel (%p254) target = $region16
        $region15: #{fwd.1} parent=11 // pred_region
          %258 = vsyncadd [#allocation3], 0
          %s259 = sshll.u32 %s1, 4
          %s260 = int_to_ptr.hbm [resolvable:$true] %s259
          %s261 = sshll.u32 [#allocation2], 4
          %s262 = int_to_ptr.vmem [resolvable:$true] %s261
          %267 = dma.hbm_to_vmem [thread:$0]  %s260, 8064, %s262, [#allocation3], 128, 128, 8
        $region16: #{fwd.1} parent=11 // pred_fallthru
          _
        // Predicated region
        $region17: #{fwd.1} parent=11 // pred_check
          %p268 = pneg %p87
        $region18: #{fwd.1} parent=11 // pred_check_branch
          %270 = sbr.rel (%p268) target = $region20
        $region19: #{fwd.1} parent=11 // pred_region
          %272 = vsyncadd [#allocation5], 0
          %s273 = sshll.u32 %s2, 4
          %s274 = int_to_ptr.hbm [resolvable:$true] %s273
          %s275 = sshll.u32 [#allocation4], 4
          %s276 = int_to_ptr.vmem [resolvable:$true] %s275
          %281 = dma.hbm_to_vmem [thread:$0]  %s274, 4032, %s276, [#allocation5], 64, 64, 4
        $region20: #{fwd.1} parent=11 // pred_fallthru
          _
        // Predicated region
        $region21: #{fwd.1} parent=11 // pred_check
          %p282 = pneg %p108
        $region22: #{fwd.1} parent=11 // pred_check_branch
          %284 = sbr.rel (%p282) target = $region24
        $region23: #{fwd.1} parent=11 // pred_region
          %286 = vsyncadd [#allocation5], 0
          %s287 = sshll.u32 %s3, 4
          %s288 = int_to_ptr.hbm [resolvable:$true] %s287
          %s289 = sshll.u32 [#allocation6], 4
          %s290 = int_to_ptr.vmem [resolvable:$true] %s289
          %295 = dma.hbm_to_vmem [thread:$0]  %s288, 576, %s290, [#allocation5], 64, 64, 4
        $region24: #{fwd.1} parent=11 // pred_fallthru
          _
        // Predicated region
        $region25: #{fwd.1} parent=11 // pred_check
          %p296 = pneg %p129
        $region26: #{fwd.1} parent=11 // pred_check_branch
          %298 = sbr.rel (%p296) target = $region28
        $region27: #{fwd.1} parent=11 // pred_region
          _
        $region28: #{fwd.1} parent=11 // pred_fallthru
          _
        // Predicated region
        $region29: #{fwd.1} parent=11 // pred_check
          %p299 = pneg %p150
        $region30: #{fwd.1} parent=11 // pred_check_branch
          %301 = sbr.rel (%p299) target = $region32
        $region31: #{fwd.1} parent=11 // pred_region
          _
        $region32: #{fwd.1} parent=11 // pred_fallthru
          _
        // Predicated region
        $region33: #{fwd.1} parent=11 // pred_check
          %p302 = pneg %p171
        $region34: #{fwd.1} parent=11 // pred_check_branch
          %304 = sbr.rel (%p302) target = $region36
        $region35: #{fwd.1} parent=11 // pred_region
          %306 = vsyncadd [#allocation8], 0
          %s307 = sshll.u32 %s6, 4
          %s308 = int_to_ptr.hbm [resolvable:$true] %s307
          %s309 = sshll.u32 [#allocation7], 4
          %s310 = int_to_ptr.vmem [resolvable:$true] %s309
          %315 = dma.hbm_to_vmem [thread:$0]  %s308, 288, %s310, [#allocation8], 16, 16, 1
        $region36: #{fwd.1} parent=11 // pred_fallthru
          _
        // Predicated region
        $region37: #{fwd.1} parent=11 // pred_check
          %p316 = pneg %p192
        $region38: #{fwd.1} parent=11 // pred_check_branch
          %318 = sbr.rel (%p316) target = $region40
        $region39: #{fwd.1} parent=11 // pred_region
          %320 = vsyncadd [#allocation8], 0
          %s321 = sshll.u32 %s7, 4
          %s322 = int_to_ptr.hbm [resolvable:$true] %s321
          %s323 = sshll.u32 [#allocation9], 4
          %s324 = int_to_ptr.vmem [resolvable:$true] %s323
          %329 = dma.hbm_to_vmem [thread:$0]  %s322, 192, %s324, [#allocation8], 16, 16, 1
        $region40: #{fwd.1} parent=11 // pred_fallthru
          _
        // Predicated region
        $region41: #{fwd.1} parent=11 // pred_check
          %p330 = pneg %p213
        $region42: #{fwd.1} parent=11 // pred_check_branch
          %332 = sbr.rel (%p330) target = $region44
        $region43: #{fwd.1} parent=11 // pred_region
          %334 = vsyncadd [#allocation11], 0
          %s335 = sshll.u32 %s8, 4
          %s336 = int_to_ptr.hbm [resolvable:$true] %s335
          %s337 = sshll.u32 [#allocation10], 4
          %s338 = int_to_ptr.vmem [resolvable:$true] %s337
          %343 = dma.hbm_to_vmem [thread:$0]  %s336, 2048, %s338, [#allocation11], 128, 128, 8
        $region44: #{fwd.1} parent=11 // pred_fallthru
          _
      $region12: #{fwd.1} parent=5 // pred_fallthru
        _
      %p344 = scmp.lt.s32.totalorder %s19, 2
      // Predicated region
      $region45: #{fwd.1} parent=5 // pred_check
        %p345 = pneg %p344
      $region46: #{fwd.1} parent=5 // pred_check_branch
        %347 = sbr.rel (%p345) target = $region48
      $region47: #{fwd.1} parent=5 // pred_region
        // Predicated region
        $region49: #{fwd.1} parent=47 // pred_check
          %p348 = pneg %p39
        $region50: #{fwd.1} parent=47 // pred_check_branch
          %350 = sbr.rel (%p348) target = $region52
        $region51: #{fwd.1} parent=47 // pred_region
          %p351 = scmp.lt.s32.totalorder %s19, 1
          %s352 = scalar_select %p351, %s19, 1
          %s353 = smul.addr %s352, 32
          %s354 = smul.addr %s353, 4
          %s355 = scalar_lea.vmem %s0, %s354
        $region52: #{fwd.1} parent=47 // pred_fallthru
          _
      $region48: #{fwd.1} parent=5 // pred_fallthru
        _
      %p356 = scmp.le.s32.totalorder 1, %s19
      %p357 = scmp.lt.s32.totalorder %s19, 3
      %p358 = pnand %p356, %p357
      %p359 = pneg %p358
      // Predicated region
      $region53: #{fwd.1} parent=5 // pred_check
        _
      $region54: #{fwd.1} parent=5 // pred_check_branch
        %361 = sbr.rel (%p358) target = $region56
      $region55: #{fwd.1} parent=5 // pred_region
        %s362 = ssub.s32 %s19, 1
        // Predicated region
        $region57: #{fwd.1} parent=55 // pred_check
          %p363 = pneg %p66
        $region58: #{fwd.1} parent=55 // pred_check_branch
          %365 = sbr.rel (%p363) target = $region60
        $region59: #{fwd.1} parent=55 // pred_region
          %367 = dma.done [#allocation3], 8064
        $region60: #{fwd.1} parent=55 // pred_fallthru
          _
        // Predicated region
        $region61: #{fwd.1} parent=55 // pred_check
          %p368 = pneg %p87
        $region62: #{fwd.1} parent=55 // pred_check_branch
          %370 = sbr.rel (%p368) target = $region64
        $region63: #{fwd.1} parent=55 // pred_region
          %372 = dma.done [#allocation5], 4032
        $region64: #{fwd.1} parent=55 // pred_fallthru
          _
        // Predicated region
        $region65: #{fwd.1} parent=55 // pred_check
          %p373 = pneg %p108
        $region66: #{fwd.1} parent=55 // pred_check_branch
          %375 = sbr.rel (%p373) target = $region68
        $region67: #{fwd.1} parent=55 // pred_region
          %377 = dma.done [#allocation5], 576
        $region68: #{fwd.1} parent=55 // pred_fallthru
          _
        // Predicated region
        $region69: #{fwd.1} parent=55 // pred_check
          %p378 = pneg %p171
        $region70: #{fwd.1} parent=55 // pred_check_branch
          %380 = sbr.rel (%p378) target = $region72
        $region71: #{fwd.1} parent=55 // pred_region
          %382 = dma.done [#allocation8], 288
        $region72: #{fwd.1} parent=55 // pred_fallthru
          _
        // Predicated region
        $region73: #{fwd.1} parent=55 // pred_check
          %p383 = pneg %p192
        $region74: #{fwd.1} parent=55 // pred_check_branch
          %385 = sbr.rel (%p383) target = $region76
        $region75: #{fwd.1} parent=55 // pred_region
          %387 = dma.done [#allocation8], 192
        $region76: #{fwd.1} parent=55 // pred_fallthru
          _
        // Predicated region
        $region77: #{fwd.1} parent=55 // pred_check
          %p388 = pneg %p213
        $region78: #{fwd.1} parent=55 // pred_check_branch
          %390 = sbr.rel (%p388) target = $region80
        $region79: #{fwd.1} parent=55 // pred_region
          %392 = dma.done [#allocation11], 2048
        $region80: #{fwd.1} parent=55 // pred_fallthru
          _
        %p393 = scmp.lt.s32.totalorder %s24, 1
        %s394 = scalar_select %p393, %s24, 1
        %s395 = smul.addr %s394, 32
        %s396 = smul.addr %s395, 4
        %s397 = scalar_lea.vmem %s0, %s396
        %p398 = pneg %p45
        %p399 = pneg %p42
        %p400 = pneg %p66
        %p401 = pneg %p63
        %p402 = pneg %p87
        %p403 = pneg %p84
        %p404 = pneg %p108
        %p405 = pneg %p105
        %p406 = pneg %p129
        %p407 = pneg %p126
        %p408 = pneg %p150
        %p409 = pneg %p147
        %p410 = pneg %p171
        %p411 = pneg %p168
        %p412 = pneg %p192
        %p413 = pneg %p189
        %p414 = pneg %p213
        %p415 = pneg %p210
        %p416 = pneg %p239
        %p417 = pneg %p236
        %p418 = scmp.lt.s32.totalorder %s24, 1
        %s419 = scalar_select %p418, %s24, 1
        %s420 = scalar_lea.vmem %s9, %s419
        %p421 = scmp.lt.s32.totalorder %s24, 1
        %s422 = scalar_select %p421, %s24, 1
        %s423 = smul.addr %s422, 32
        %s424 = smul.addr %s423, 4
        %s425 = scalar_lea.vmem %s0, %s424
        %p426 = scmp.lt.s32.totalorder %s24, 1
        %s427 = scalar_select %p426, %s24, 1
        %s428 = scalar_lea.vmem %s9, %s427
        %v430 = vld [vmem:[%s425] sm:$0xf]
        %v431 = vld [vmem:[%s425 + $0x4] sm:$0xf]
        %v432 = vld [vmem:[%s425 + $0x8] sm:$0xf]
        %v433 = vld [vmem:[%s425 + $0xc] sm:$0xf]
        %v434 = vld [vmem:[%s425 + $0x10] sm:$0xf]
        %v435 = vld [vmem:[%s425 + $0x14] sm:$0xf]
        %v436 = vld [vmem:[%s425 + $0x18] sm:$0xf]
        %v437 = vld [vmem:[%s425 + $0x1c] sm:$0xf]
        %v438 = vld [vmem:[%s425 + $0x20] sm:$0xf]
        %v439 = vld [vmem:[%s425 + $0x24] sm:$0xf]
        %v440 = vld [vmem:[%s425 + $0x28] sm:$0xf]
        %v441 = vld [vmem:[%s425 + $0x2c] sm:$0xf]
        %v442 = vld [vmem:[%s425 + $0x30] sm:$0xf]
        %v443 = vld [vmem:[%s425 + $0x34] sm:$0xf]
        %v444 = vld [vmem:[%s425 + $0x38] sm:$0xf]
        %v445 = vld [vmem:[%s425 + $0x3c] sm:$0xf]
        %v446 = vld [vmem:[%s425 + $0x40] sm:$0xf]
        %v447 = vld [vmem:[%s425 + $0x44] sm:$0xf]
        %v448 = vld [vmem:[%s425 + $0x48] sm:$0xf]
        %v449 = vld [vmem:[%s425 + $0x4c] sm:$0xf]
        %v450 = vld [vmem:[%s425 + $0x50] sm:$0xf]
        %v451 = vld [vmem:[%s425 + $0x54] sm:$0xf]
        %v452 = vld [vmem:[%s425 + $0x58] sm:$0xf]
        %v453 = vld [vmem:[%s425 + $0x5c] sm:$0xf]
        %v454 = vld [vmem:[%s425 + $0x60] sm:$0xf]
        %v455 = vld [vmem:[%s425 + $0x64] sm:$0xf]
        %v456 = vld [vmem:[%s425 + $0x68] sm:$0xf]
        %v457 = vld [vmem:[%s425 + $0x6c] sm:$0xf]
        %v458 = vld [vmem:[%s425 + $0x70] sm:$0xf]
        %v459 = vld [vmem:[%s425 + $0x74] sm:$0xf]
        %v460 = vld [vmem:[%s425 + $0x78] sm:$0xf]
        %v461 = vld [vmem:[%s425 + $0x7c] sm:$0xf]
        %v462 = vld [vmem:[#allocation2] sm:$0xff]
        %v463 = vld [vmem:[#allocation2 + $0x8] sm:$0xff]
        %v464 = vld [vmem:[#allocation2 + $0x10] sm:$0xff]
        %v465 = vld [vmem:[#allocation2 + $0x18] sm:$0xff]
        %v466 = vld [vmem:[#allocation2 + $0x20] sm:$0xff]
        %v467 = vld [vmem:[#allocation2 + $0x28] sm:$0xff]
        %v468 = vld [vmem:[#allocation2 + $0x30] sm:$0x11]
        %v476 = vunpack.c.l.b16 %v462
        %v477 = vunpack.c.h.b16 %v462
        %v478 = vunpack.c.l.b16 %v463
        %v479 = vunpack.c.h.b16 %v463
        %v480 = vunpack.c.l.b16 %v464
        %v481 = vunpack.c.h.b16 %v464
        %v482 = vunpack.c.l.b16 %v465
        %v483 = vunpack.c.h.b16 %v465
        %v484 = vunpack.c.l.b16 %v466
        %v485 = vunpack.c.h.b16 %v466
        %v486 = vunpack.c.l.b16 %v467
        %v487 = vunpack.c.h.b16 %v467
        %v488 = vunpack.c.l.b16 %v468
        %v489 = vunpack.c.h.b16 %v468
        %v490 = vpack.c.b16 %v478, %v476
        %v491 = vpack.c.b16 %v479, %v477
        %v492 = vpack.c.b16 %v482, %v480
        %v493 = vpack.c.b16 %v483, %v481
        %v494 = vpack.c.b16 %v486, %v484
        %v495 = vpack.c.b16 %v487, %v485
        %v496 = vpack.c.b16 %v488, %v488
        %v497 = vpack.c.b16 %v489, %v489
        %v538 = vunpack.c.l.b16 %v430
        %v539 = vunpack.c.l.b16 %v431
        %v540 = vunpack.c.l.b16 %v432
        %v541 = vunpack.c.l.b16 %v433
        %v542 = vunpack.c.l.b16 %v434
        %v543 = vunpack.c.l.b16 %v435
        %v544 = vunpack.c.l.b16 %v436
        %v545 = vunpack.c.l.b16 %v437
        %v546 = vunpack.c.l.b16 %v438
        %v547 = vunpack.c.l.b16 %v439
        %v548 = vunpack.c.l.b16 %v440
        %v549 = vunpack.c.l.b16 %v441
        %v550 = vunpack.c.l.b16 %v442
        %v551 = vunpack.c.l.b16 %v443
        %v552 = vunpack.c.l.b16 %v444
        %v553 = vunpack.c.l.b16 %v445
        %v554 = vunpack.c.l.b16 %v446
        %v555 = vunpack.c.l.b16 %v447
        %v556 = vunpack.c.l.b16 %v448
        %v557 = vunpack.c.l.b16 %v449
        %v558 = vunpack.c.l.b16 %v450
        %v559 = vunpack.c.l.b16 %v451
        %v560 = vunpack.c.l.b16 %v452
        %v561 = vunpack.c.l.b16 %v453
        %v562 = vunpack.c.l.b16 %v454
        %v563 = vunpack.c.l.b16 %v455
        %v564 = vunpack.c.l.b16 %v456
        %v565 = vunpack.c.l.b16 %v457
        %v566 = vunpack.c.l.b16 %v458
        %v567 = vunpack.c.l.b16 %v459
        %v568 = vunpack.c.l.b16 %v460
        %v569 = vunpack.c.l.b16 %v461
        %v570 = vpack.c.b16 %v539, %v538
        %v571 = vpack.c.b16 %v541, %v540
        %v572 = vpack.c.b16 %v543, %v542
        %v573 = vpack.c.b16 %v545, %v544
        %v574 = vpack.c.b16 %v547, %v546
        %v575 = vpack.c.b16 %v549, %v548
        %v576 = vpack.c.b16 %v551, %v550
        %v577 = vpack.c.b16 %v553, %v552
        %v578 = vpack.c.b16 %v555, %v554
        %v579 = vpack.c.b16 %v557, %v556
        %v580 = vpack.c.b16 %v559, %v558
        %v581 = vpack.c.b16 %v561, %v560
        %v582 = vpack.c.b16 %v563, %v562
        %v583 = vpack.c.b16 %v565, %v564
        %v584 = vpack.c.b16 %v567, %v566
        %v585 = vpack.c.b16 %v569, %v568
        %602 = vmatpush.bf16.msra.mxu0 %v577
        %603 = vmatpush.bf16.msra.mxu0 %v576
        %604 = vmatpush.bf16.msra.mxu0 %v575
        %605 = vmatpush.bf16.msra.mxu0 %v574
        %606 = vmatpush.bf16.msra.mxu0 %v573
        %607 = vmatpush.bf16.msra.mxu0 %v572
        %608 = vmatpush.bf16.msra.mxu0 %v571
        %609 = vmatpush.bf16.msra.mxu0 %v570
        %610 = vmatmul.bf16.gmra.mxu0 %v490
        %v611 = vpop.f32.mrf.mxu0
        %v612 = vadd.f32 0.0, %v611
        %v613 = vpop.f32.mrf.mxu0
        %v614 = vadd.f32 0.0, %v613
        %615 = vmatmul.bf16.gmra.mxu0 %v492
        %v616 = vpop.f32.mrf.mxu0
        %v617 = vadd.f32 0.0, %v616
        %v618 = vpop.f32.mrf.mxu0
        %v619 = vadd.f32 0.0, %v618
        %620 = vmatmul.bf16.gmra.mxu0 %v494
        %v621 = vpop.f32.mrf.mxu0
        %v622 = vadd.f32 0.0, %v621
        %v623 = vpop.f32.mrf.mxu0
        %v624 = vadd.f32 0.0, %v623
        %625 = vmatmul.bf16.gmra.mxu0 %v496
        %v626 = vpop.f32.mrf.mxu0
        %v627 = vadd.f32 0.0, %v626
        %v628 = vpop.f32.mrf.mxu0
        %629 = vdwg.mxu0
        %630 = vmatpush.bf16.msra.mxu0 %v585
        %631 = vmatpush.bf16.msra.mxu0 %v584
        %632 = vmatpush.bf16.msra.mxu0 %v583
        %633 = vmatpush.bf16.msra.mxu0 %v582
        %634 = vmatpush.bf16.msra.mxu0 %v581
        %635 = vmatpush.bf16.msra.mxu0 %v580
        %636 = vmatpush.bf16.msra.mxu0 %v579
        %637 = vmatpush.bf16.msra.mxu0 %v578
        %638 = vmatmul.bf16.gmra.mxu0 %v491
        %v639 = vpop.f32.mrf.mxu0
        %v640 = vadd.f32 %v612, %v639
        %v641 = vpop.f32.mrf.mxu0
        %v642 = vadd.f32 %v614, %v641
        %643 = vmatmul.bf16.gmra.mxu0 %v493
        %v644 = vpop.f32.mrf.mxu0
        %v645 = vadd.f32 %v617, %v644
        %v646 = vpop.f32.mrf.mxu0
        %v647 = vadd.f32 %v619, %v646
        %648 = vmatmul.bf16.gmra.mxu0 %v495
        %v649 = vpop.f32.mrf.mxu0
        %v650 = vadd.f32 %v622, %v649
        %v651 = vpop.f32.mrf.mxu0
        %v652 = vadd.f32 %v624, %v651
        %653 = vmatmul.bf16.gmra.mxu0 %v497
        %v654 = vpop.f32.mrf.mxu0
        %v655 = vadd.f32 %v627, %v654
        %v656 = vpop.f32.mrf.mxu0
        %657 = vdwg.mxu0
        %v658 = vpack.c.bf16 %v642, %v640
        %v659 = vpack.c.bf16 %v647, %v645
        %v660 = vpack.c.bf16 %v652, %v650
        %v661 = vpack.c.bf16 %v655, %v655
        %v662 = vld [vmem:[#allocation6] sm:$0xf]
        %s663 = scalar_lea.vmem [#allocation2], 56
        %v664 = vld [vmem:[%s663] sm:$0xff]
        %v665 = vld [vmem:[%s663 + $0x8] sm:$0xff]
        %v666 = vld [vmem:[%s663 + $0x10] sm:$0xff]
        %v667 = vld [vmem:[%s663 + $0x18] sm:$0xff]
        %v668 = vld [vmem:[%s663 + $0x20] sm:$0xff]
        %v669 = vld [vmem:[%s663 + $0x28] sm:$0xff]
        %v670 = vld [vmem:[%s663 + $0x30] sm:$0x11]
        %v678 = vunpack.c.l.b16 %v664
        %v679 = vunpack.c.h.b16 %v664
        %v680 = vunpack.c.l.b16 %v665
        %v681 = vunpack.c.h.b16 %v665
        %v682 = vunpack.c.l.b16 %v666
        %v683 = vunpack.c.h.b16 %v666
        %v684 = vunpack.c.l.b16 %v667
        %v685 = vunpack.c.h.b16 %v667
        %v686 = vunpack.c.l.b16 %v668
        %v687 = vunpack.c.h.b16 %v668
        %v688 = vunpack.c.l.b16 %v669
        %v689 = vunpack.c.h.b16 %v669
        %v690 = vunpack.c.l.b16 %v670
        %v691 = vunpack.c.h.b16 %v670
        %v692 = vpack.c.b16 %v680, %v678
        %v693 = vpack.c.b16 %v681, %v679
        %v694 = vpack.c.b16 %v684, %v682
        %v695 = vpack.c.b16 %v685, %v683
        %v696 = vpack.c.b16 %v688, %v686
        %v697 = vpack.c.b16 %v689, %v687
        %v698 = vpack.c.b16 %v690, %v690
        %v699 = vpack.c.b16 %v691, %v691
        %708 = vmatpush.bf16.msra.mxu0 %v577
        %709 = vmatpush.bf16.msra.mxu0 %v576
        %710 = vmatpush.bf16.msra.mxu0 %v575
        %711 = vmatpush.bf16.msra.mxu0 %v574
        %712 = vmatpush.bf16.msra.mxu0 %v573
        %713 = vmatpush.bf16.msra.mxu0 %v572
        %714 = vmatpush.bf16.msra.mxu0 %v571
        %715 = vmatpush.bf16.msra.mxu0 %v570
        %716 = vmatmul.bf16.gmra.mxu0 %v692
        %v717 = vpop.f32.mrf.mxu0
        %v718 = vadd.f32 0.0, %v717
        %v719 = vpop.f32.mrf.mxu0
        %v720 = vadd.f32 0.0, %v719
        %721 = vmatmul.bf16.gmra.mxu0 %v694
        %v722 = vpop.f32.mrf.mxu0
        %v723 = vadd.f32 0.0, %v722
        %v724 = vpop.f32.mrf.mxu0
        %v725 = vadd.f32 0.0, %v724
        %726 = vmatmul.bf16.gmra.mxu0 %v696
        %v727 = vpop.f32.mrf.mxu0
        %v728 = vadd.f32 0.0, %v727
        %v729 = vpop.f32.mrf.mxu0
        %v730 = vadd.f32 0.0, %v729
        %731 = vmatmul.bf16.gmra.mxu0 %v698
        %v732 = vpop.f32.mrf.mxu0
        %v733 = vadd.f32 0.0, %v732
        %v734 = vpop.f32.mrf.mxu0
        %735 = vdwg.mxu0
        %736 = vmatpush.bf16.msra.mxu0 %v585
        %737 = vmatpush.bf16.msra.mxu0 %v584
        %738 = vmatpush.bf16.msra.mxu0 %v583
        %739 = vmatpush.bf16.msra.mxu0 %v582
        %740 = vmatpush.bf16.msra.mxu0 %v581
        %741 = vmatpush.bf16.msra.mxu0 %v580
        %742 = vmatpush.bf16.msra.mxu0 %v579
        %743 = vmatpush.bf16.msra.mxu0 %v578
        %744 = vmatmul.bf16.gmra.mxu0 %v693
        %v745 = vpop.f32.mrf.mxu0
        %v746 = vadd.f32 %v718, %v745
        %v747 = vpop.f32.mrf.mxu0
        %v748 = vadd.f32 %v720, %v747
        %749 = vmatmul.bf16.gmra.mxu0 %v695
        %v750 = vpop.f32.mrf.mxu0
        %v751 = vadd.f32 %v723, %v750
        %v752 = vpop.f32.mrf.mxu0
        %v753 = vadd.f32 %v725, %v752
        %754 = vmatmul.bf16.gmra.mxu0 %v697
        %v755 = vpop.f32.mrf.mxu0
        %v756 = vadd.f32 %v728, %v755
        %v757 = vpop.f32.mrf.mxu0
        %v758 = vadd.f32 %v730, %v757
        %759 = vmatmul.bf16.gmra.mxu0 %v699
        %v760 = vpop.f32.mrf.mxu0
        %v761 = vadd.f32 %v733, %v760
        %v762 = vpop.f32.mrf.mxu0
        %763 = vdwg.mxu0
        %v764 = vpack.c.bf16 %v748, %v746
        %v765 = vpack.c.bf16 %v753, %v751
        %v766 = vpack.c.bf16 %v758, %v756
        %v767 = vpack.c.bf16 %v761, %v761
        %s768 = scalar_lea.vmem [#allocation6], 4
        %v769 = vld [vmem:[%s768] sm:$0xf]
        %vm770 = vcmask 64512
        %v772 = vsel %vm770, %v764, 0
        %v775 = vsel %vm770, %v765, 0
        %v778 = vsel %vm770, %v766, 0
        %v781 = vsel %vm770, %v767, 0
        %vm783 = vcmask 1043456
        %v785 = vsel %vm783, %v769, 0
        %787 = vmatpush.bf16.msra.mxu0 0
        %788 = vmatpush.bf16.msra.mxu0 0
        %789 = vmatpush.bf16.msra.mxu0 0
        %790 = vmatpush.bf16.msra.mxu0 0
        %791 = vmatpush.bf16.msra.mxu0 0
        %792 = vmatpush.bf16.msra.mxu0 0
        %793 = vmatpush.bf16.msra.mxu0 0
        %794 = vmatpush.bf16.msra.mxu0 %v785
        %795 = vmatmul.bf16.gmra.mxu0 %v772
        %v796 = vpop.f32.mrf.mxu0
        %v797 = vadd.f32 0.0, %v796
        %v798 = vpop.f32.mrf.mxu0
        %v799 = vadd.f32 0.0, %v798
        %800 = vmatmul.bf16.gmra.mxu0 %v775
        %v801 = vpop.f32.mrf.mxu0
        %v802 = vadd.f32 0.0, %v801
        %v803 = vpop.f32.mrf.mxu0
        %v804 = vadd.f32 0.0, %v803
        %805 = vmatmul.bf16.gmra.mxu0 %v778
        %v806 = vpop.f32.mrf.mxu0
        %v807 = vadd.f32 0.0, %v806
        %v808 = vpop.f32.mrf.mxu0
        %v809 = vadd.f32 0.0, %v808
        %810 = vmatmul.bf16.gmra.mxu0 %v781
        %v811 = vpop.f32.mrf.mxu0
        %v812 = vadd.f32 0.0, %v811
        %v813 = vpop.f32.mrf.mxu0
        %814 = vdwg.mxu0
        %v816 = vsel %vm770, %v658, 0
        %v819 = vsel %vm770, %v659, 0
        %v822 = vsel %vm770, %v660, 0
        %v825 = vsel %vm770, %v661, 0
        %v828 = vsel %vm783, %v662, 0
        %830 = vmatpush.bf16.msra.mxu0 0
        %831 = vmatpush.bf16.msra.mxu0 0
        %832 = vmatpush.bf16.msra.mxu0 0
        %833 = vmatpush.bf16.msra.mxu0 0
        %834 = vmatpush.bf16.msra.mxu0 0
        %835 = vmatpush.bf16.msra.mxu0 0
        %836 = vmatpush.bf16.msra.mxu0 0
        %837 = vmatpush.bf16.msra.mxu0 %v828
        %838 = vmatmul.bf16.gmra.mxu0 %v816
        %v839 = vpop.f32.mrf.mxu0
        %v840 = vadd.f32 %v797, %v839
        %v841 = vpop.f32.mrf.mxu0
        %v842 = vadd.f32 %v799, %v841
        %843 = vmatmul.bf16.gmra.mxu0 %v819
        %v844 = vpop.f32.mrf.mxu0
        %v845 = vadd.f32 %v802, %v844
        %v846 = vpop.f32.mrf.mxu0
        %v847 = vadd.f32 %v804, %v846
        %848 = vmatmul.bf16.gmra.mxu0 %v822
        %v849 = vpop.f32.mrf.mxu0
        %v850 = vadd.f32 %v807, %v849
        %v851 = vpop.f32.mrf.mxu0
        %v852 = vadd.f32 %v809, %v851
        %853 = vmatmul.bf16.gmra.mxu0 %v825
        %v854 = vpop.f32.mrf.mxu0
        %v855 = vadd.f32 %v812, %v854
        %v856 = vpop.f32.mrf.mxu0
        %857 = vdwg.mxu0
        %s858 = scalar_lea.vmem [#allocation2], 112
        %v859 = vld [vmem:[%s858] sm:$0xff]
        %v860 = vld [vmem:[%s858 + $0x8] sm:$0xff]
        %v861 = vld [vmem:[%s858 + $0x10] sm:$0xff]
        %v862 = vld [vmem:[%s858 + $0x18] sm:$0xff]
        %v863 = vld [vmem:[%s858 + $0x20] sm:$0xff]
        %v864 = vld [vmem:[%s858 + $0x28] sm:$0xff]
        %v865 = vld [vmem:[%s858 + $0x30] sm:$0x11]
        %v873 = vunpack.c.l.b16 %v859
        %v874 = vunpack.c.h.b16 %v859
        %v875 = vunpack.c.l.b16 %v860
        %v876 = vunpack.c.h.b16 %v860
        %v877 = vunpack.c.l.b16 %v861
        %v878 = vunpack.c.h.b16 %v861
        %v879 = vunpack.c.l.b16 %v862
        %v880 = vunpack.c.h.b16 %v862
        %v881 = vunpack.c.l.b16 %v863
        %v882 = vunpack.c.h.b16 %v863
        %v883 = vunpack.c.l.b16 %v864
        %v884 = vunpack.c.h.b16 %v864
        %v885 = vunpack.c.l.b16 %v865
        %v886 = vunpack.c.h.b16 %v865
        %v887 = vpack.c.b16 %v875, %v873
        %v888 = vpack.c.b16 %v876, %v874
        %v889 = vpack.c.b16 %v879, %v877
        %v890 = vpack.c.b16 %v880, %v878
        %v891 = vpack.c.b16 %v883, %v881
        %v892 = vpack.c.b16 %v884, %v882
        %v893 = vpack.c.b16 %v885, %v885
        %v894 = vpack.c.b16 %v886, %v886
        %903 = vmatpush.bf16.msra.mxu0 %v577
        %904 = vmatpush.bf16.msra.mxu0 %v576
        %905 = vmatpush.bf16.msra.mxu0 %v575
        %906 = vmatpush.bf16.msra.mxu0 %v574
        %907 = vmatpush.bf16.msra.mxu0 %v573
        %908 = vmatpush.bf16.msra.mxu0 %v572
        %909 = vmatpush.bf16.msra.mxu0 %v571
        %910 = vmatpush.bf16.msra.mxu0 %v570
        %911 = vmatmul.bf16.gmra.mxu0 %v887
        %v912 = vpop.f32.mrf.mxu0
        %v913 = vadd.f32 0.0, %v912
        %v914 = vpop.f32.mrf.mxu0
        %v915 = vadd.f32 0.0, %v914
        %916 = vmatmul.bf16.gmra.mxu0 %v889
        %v917 = vpop.f32.mrf.mxu0
        %v918 = vadd.f32 0.0, %v917
        %v919 = vpop.f32.mrf.mxu0
        %v920 = vadd.f32 0.0, %v919
        %921 = vmatmul.bf16.gmra.mxu0 %v891
        %v922 = vpop.f32.mrf.mxu0
        %v923 = vadd.f32 0.0, %v922
        %v924 = vpop.f32.mrf.mxu0
        %v925 = vadd.f32 0.0, %v924
        %926 = vmatmul.bf16.gmra.mxu0 %v893
        %v927 = vpop.f32.mrf.mxu0
        %v928 = vadd.f32 0.0, %v927
        %v929 = vpop.f32.mrf.mxu0
        %930 = vdwg.mxu0
        %931 = vmatpush.bf16.msra.mxu0 %v585
        %932 = vmatpush.bf16.msra.mxu0 %v584
        %933 = vmatpush.bf16.msra.mxu0 %v583
        %934 = vmatpush.bf16.msra.mxu0 %v582
        %935 = vmatpush.bf16.msra.mxu0 %v581
        %936 = vmatpush.bf16.msra.mxu0 %v580
        %937 = vmatpush.bf16.msra.mxu0 %v579
        %938 = vmatpush.bf16.msra.mxu0 %v578
        %939 = vmatmul.bf16.gmra.mxu0 %v888
        %v940 = vpop.f32.mrf.mxu0
        %v941 = vadd.f32 %v913, %v940
        %v942 = vpop.f32.mrf.mxu0
        %v943 = vadd.f32 %v915, %v942
        %944 = vmatmul.bf16.gmra.mxu0 %v890
        %v945 = vpop.f32.mrf.mxu0
        %v946 = vadd.f32 %v918, %v945
        %v947 = vpop.f32.mrf.mxu0
        %v948 = vadd.f32 %v920, %v947
        %949 = vmatmul.bf16.gmra.mxu0 %v892
        %v950 = vpop.f32.mrf.mxu0
        %v951 = vadd.f32 %v923, %v950
        %v952 = vpop.f32.mrf.mxu0
        %v953 = vadd.f32 %v925, %v952
        %954 = vmatmul.bf16.gmra.mxu0 %v894
        %v955 = vpop.f32.mrf.mxu0
        %v956 = vadd.f32 %v928, %v955
        %v957 = vpop.f32.mrf.mxu0
        %958 = vdwg.mxu0
        %v959 = vpack.c.bf16 %v943, %v941
        %v960 = vpack.c.bf16 %v948, %v946
        %v961 = vpack.c.bf16 %v953, %v951
        %v962 = vpack.c.bf16 %v956, %v956
        %s963 = scalar_lea.vmem [#allocation6], 8
        %v964 = vld [vmem:[%s963] sm:$0xf]
        %v966 = vsel %vm770, %v959, 0
        %v969 = vsel %vm770, %v960, 0
        %v972 = vsel %vm770, %v961, 0
        %v975 = vsel %vm770, %v962, 0
        %v978 = vsel %vm783, %v964, 0
        %980 = vmatpush.bf16.msra.mxu0 0
        %981 = vmatpush.bf16.msra.mxu0 0
        %982 = vmatpush.bf16.msra.mxu0 0
        %983 = vmatpush.bf16.msra.mxu0 0
        %984 = vmatpush.bf16.msra.mxu0 0
        %985 = vmatpush.bf16.msra.mxu0 0
        %986 = vmatpush.bf16.msra.mxu0 0
        %987 = vmatpush.bf16.msra.mxu0 %v978
        %988 = vmatmul.bf16.gmra.mxu0 %v966
        %v989 = vpop.f32.mrf.mxu0
        %v990 = vadd.f32 0.0, %v989
        %v991 = vpop.f32.mrf.mxu0
        %v992 = vadd.f32 0.0, %v991
        %993 = vmatmul.bf16.gmra.mxu0 %v969
        %v994 = vpop.f32.mrf.mxu0
        %v995 = vadd.f32 0.0, %v994
        %v996 = vpop.f32.mrf.mxu0
        %v997 = vadd.f32 0.0, %v996
        %998 = vmatmul.bf16.gmra.mxu0 %v972
        %v999 = vpop.f32.mrf.mxu0
        %v1000 = vadd.f32 0.0, %v999
        %v1001 = vpop.f32.mrf.mxu0
        %v1002 = vadd.f32 0.0, %v1001
        %1003 = vmatmul.bf16.gmra.mxu0 %v975
        %v1004 = vpop.f32.mrf.mxu0
        %v1005 = vadd.f32 0.0, %v1004
        %v1006 = vpop.f32.mrf.mxu0
        %1007 = vdwg.mxu0
        %v1008 = vadd.f32 %v840, %v990
        %v1009 = vadd.f32 %v842, %v992
        %v1010 = vadd.f32 %v845, %v995
        %v1011 = vadd.f32 %v847, %v997
        %v1012 = vadd.f32 %v850, %v1000
        %v1013 = vadd.f32 %v852, %v1002
        %v1014 = vadd.f32 %v855, %v1005
        %s1015 = scalar_lea.vmem [#allocation2], 168
        %v1016 = vld [vmem:[%s1015] sm:$0xff]
        %v1017 = vld [vmem:[%s1015 + $0x8] sm:$0xff]
        %v1018 = vld [vmem:[%s1015 + $0x10] sm:$0xff]
        %v1019 = vld [vmem:[%s1015 + $0x18] sm:$0xff]
        %v1020 = vld [vmem:[%s1015 + $0x20] sm:$0xff]
        %v1021 = vld [vmem:[%s1015 + $0x28] sm:$0xff]
        %v1022 = vld [vmem:[%s1015 + $0x30] sm:$0x11]
        %v1030 = vunpack.c.l.b16 %v1016
        %v1031 = vunpack.c.h.b16 %v1016
        %v1032 = vunpack.c.l.b16 %v1017
        %v1033 = vunpack.c.h.b16 %v1017
        %v1034 = vunpack.c.l.b16 %v1018
        %v1035 = vunpack.c.h.b16 %v1018
        %v1036 = vunpack.c.l.b16 %v1019
        %v1037 = vunpack.c.h.b16 %v1019
        %v1038 = vunpack.c.l.b16 %v1020
        %v1039 = vunpack.c.h.b16 %v1020
        %v1040 = vunpack.c.l.b16 %v1021
        %v1041 = vunpack.c.h.b16 %v1021
        %v1042 = vunpack.c.l.b16 %v1022
        %v1043 = vunpack.c.h.b16 %v1022
        %v1044 = vpack.c.b16 %v1032, %v1030
        %v1045 = vpack.c.b16 %v1033, %v1031
        %v1046 = vpack.c.b16 %v1036, %v1034
        %v1047 = vpack.c.b16 %v1037, %v1035
        %v1048 = vpack.c.b16 %v1040, %v1038
        %v1049 = vpack.c.b16 %v1041, %v1039
        %v1050 = vpack.c.b16 %v1042, %v1042
        %v1051 = vpack.c.b16 %v1043, %v1043
        %1060 = vmatpush.bf16.msra.mxu0 %v577
        %1061 = vmatpush.bf16.msra.mxu0 %v576
        %1062 = vmatpush.bf16.msra.mxu0 %v575
        %1063 = vmatpush.bf16.msra.mxu0 %v574
        %1064 = vmatpush.bf16.msra.mxu0 %v573
        %1065 = vmatpush.bf16.msra.mxu0 %v572
        %1066 = vmatpush.bf16.msra.mxu0 %v571
        %1067 = vmatpush.bf16.msra.mxu0 %v570
        %1068 = vmatmul.bf16.gmra.mxu0 %v1044
        %v1069 = vpop.f32.mrf.mxu0
        %v1070 = vadd.f32 0.0, %v1069
        %v1071 = vpop.f32.mrf.mxu0
        %v1072 = vadd.f32 0.0, %v1071
        %1073 = vmatmul.bf16.gmra.mxu0 %v1046
        %v1074 = vpop.f32.mrf.mxu0
        %v1075 = vadd.f32 0.0, %v1074
        %v1076 = vpop.f32.mrf.mxu0
        %v1077 = vadd.f32 0.0, %v1076
        %1078 = vmatmul.bf16.gmra.mxu0 %v1048
        %v1079 = vpop.f32.mrf.mxu0
        %v1080 = vadd.f32 0.0, %v1079
        %v1081 = vpop.f32.mrf.mxu0
        %v1082 = vadd.f32 0.0, %v1081
        %1083 = vmatmul.bf16.gmra.mxu0 %v1050
        %v1084 = vpop.f32.mrf.mxu0
        %v1085 = vadd.f32 0.0, %v1084
        %v1086 = vpop.f32.mrf.mxu0
        %1087 = vdwg.mxu0
        %1088 = vmatpush.bf16.msra.mxu0 %v585
        %1089 = vmatpush.bf16.msra.mxu0 %v584
        %1090 = vmatpush.bf16.msra.mxu0 %v583
        %1091 = vmatpush.bf16.msra.mxu0 %v582
        %1092 = vmatpush.bf16.msra.mxu0 %v581
        %1093 = vmatpush.bf16.msra.mxu0 %v580
        %1094 = vmatpush.bf16.msra.mxu0 %v579
        %1095 = vmatpush.bf16.msra.mxu0 %v578
        %1096 = vmatmul.bf16.gmra.mxu0 %v1045
        %v1097 = vpop.f32.mrf.mxu0
        %v1098 = vadd.f32 %v1070, %v1097
        %v1099 = vpop.f32.mrf.mxu0
        %v1100 = vadd.f32 %v1072, %v1099
        %1101 = vmatmul.bf16.gmra.mxu0 %v1047
        %v1102 = vpop.f32.mrf.mxu0
        %v1103 = vadd.f32 %v1075, %v1102
        %v1104 = vpop.f32.mrf.mxu0
        %v1105 = vadd.f32 %v1077, %v1104
        %1106 = vmatmul.bf16.gmra.mxu0 %v1049
        %v1107 = vpop.f32.mrf.mxu0
        %v1108 = vadd.f32 %v1080, %v1107
        %v1109 = vpop.f32.mrf.mxu0
        %v1110 = vadd.f32 %v1082, %v1109
        %1111 = vmatmul.bf16.gmra.mxu0 %v1051
        %v1112 = vpop.f32.mrf.mxu0
        %v1113 = vadd.f32 %v1085, %v1112
        %v1114 = vpop.f32.mrf.mxu0
        %1115 = vdwg.mxu0
        %v1116 = vpack.c.bf16 %v1100, %v1098
        %v1117 = vpack.c.bf16 %v1105, %v1103
        %v1118 = vpack.c.bf16 %v1110, %v1108
        %v1119 = vpack.c.bf16 %v1113, %v1113
        %s1120 = scalar_lea.vmem [#allocation6], 12
        %v1121 = vld [vmem:[%s1120] sm:$0xf]
        %v1123 = vsel %vm770, %v1116, 0
        %v1126 = vsel %vm770, %v1117, 0
        %v1129 = vsel %vm770, %v1118, 0
        %v1132 = vsel %vm770, %v1119, 0
        %v1135 = vsel %vm783, %v1121, 0
        %1137 = vmatpush.bf16.msra.mxu0 0
        %1138 = vmatpush.bf16.msra.mxu0 0
        %1139 = vmatpush.bf16.msra.mxu0 0
        %1140 = vmatpush.bf16.msra.mxu0 0
        %1141 = vmatpush.bf16.msra.mxu0 0
        %1142 = vmatpush.bf16.msra.mxu0 0
        %1143 = vmatpush.bf16.msra.mxu0 0
        %1144 = vmatpush.bf16.msra.mxu0 %v1135
        %1145 = vmatmul.bf16.gmra.mxu0 %v1123
        %v1146 = vpop.f32.mrf.mxu0
        %v1147 = vadd.f32 0.0, %v1146
        %v1148 = vpop.f32.mrf.mxu0
        %v1149 = vadd.f32 0.0, %v1148
        %1150 = vmatmul.bf16.gmra.mxu0 %v1126
        %v1151 = vpop.f32.mrf.mxu0
        %v1152 = vadd.f32 0.0, %v1151
        %v1153 = vpop.f32.mrf.mxu0
        %v1154 = vadd.f32 0.0, %v1153
        %1155 = vmatmul.bf16.gmra.mxu0 %v1129
        %v1156 = vpop.f32.mrf.mxu0
        %v1157 = vadd.f32 0.0, %v1156
        %v1158 = vpop.f32.mrf.mxu0
        %v1159 = vadd.f32 0.0, %v1158
        %1160 = vmatmul.bf16.gmra.mxu0 %v1132
        %v1161 = vpop.f32.mrf.mxu0
        %v1162 = vadd.f32 0.0, %v1161
        %v1163 = vpop.f32.mrf.mxu0
        %1164 = vdwg.mxu0
        %v1165 = vadd.f32 %v1008, %v1147
        %v1166 = vadd.f32 %v1009, %v1149
        %v1167 = vadd.f32 %v1010, %v1152
        %v1168 = vadd.f32 %v1011, %v1154
        %v1169 = vadd.f32 %v1012, %v1157
        %v1170 = vadd.f32 %v1013, %v1159
        %v1171 = vadd.f32 %v1014, %v1162
        %s1172 = scalar_lea.vmem [#allocation2], 224
        %v1173 = vld [vmem:[%s1172] sm:$0xff]
        %v1174 = vld [vmem:[%s1172 + $0x8] sm:$0xff]
        %v1175 = vld [vmem:[%s1172 + $0x10] sm:$0xff]
        %v1176 = vld [vmem:[%s1172 + $0x18] sm:$0xff]
        %v1177 = vld [vmem:[%s1172 + $0x20] sm:$0xff]
        %v1178 = vld [vmem:[%s1172 + $0x28] sm:$0xff]
        %v1179 = vld [vmem:[%s1172 + $0x30] sm:$0x11]
        %v1187 = vunpack.c.l.b16 %v1173
        %v1188 = vunpack.c.h.b16 %v1173
        %v1189 = vunpack.c.l.b16 %v1174
        %v1190 = vunpack.c.h.b16 %v1174
        %v1191 = vunpack.c.l.b16 %v1175
        %v1192 = vunpack.c.h.b16 %v1175
        %v1193 = vunpack.c.l.b16 %v1176
        %v1194 = vunpack.c.h.b16 %v1176
        %v1195 = vunpack.c.l.b16 %v1177
        %v1196 = vunpack.c.h.b16 %v1177
        %v1197 = vunpack.c.l.b16 %v1178
        %v1198 = vunpack.c.h.b16 %v1178
        %v1199 = vunpack.c.l.b16 %v1179
        %v1200 = vunpack.c.h.b16 %v1179
        %v1201 = vpack.c.b16 %v1189, %v1187
        %v1202 = vpack.c.b16 %v1190, %v1188
        %v1203 = vpack.c.b16 %v1193, %v1191
        %v1204 = vpack.c.b16 %v1194, %v1192
        %v1205 = vpack.c.b16 %v1197, %v1195
        %v1206 = vpack.c.b16 %v1198, %v1196
        %v1207 = vpack.c.b16 %v1199, %v1199
        %v1208 = vpack.c.b16 %v1200, %v1200
        %1217 = vmatpush.bf16.msra.mxu0 %v577
        %1218 = vmatpush.bf16.msra.mxu0 %v576
        %1219 = vmatpush.bf16.msra.mxu0 %v575
        %1220 = vmatpush.bf16.msra.mxu0 %v574
        %1221 = vmatpush.bf16.msra.mxu0 %v573
        %1222 = vmatpush.bf16.msra.mxu0 %v572
        %1223 = vmatpush.bf16.msra.mxu0 %v571
        %1224 = vmatpush.bf16.msra.mxu0 %v570
        %1225 = vmatmul.bf16.gmra.mxu0 %v1201
        %v1226 = vpop.f32.mrf.mxu0
        %v1227 = vadd.f32 0.0, %v1226
        %v1228 = vpop.f32.mrf.mxu0
        %v1229 = vadd.f32 0.0, %v1228
        %1230 = vmatmul.bf16.gmra.mxu0 %v1203
        %v1231 = vpop.f32.mrf.mxu0
        %v1232 = vadd.f32 0.0, %v1231
        %v1233 = vpop.f32.mrf.mxu0
        %v1234 = vadd.f32 0.0, %v1233
        %1235 = vmatmul.bf16.gmra.mxu0 %v1205
        %v1236 = vpop.f32.mrf.mxu0
        %v1237 = vadd.f32 0.0, %v1236
        %v1238 = vpop.f32.mrf.mxu0
        %v1239 = vadd.f32 0.0, %v1238
        %1240 = vmatmul.bf16.gmra.mxu0 %v1207
        %v1241 = vpop.f32.mrf.mxu0
        %v1242 = vadd.f32 0.0, %v1241
        %v1243 = vpop.f32.mrf.mxu0
        %1244 = vdwg.mxu0
        %1245 = vmatpush.bf16.msra.mxu0 %v585
        %1246 = vmatpush.bf16.msra.mxu0 %v584
        %1247 = vmatpush.bf16.msra.mxu0 %v583
        %1248 = vmatpush.bf16.msra.mxu0 %v582
        %1249 = vmatpush.bf16.msra.mxu0 %v581
        %1250 = vmatpush.bf16.msra.mxu0 %v580
        %1251 = vmatpush.bf16.msra.mxu0 %v579
        %1252 = vmatpush.bf16.msra.mxu0 %v578
        %1253 = vmatmul.bf16.gmra.mxu0 %v1202
        %v1254 = vpop.f32.mrf.mxu0
        %v1255 = vadd.f32 %v1227, %v1254
        %v1256 = vpop.f32.mrf.mxu0
        %v1257 = vadd.f32 %v1229, %v1256
        %1258 = vmatmul.bf16.gmra.mxu0 %v1204
        %v1259 = vpop.f32.mrf.mxu0
        %v1260 = vadd.f32 %v1232, %v1259
        %v1261 = vpop.f32.mrf.mxu0
        %v1262 = vadd.f32 %v1234, %v1261
        %1263 = vmatmul.bf16.gmra.mxu0 %v1206
        %v1264 = vpop.f32.mrf.mxu0
        %v1265 = vadd.f32 %v1237, %v1264
        %v1266 = vpop.f32.mrf.mxu0
        %v1267 = vadd.f32 %v1239, %v1266
        %1268 = vmatmul.bf16.gmra.mxu0 %v1208
        %v1269 = vpop.f32.mrf.mxu0
        %v1270 = vadd.f32 %v1242, %v1269
        %v1271 = vpop.f32.mrf.mxu0
        %1272 = vdwg.mxu0
        %v1273 = vpack.c.bf16 %v1257, %v1255
        %v1274 = vpack.c.bf16 %v1262, %v1260
        %v1275 = vpack.c.bf16 %v1267, %v1265
        %v1276 = vpack.c.bf16 %v1270, %v1270
        %s1277 = scalar_lea.vmem [#allocation6], 16
        %v1278 = vld [vmem:[%s1277] sm:$0xf]
        %v1280 = vsel %vm770, %v1273, 0
        %v1283 = vsel %vm770, %v1274, 0
        %v1286 = vsel %vm770, %v1275, 0
        %v1289 = vsel %vm770, %v1276, 0
        %v1292 = vsel %vm783, %v1278, 0
        %1294 = vmatpush.bf16.msra.mxu0 0
        %1295 = vmatpush.bf16.msra.mxu0 0
        %1296 = vmatpush.bf16.msra.mxu0 0
        %1297 = vmatpush.bf16.msra.mxu0 0
        %1298 = vmatpush.bf16.msra.mxu0 0
        %1299 = vmatpush.bf16.msra.mxu0 0
        %1300 = vmatpush.bf16.msra.mxu0 0
        %1301 = vmatpush.bf16.msra.mxu0 %v1292
        %1302 = vmatmul.bf16.gmra.mxu0 %v1280
        %v1303 = vpop.f32.mrf.mxu0
        %v1304 = vadd.f32 0.0, %v1303
        %v1305 = vpop.f32.mrf.mxu0
        %v1306 = vadd.f32 0.0, %v1305
        %1307 = vmatmul.bf16.gmra.mxu0 %v1283
        %v1308 = vpop.f32.mrf.mxu0
        %v1309 = vadd.f32 0.0, %v1308
        %v1310 = vpop.f32.mrf.mxu0
        %v1311 = vadd.f32 0.0, %v1310
        %1312 = vmatmul.bf16.gmra.mxu0 %v1286
        %v1313 = vpop.f32.mrf.mxu0
        %v1314 = vadd.f32 0.0, %v1313
        %v1315 = vpop.f32.mrf.mxu0
        %v1316 = vadd.f32 0.0, %v1315
        %1317 = vmatmul.bf16.gmra.mxu0 %v1289
        %v1318 = vpop.f32.mrf.mxu0
        %v1319 = vadd.f32 0.0, %v1318
        %v1320 = vpop.f32.mrf.mxu0
        %1321 = vdwg.mxu0
        %v1322 = vadd.f32 %v1165, %v1304
        %v1323 = vadd.f32 %v1166, %v1306
        %v1324 = vadd.f32 %v1167, %v1309
        %v1325 = vadd.f32 %v1168, %v1311
        %v1326 = vadd.f32 %v1169, %v1314
        %v1327 = vadd.f32 %v1170, %v1316
        %v1328 = vadd.f32 %v1171, %v1319
        %s1329 = scalar_lea.vmem [#allocation2], 280
        %v1330 = vld [vmem:[%s1329] sm:$0xff]
        %v1331 = vld [vmem:[%s1329 + $0x8] sm:$0xff]
        %v1332 = vld [vmem:[%s1329 + $0x10] sm:$0xff]
        %v1333 = vld [vmem:[%s1329 + $0x18] sm:$0xff]
        %v1334 = vld [vmem:[%s1329 + $0x20] sm:$0xff]
        %v1335 = vld [vmem:[%s1329 + $0x28] sm:$0xff]
        %v1336 = vld [vmem:[%s1329 + $0x30] sm:$0x11]
        %v1344 = vunpack.c.l.b16 %v1330
        %v1345 = vunpack.c.h.b16 %v1330
        %v1346 = vunpack.c.l.b16 %v1331
        %v1347 = vunpack.c.h.b16 %v1331
        %v1348 = vunpack.c.l.b16 %v1332
        %v1349 = vunpack.c.h.b16 %v1332
        %v1350 = vunpack.c.l.b16 %v1333
        %v1351 = vunpack.c.h.b16 %v1333
        %v1352 = vunpack.c.l.b16 %v1334
        %v1353 = vunpack.c.h.b16 %v1334
        %v1354 = vunpack.c.l.b16 %v1335
        %v1355 = vunpack.c.h.b16 %v1335
        %v1356 = vunpack.c.l.b16 %v1336
        %v1357 = vunpack.c.h.b16 %v1336
        %v1358 = vpack.c.b16 %v1346, %v1344
        %v1359 = vpack.c.b16 %v1347, %v1345
        %v1360 = vpack.c.b16 %v1350, %v1348
        %v1361 = vpack.c.b16 %v1351, %v1349
        %v1362 = vpack.c.b16 %v1354, %v1352
        %v1363 = vpack.c.b16 %v1355, %v1353
        %v1364 = vpack.c.b16 %v1356, %v1356
        %v1365 = vpack.c.b16 %v1357, %v1357
        %1374 = vmatpush.bf16.msra.mxu0 %v577
        %1375 = vmatpush.bf16.msra.mxu0 %v576
        %1376 = vmatpush.bf16.msra.mxu0 %v575
        %1377 = vmatpush.bf16.msra.mxu0 %v574
        %1378 = vmatpush.bf16.msra.mxu0 %v573
        %1379 = vmatpush.bf16.msra.mxu0 %v572
        %1380 = vmatpush.bf16.msra.mxu0 %v571
        %1381 = vmatpush.bf16.msra.mxu0 %v570
        %1382 = vmatmul.bf16.gmra.mxu0 %v1358
        %v1383 = vpop.f32.mrf.mxu0
        %v1384 = vadd.f32 0.0, %v1383
        %v1385 = vpop.f32.mrf.mxu0
        %v1386 = vadd.f32 0.0, %v1385
        %1387 = vmatmul.bf16.gmra.mxu0 %v1360
        %v1388 = vpop.f32.mrf.mxu0
        %v1389 = vadd.f32 0.0, %v1388
        %v1390 = vpop.f32.mrf.mxu0
        %v1391 = vadd.f32 0.0, %v1390
        %1392 = vmatmul.bf16.gmra.mxu0 %v1362
        %v1393 = vpop.f32.mrf.mxu0
        %v1394 = vadd.f32 0.0, %v1393
        %v1395 = vpop.f32.mrf.mxu0
        %v1396 = vadd.f32 0.0, %v1395
        %1397 = vmatmul.bf16.gmra.mxu0 %v1364
        %v1398 = vpop.f32.mrf.mxu0
        %v1399 = vadd.f32 0.0, %v1398
        %v1400 = vpop.f32.mrf.mxu0
        %1401 = vdwg.mxu0
        %1402 = vmatpush.bf16.msra.mxu0 %v585
        %1403 = vmatpush.bf16.msra.mxu0 %v584
        %1404 = vmatpush.bf16.msra.mxu0 %v583
        %1405 = vmatpush.bf16.msra.mxu0 %v582
        %1406 = vmatpush.bf16.msra.mxu0 %v581
        %1407 = vmatpush.bf16.msra.mxu0 %v580
        %1408 = vmatpush.bf16.msra.mxu0 %v579
        %1409 = vmatpush.bf16.msra.mxu0 %v578
        %1410 = vmatmul.bf16.gmra.mxu0 %v1359
        %v1411 = vpop.f32.mrf.mxu0
        %v1412 = vadd.f32 %v1384, %v1411
        %v1413 = vpop.f32.mrf.mxu0
        %v1414 = vadd.f32 %v1386, %v1413
        %1415 = vmatmul.bf16.gmra.mxu0 %v1361
        %v1416 = vpop.f32.mrf.mxu0
        %v1417 = vadd.f32 %v1389, %v1416
        %v1418 = vpop.f32.mrf.mxu0
        %v1419 = vadd.f32 %v1391, %v1418
        %1420 = vmatmul.bf16.gmra.mxu0 %v1363
        %v1421 = vpop.f32.mrf.mxu0
        %v1422 = vadd.f32 %v1394, %v1421
        %v1423 = vpop.f32.mrf.mxu0
        %v1424 = vadd.f32 %v1396, %v1423
        %1425 = vmatmul.bf16.gmra.mxu0 %v1365
        %v1426 = vpop.f32.mrf.mxu0
        %v1427 = vadd.f32 %v1399, %v1426
        %v1428 = vpop.f32.mrf.mxu0
        %1429 = vdwg.mxu0
        %v1430 = vpack.c.bf16 %v1414, %v1412
        %v1431 = vpack.c.bf16 %v1419, %v1417
        %v1432 = vpack.c.bf16 %v1424, %v1422
        %v1433 = vpack.c.bf16 %v1427, %v1427
        %s1434 = scalar_lea.vmem [#allocation6], 20
        %v1435 = vld [vmem:[%s1434] sm:$0xf]
        %v1437 = vsel %vm770, %v1430, 0
        %v1440 = vsel %vm770, %v1431, 0
        %v1443 = vsel %vm770, %v1432, 0
        %v1446 = vsel %vm770, %v1433, 0
        %v1449 = vsel %vm783, %v1435, 0
        %1451 = vmatpush.bf16.msra.mxu0 0
        %1452 = vmatpush.bf16.msra.mxu0 0
        %1453 = vmatpush.bf16.msra.mxu0 0
        %1454 = vmatpush.bf16.msra.mxu0 0
        %1455 = vmatpush.bf16.msra.mxu0 0
        %1456 = vmatpush.bf16.msra.mxu0 0
        %1457 = vmatpush.bf16.msra.mxu0 0
        %1458 = vmatpush.bf16.msra.mxu0 %v1449
        %1459 = vmatmul.bf16.gmra.mxu0 %v1437
        %v1460 = vpop.f32.mrf.mxu0
        %v1461 = vadd.f32 0.0, %v1460
        %v1462 = vpop.f32.mrf.mxu0
        %v1463 = vadd.f32 0.0, %v1462
        %1464 = vmatmul.bf16.gmra.mxu0 %v1440
        %v1465 = vpop.f32.mrf.mxu0
        %v1466 = vadd.f32 0.0, %v1465
        %v1467 = vpop.f32.mrf.mxu0
        %v1468 = vadd.f32 0.0, %v1467
        %1469 = vmatmul.bf16.gmra.mxu0 %v1443
        %v1470 = vpop.f32.mrf.mxu0
        %v1471 = vadd.f32 0.0, %v1470
        %v1472 = vpop.f32.mrf.mxu0
        %v1473 = vadd.f32 0.0, %v1472
        %1474 = vmatmul.bf16.gmra.mxu0 %v1446
        %v1475 = vpop.f32.mrf.mxu0
        %v1476 = vadd.f32 0.0, %v1475
        %v1477 = vpop.f32.mrf.mxu0
        %1478 = vdwg.mxu0
        %v1479 = vadd.f32 %v1322, %v1461
        %v1480 = vadd.f32 %v1323, %v1463
        %v1481 = vadd.f32 %v1324, %v1466
        %v1482 = vadd.f32 %v1325, %v1468
        %v1483 = vadd.f32 %v1326, %v1471
        %v1484 = vadd.f32 %v1327, %v1473
        %v1485 = vadd.f32 %v1328, %v1476
        %s1486 = scalar_lea.vmem [#allocation2], 336
        %v1487 = vld [vmem:[%s1486] sm:$0xff]
        %v1488 = vld [vmem:[%s1486 + $0x8] sm:$0xff]
        %v1489 = vld [vmem:[%s1486 + $0x10] sm:$0xff]
        %v1490 = vld [vmem:[%s1486 + $0x18] sm:$0xff]
        %v1491 = vld [vmem:[%s1486 + $0x20] sm:$0xff]
        %v1492 = vld [vmem:[%s1486 + $0x28] sm:$0xff]
        %v1493 = vld [vmem:[%s1486 + $0x30] sm:$0x11]
        %v1501 = vunpack.c.l.b16 %v1487
        %v1502 = vunpack.c.h.b16 %v1487
        %v1503 = vunpack.c.l.b16 %v1488
        %v1504 = vunpack.c.h.b16 %v1488
        %v1505 = vunpack.c.l.b16 %v1489
        %v1506 = vunpack.c.h.b16 %v1489
        %v1507 = vunpack.c.l.b16 %v1490
        %v1508 = vunpack.c.h.b16 %v1490
        %v1509 = vunpack.c.l.b16 %v1491
        %v1510 = vunpack.c.h.b16 %v1491
        %v1511 = vunpack.c.l.b16 %v1492
        %v1512 = vunpack.c.h.b16 %v1492
        %v1513 = vunpack.c.l.b16 %v1493
        %v1514 = vunpack.c.h.b16 %v1493
        %v1515 = vpack.c.b16 %v1503, %v1501
        %v1516 = vpack.c.b16 %v1504, %v1502
        %v1517 = vpack.c.b16 %v1507, %v1505
        %v1518 = vpack.c.b16 %v1508, %v1506
        %v1519 = vpack.c.b16 %v1511, %v1509
        %v1520 = vpack.c.b16 %v1512, %v1510
        %v1521 = vpack.c.b16 %v1513, %v1513
        %v1522 = vpack.c.b16 %v1514, %v1514
        %1531 = vmatpush.bf16.msra.mxu0 %v577
        %1532 = vmatpush.bf16.msra.mxu0 %v576
        %1533 = vmatpush.bf16.msra.mxu0 %v575
        %1534 = vmatpush.bf16.msra.mxu0 %v574
        %1535 = vmatpush.bf16.msra.mxu0 %v573
        %1536 = vmatpush.bf16.msra.mxu0 %v572
        %1537 = vmatpush.bf16.msra.mxu0 %v571
        %1538 = vmatpush.bf16.msra.mxu0 %v570
        %1539 = vmatmul.bf16.gmra.mxu0 %v1515
        %v1540 = vpop.f32.mrf.mxu0
        %v1541 = vadd.f32 0.0, %v1540
        %v1542 = vpop.f32.mrf.mxu0
        %v1543 = vadd.f32 0.0, %v1542
        %1544 = vmatmul.bf16.gmra.mxu0 %v1517
        %v1545 = vpop.f32.mrf.mxu0
        %v1546 = vadd.f32 0.0, %v1545
        %v1547 = vpop.f32.mrf.mxu0
        %v1548 = vadd.f32 0.0, %v1547
        %1549 = vmatmul.bf16.gmra.mxu0 %v1519
        %v1550 = vpop.f32.mrf.mxu0
        %v1551 = vadd.f32 0.0, %v1550
        %v1552 = vpop.f32.mrf.mxu0
        %v1553 = vadd.f32 0.0, %v1552
        %1554 = vmatmul.bf16.gmra.mxu0 %v1521
        %v1555 = vpop.f32.mrf.mxu0
        %v1556 = vadd.f32 0.0, %v1555
        %v1557 = vpop.f32.mrf.mxu0
        %1558 = vdwg.mxu0
        %1559 = vmatpush.bf16.msra.mxu0 %v585
        %1560 = vmatpush.bf16.msra.mxu0 %v584
        %1561 = vmatpush.bf16.msra.mxu0 %v583
        %1562 = vmatpush.bf16.msra.mxu0 %v582
        %1563 = vmatpush.bf16.msra.mxu0 %v581
        %1564 = vmatpush.bf16.msra.mxu0 %v580
        %1565 = vmatpush.bf16.msra.mxu0 %v579
        %1566 = vmatpush.bf16.msra.mxu0 %v578
        %1567 = vmatmul.bf16.gmra.mxu0 %v1516
        %v1568 = vpop.f32.mrf.mxu0
        %v1569 = vadd.f32 %v1541, %v1568
        %v1570 = vpop.f32.mrf.mxu0
        %v1571 = vadd.f32 %v1543, %v1570
        %1572 = vmatmul.bf16.gmra.mxu0 %v1518
        %v1573 = vpop.f32.mrf.mxu0
        %v1574 = vadd.f32 %v1546, %v1573
        %v1575 = vpop.f32.mrf.mxu0
        %v1576 = vadd.f32 %v1548, %v1575
        %1577 = vmatmul.bf16.gmra.mxu0 %v1520
        %v1578 = vpop.f32.mrf.mxu0
        %v1579 = vadd.f32 %v1551, %v1578
        %v1580 = vpop.f32.mrf.mxu0
        %v1581 = vadd.f32 %v1553, %v1580
        %1582 = vmatmul.bf16.gmra.mxu0 %v1522
        %v1583 = vpop.f32.mrf.mxu0
        %v1584 = vadd.f32 %v1556, %v1583
        %v1585 = vpop.f32.mrf.mxu0
        %1586 = vdwg.mxu0
        %v1587 = vpack.c.bf16 %v1571, %v1569
        %v1588 = vpack.c.bf16 %v1576, %v1574
        %v1589 = vpack.c.bf16 %v1581, %v1579
        %v1590 = vpack.c.bf16 %v1584, %v1584
        %s1591 = scalar_lea.vmem [#allocation6], 24
        %v1592 = vld [vmem:[%s1591] sm:$0xf]
        %v1594 = vsel %vm770, %v1587, 0
        %v1597 = vsel %vm770, %v1588, 0
        %v1600 = vsel %vm770, %v1589, 0
        %v1603 = vsel %vm770, %v1590, 0
        %v1606 = vsel %vm783, %v1592, 0
        %1608 = vmatpush.bf16.msra.mxu0 0
        %1609 = vmatpush.bf16.msra.mxu0 0
        %1610 = vmatpush.bf16.msra.mxu0 0
        %1611 = vmatpush.bf16.msra.mxu0 0
        %1612 = vmatpush.bf16.msra.mxu0 0
        %1613 = vmatpush.bf16.msra.mxu0 0
        %1614 = vmatpush.bf16.msra.mxu0 0
        %1615 = vmatpush.bf16.msra.mxu0 %v1606
        %1616 = vmatmul.bf16.gmra.mxu0 %v1594
        %v1617 = vpop.f32.mrf.mxu0
        %v1618 = vadd.f32 0.0, %v1617
        %v1619 = vpop.f32.mrf.mxu0
        %v1620 = vadd.f32 0.0, %v1619
        %1621 = vmatmul.bf16.gmra.mxu0 %v1597
        %v1622 = vpop.f32.mrf.mxu0
        %v1623 = vadd.f32 0.0, %v1622
        %v1624 = vpop.f32.mrf.mxu0
        %v1625 = vadd.f32 0.0, %v1624
        %1626 = vmatmul.bf16.gmra.mxu0 %v1600
        %v1627 = vpop.f32.mrf.mxu0
        %v1628 = vadd.f32 0.0, %v1627
        %v1629 = vpop.f32.mrf.mxu0
        %v1630 = vadd.f32 0.0, %v1629
        %1631 = vmatmul.bf16.gmra.mxu0 %v1603
        %v1632 = vpop.f32.mrf.mxu0
        %v1633 = vadd.f32 0.0, %v1632
        %v1634 = vpop.f32.mrf.mxu0
        %1635 = vdwg.mxu0
        %v1636 = vadd.f32 %v1479, %v1618
        %v1637 = vadd.f32 %v1480, %v1620
        %v1638 = vadd.f32 %v1481, %v1623
        %v1639 = vadd.f32 %v1482, %v1625
        %v1640 = vadd.f32 %v1483, %v1628
        %v1641 = vadd.f32 %v1484, %v1630
        %v1642 = vadd.f32 %v1485, %v1633
        %s1643 = scalar_lea.vmem [#allocation2], 392
        %v1644 = vld [vmem:[%s1643] sm:$0xff]
        %v1645 = vld [vmem:[%s1643 + $0x8] sm:$0xff]
        %v1646 = vld [vmem:[%s1643 + $0x10] sm:$0xff]
        %v1647 = vld [vmem:[%s1643 + $0x18] sm:$0xff]
        %v1648 = vld [vmem:[%s1643 + $0x20] sm:$0xff]
        %v1649 = vld [vmem:[%s1643 + $0x28] sm:$0xff]
        %v1650 = vld [vmem:[%s1643 + $0x30] sm:$0x11]
        %v1658 = vunpack.c.l.b16 %v1644
        %v1659 = vunpack.c.h.b16 %v1644
        %v1660 = vunpack.c.l.b16 %v1645
        %v1661 = vunpack.c.h.b16 %v1645
        %v1662 = vunpack.c.l.b16 %v1646
        %v1663 = vunpack.c.h.b16 %v1646
        %v1664 = vunpack.c.l.b16 %v1647
        %v1665 = vunpack.c.h.b16 %v1647
        %v1666 = vunpack.c.l.b16 %v1648
        %v1667 = vunpack.c.h.b16 %v1648
        %v1668 = vunpack.c.l.b16 %v1649
        %v1669 = vunpack.c.h.b16 %v1649
        %v1670 = vunpack.c.l.b16 %v1650
        %v1671 = vunpack.c.h.b16 %v1650
        %v1672 = vpack.c.b16 %v1660, %v1658
        %v1673 = vpack.c.b16 %v1661, %v1659
        %v1674 = vpack.c.b16 %v1664, %v1662
        %v1675 = vpack.c.b16 %v1665, %v1663
        %v1676 = vpack.c.b16 %v1668, %v1666
        %v1677 = vpack.c.b16 %v1669, %v1667
        %v1678 = vpack.c.b16 %v1670, %v1670
        %v1679 = vpack.c.b16 %v1671, %v1671
        %1688 = vmatpush.bf16.msra.mxu0 %v577
        %1689 = vmatpush.bf16.msra.mxu0 %v576
        %1690 = vmatpush.bf16.msra.mxu0 %v575
        %1691 = vmatpush.bf16.msra.mxu0 %v574
        %1692 = vmatpush.bf16.msra.mxu0 %v573
        %1693 = vmatpush.bf16.msra.mxu0 %v572
        %1694 = vmatpush.bf16.msra.mxu0 %v571
        %1695 = vmatpush.bf16.msra.mxu0 %v570
        %1696 = vmatmul.bf16.gmra.mxu0 %v1672
        %v1697 = vpop.f32.mrf.mxu0
        %v1698 = vadd.f32 0.0, %v1697
        %v1699 = vpop.f32.mrf.mxu0
        %v1700 = vadd.f32 0.0, %v1699
        %1701 = vmatmul.bf16.gmra.mxu0 %v1674
        %v1702 = vpop.f32.mrf.mxu0
        %v1703 = vadd.f32 0.0, %v1702
        %v1704 = vpop.f32.mrf.mxu0
        %v1705 = vadd.f32 0.0, %v1704
        %1706 = vmatmul.bf16.gmra.mxu0 %v1676
        %v1707 = vpop.f32.mrf.mxu0
        %v1708 = vadd.f32 0.0, %v1707
        %v1709 = vpop.f32.mrf.mxu0
        %v1710 = vadd.f32 0.0, %v1709
        %1711 = vmatmul.bf16.gmra.mxu0 %v1678
        %v1712 = vpop.f32.mrf.mxu0
        %v1713 = vadd.f32 0.0, %v1712
        %v1714 = vpop.f32.mrf.mxu0
        %1715 = vdwg.mxu0
        %1716 = vmatpush.bf16.msra.mxu0 %v585
        %1717 = vmatpush.bf16.msra.mxu0 %v584
        %1718 = vmatpush.bf16.msra.mxu0 %v583
        %1719 = vmatpush.bf16.msra.mxu0 %v582
        %1720 = vmatpush.bf16.msra.mxu0 %v581
        %1721 = vmatpush.bf16.msra.mxu0 %v580
        %1722 = vmatpush.bf16.msra.mxu0 %v579
        %1723 = vmatpush.bf16.msra.mxu0 %v578
        %1724 = vmatmul.bf16.gmra.mxu0 %v1673
        %v1725 = vpop.f32.mrf.mxu0
        %v1726 = vadd.f32 %v1698, %v1725
        %v1727 = vpop.f32.mrf.mxu0
        %v1728 = vadd.f32 %v1700, %v1727
        %1729 = vmatmul.bf16.gmra.mxu0 %v1675
        %v1730 = vpop.f32.mrf.mxu0
        %v1731 = vadd.f32 %v1703, %v1730
        %v1732 = vpop.f32.mrf.mxu0
        %v1733 = vadd.f32 %v1705, %v1732
        %1734 = vmatmul.bf16.gmra.mxu0 %v1677
        %v1735 = vpop.f32.mrf.mxu0
        %v1736 = vadd.f32 %v1708, %v1735
        %v1737 = vpop.f32.mrf.mxu0
        %v1738 = vadd.f32 %v1710, %v1737
        %1739 = vmatmul.bf16.gmra.mxu0 %v1679
        %v1740 = vpop.f32.mrf.mxu0
        %v1741 = vadd.f32 %v1713, %v1740
        %v1742 = vpop.f32.mrf.mxu0
        %1743 = vdwg.mxu0
        %v1744 = vpack.c.bf16 %v1728, %v1726
        %v1745 = vpack.c.bf16 %v1733, %v1731
        %v1746 = vpack.c.bf16 %v1738, %v1736
        %v1747 = vpack.c.bf16 %v1741, %v1741
        %s1748 = scalar_lea.vmem [#allocation6], 28
        %v1749 = vld [vmem:[%s1748] sm:$0xf]
        %v1751 = vsel %vm770, %v1744, 0
        %v1754 = vsel %vm770, %v1745, 0
        %v1757 = vsel %vm770, %v1746, 0
        %v1760 = vsel %vm770, %v1747, 0
        %v1763 = vsel %vm783, %v1749, 0
        %1765 = vmatpush.bf16.msra.mxu0 0
        %1766 = vmatpush.bf16.msra.mxu0 0
        %1767 = vmatpush.bf16.msra.mxu0 0
        %1768 = vmatpush.bf16.msra.mxu0 0
        %1769 = vmatpush.bf16.msra.mxu0 0
        %1770 = vmatpush.bf16.msra.mxu0 0
        %1771 = vmatpush.bf16.msra.mxu0 0
        %1772 = vmatpush.bf16.msra.mxu0 %v1763
        %1773 = vmatmul.bf16.gmra.mxu0 %v1751
        %v1774 = vpop.f32.mrf.mxu0
        %v1775 = vadd.f32 0.0, %v1774
        %v1776 = vpop.f32.mrf.mxu0
        %v1777 = vadd.f32 0.0, %v1776
        %1778 = vmatmul.bf16.gmra.mxu0 %v1754
        %v1779 = vpop.f32.mrf.mxu0
        %v1780 = vadd.f32 0.0, %v1779
        %v1781 = vpop.f32.mrf.mxu0
        %v1782 = vadd.f32 0.0, %v1781
        %1783 = vmatmul.bf16.gmra.mxu0 %v1757
        %v1784 = vpop.f32.mrf.mxu0
        %v1785 = vadd.f32 0.0, %v1784
        %v1786 = vpop.f32.mrf.mxu0
        %v1787 = vadd.f32 0.0, %v1786
        %1788 = vmatmul.bf16.gmra.mxu0 %v1760
        %v1789 = vpop.f32.mrf.mxu0
        %v1790 = vadd.f32 0.0, %v1789
        %v1791 = vpop.f32.mrf.mxu0
        %1792 = vdwg.mxu0
        %v1793 = vadd.f32 %v1636, %v1775
        %v1794 = vadd.f32 %v1637, %v1777
        %v1795 = vadd.f32 %v1638, %v1780
        %v1796 = vadd.f32 %v1639, %v1782
        %v1797 = vadd.f32 %v1640, %v1785
        %v1798 = vadd.f32 %v1641, %v1787
        %v1799 = vadd.f32 %v1642, %v1790
        %s1800 = scalar_lea.vmem [#allocation2], 448
        %v1801 = vld [vmem:[%s1800] sm:$0xff]
        %v1802 = vld [vmem:[%s1800 + $0x8] sm:$0xff]
        %v1803 = vld [vmem:[%s1800 + $0x10] sm:$0xff]
        %v1804 = vld [vmem:[%s1800 + $0x18] sm:$0xff]
        %v1805 = vld [vmem:[%s1800 + $0x20] sm:$0xff]
        %v1806 = vld [vmem:[%s1800 + $0x28] sm:$0xff]
        %v1807 = vld [vmem:[%s1800 + $0x30] sm:$0x11]
        %v1815 = vunpack.c.l.b16 %v1801
        %v1816 = vunpack.c.h.b16 %v1801
        %v1817 = vunpack.c.l.b16 %v1802
        %v1818 = vunpack.c.h.b16 %v1802
        %v1819 = vunpack.c.l.b16 %v1803
        %v1820 = vunpack.c.h.b16 %v1803
        %v1821 = vunpack.c.l.b16 %v1804
        %v1822 = vunpack.c.h.b16 %v1804
        %v1823 = vunpack.c.l.b16 %v1805
        %v1824 = vunpack.c.h.b16 %v1805
        %v1825 = vunpack.c.l.b16 %v1806
        %v1826 = vunpack.c.h.b16 %v1806
        %v1827 = vunpack.c.l.b16 %v1807
        %v1828 = vunpack.c.h.b16 %v1807
        %v1829 = vpack.c.b16 %v1817, %v1815
        %v1830 = vpack.c.b16 %v1818, %v1816
        %v1831 = vpack.c.b16 %v1821, %v1819
        %v1832 = vpack.c.b16 %v1822, %v1820
        %v1833 = vpack.c.b16 %v1825, %v1823
        %v1834 = vpack.c.b16 %v1826, %v1824
        %v1835 = vpack.c.b16 %v1827, %v1827
        %v1836 = vpack.c.b16 %v1828, %v1828
        %1845 = vmatpush.bf16.msra.mxu0 %v577
        %1846 = vmatpush.bf16.msra.mxu0 %v576
        %1847 = vmatpush.bf16.msra.mxu0 %v575
        %1848 = vmatpush.bf16.msra.mxu0 %v574
        %1849 = vmatpush.bf16.msra.mxu0 %v573
        %1850 = vmatpush.bf16.msra.mxu0 %v572
        %1851 = vmatpush.bf16.msra.mxu0 %v571
        %1852 = vmatpush.bf16.msra.mxu0 %v570
        %1853 = vmatmul.bf16.gmra.mxu0 %v1829
        %v1854 = vpop.f32.mrf.mxu0
        %v1855 = vadd.f32 0.0, %v1854
        %v1856 = vpop.f32.mrf.mxu0
        %v1857 = vadd.f32 0.0, %v1856
        %1858 = vmatmul.bf16.gmra.mxu0 %v1831
        %v1859 = vpop.f32.mrf.mxu0
        %v1860 = vadd.f32 0.0, %v1859
        %v1861 = vpop.f32.mrf.mxu0
        %v1862 = vadd.f32 0.0, %v1861
        %1863 = vmatmul.bf16.gmra.mxu0 %v1833
        %v1864 = vpop.f32.mrf.mxu0
        %v1865 = vadd.f32 0.0, %v1864
        %v1866 = vpop.f32.mrf.mxu0
        %v1867 = vadd.f32 0.0, %v1866
        %1868 = vmatmul.bf16.gmra.mxu0 %v1835
        %v1869 = vpop.f32.mrf.mxu0
        %v1870 = vadd.f32 0.0, %v1869
        %v1871 = vpop.f32.mrf.mxu0
        %1872 = vdwg.mxu0
        %1873 = vmatpush.bf16.msra.mxu0 %v585
        %1874 = vmatpush.bf16.msra.mxu0 %v584
        %1875 = vmatpush.bf16.msra.mxu0 %v583
        %1876 = vmatpush.bf16.msra.mxu0 %v582
        %1877 = vmatpush.bf16.msra.mxu0 %v581
        %1878 = vmatpush.bf16.msra.mxu0 %v580
        %1879 = vmatpush.bf16.msra.mxu0 %v579
        %1880 = vmatpush.bf16.msra.mxu0 %v578
        %1881 = vmatmul.bf16.gmra.mxu0 %v1830
        %v1882 = vpop.f32.mrf.mxu0
        %v1883 = vadd.f32 %v1855, %v1882
        %v1884 = vpop.f32.mrf.mxu0
        %v1885 = vadd.f32 %v1857, %v1884
        %1886 = vmatmul.bf16.gmra.mxu0 %v1832
        %v1887 = vpop.f32.mrf.mxu0
        %v1888 = vadd.f32 %v1860, %v1887
        %v1889 = vpop.f32.mrf.mxu0
        %v1890 = vadd.f32 %v1862, %v1889
        %1891 = vmatmul.bf16.gmra.mxu0 %v1834
        %v1892 = vpop.f32.mrf.mxu0
        %v1893 = vadd.f32 %v1865, %v1892
        %v1894 = vpop.f32.mrf.mxu0
        %v1895 = vadd.f32 %v1867, %v1894
        %1896 = vmatmul.bf16.gmra.mxu0 %v1836
        %v1897 = vpop.f32.mrf.mxu0
        %v1898 = vadd.f32 %v1870, %v1897
        %v1899 = vpop.f32.mrf.mxu0
        %1900 = vdwg.mxu0
        %v1901 = vpack.c.bf16 %v1885, %v1883
        %v1902 = vpack.c.bf16 %v1890, %v1888
        %v1903 = vpack.c.bf16 %v1895, %v1893
        %v1904 = vpack.c.bf16 %v1898, %v1898
        %s1905 = scalar_lea.vmem [#allocation6], 32
        %v1906 = vld [vmem:[%s1905] sm:$0xf]
        %v1908 = vsel %vm770, %v1901, 0
        %v1911 = vsel %vm770, %v1902, 0
        %v1914 = vsel %vm770, %v1903, 0
        %v1917 = vsel %vm770, %v1904, 0
        %v1920 = vsel %vm783, %v1906, 0
        %1922 = vmatpush.bf16.msra.mxu0 0
        %1923 = vmatpush.bf16.msra.mxu0 0
        %1924 = vmatpush.bf16.msra.mxu0 0
        %1925 = vmatpush.bf16.msra.mxu0 0
        %1926 = vmatpush.bf16.msra.mxu0 0
        %1927 = vmatpush.bf16.msra.mxu0 0
        %1928 = vmatpush.bf16.msra.mxu0 0
        %1929 = vmatpush.bf16.msra.mxu0 %v1920
        %1930 = vmatmul.bf16.gmra.mxu0 %v1908
        %v1931 = vpop.f32.mrf.mxu0
        %v1932 = vadd.f32 0.0, %v1931
        %v1933 = vpop.f32.mrf.mxu0
        %v1934 = vadd.f32 0.0, %v1933
        %1935 = vmatmul.bf16.gmra.mxu0 %v1911
        %v1936 = vpop.f32.mrf.mxu0
        %v1937 = vadd.f32 0.0, %v1936
        %v1938 = vpop.f32.mrf.mxu0
        %v1939 = vadd.f32 0.0, %v1938
        %1940 = vmatmul.bf16.gmra.mxu0 %v1914
        %v1941 = vpop.f32.mrf.mxu0
        %v1942 = vadd.f32 0.0, %v1941
        %v1943 = vpop.f32.mrf.mxu0
        %v1944 = vadd.f32 0.0, %v1943
        %1945 = vmatmul.bf16.gmra.mxu0 %v1917
        %v1946 = vpop.f32.mrf.mxu0
        %v1947 = vadd.f32 0.0, %v1946
        %v1948 = vpop.f32.mrf.mxu0
        %1949 = vdwg.mxu0
        %v1950 = vadd.f32 %v1793, %v1932
        %v1951 = vadd.f32 %v1794, %v1934
        %v1952 = vadd.f32 %v1795, %v1937
        %v1953 = vadd.f32 %v1796, %v1939
        %v1954 = vadd.f32 %v1797, %v1942
        %v1955 = vadd.f32 %v1798, %v1944
        %v1956 = vadd.f32 %v1799, %v1947
        %v1957 = vld [vmem:[#allocation9] sm:$0x1]
        %v1959 = vperm.slane %v1957, 0
        %v1961 = vadd.f32 %v1950, %v1959
        %v1962 = vadd.f32 %v1951, %v1959
        %v1963 = vadd.f32 %v1952, %v1959
        %v1964 = vadd.f32 %v1953, %v1959
        %v1965 = vadd.f32 %v1954, %v1959
        %v1966 = vadd.f32 %v1955, %v1959
        %v1967 = vadd.f32 %v1956, %v1959
        %v1968 = vmax.f32 %v1961, 0.0
        %v1969 = vmax.f32 %v1962, 0.0
        %v1970 = vmax.f32 %v1963, 0.0
        %v1971 = vmax.f32 %v1964, 0.0
        %v1972 = vmax.f32 %v1965, 0.0
        %v1973 = vmax.f32 %v1966, 0.0
        %v1974 = vmax.f32 %v1967, 0.0
        %v1975 = vld [vmem:[%s4] sm:$0xf]
        %v1976 = vld [vmem:[%s4 + $0x4] sm:$0xf]
        %v1977 = vld [vmem:[%s4 + $0x8] sm:$0xf]
        %v1978 = vld [vmem:[%s4 + $0xc] sm:$0xf]
        %v1979 = vld [vmem:[%s4 + $0x10] sm:$0xf]
        %v1980 = vld [vmem:[%s4 + $0x14] sm:$0xf]
        %v1981 = vld [vmem:[%s4 + $0x18] sm:$0xf]
        %v1982 = vld [vmem:[%s4 + $0x1c] sm:$0xf]
        %v1983 = vld [vmem:[%s4 + $0x20] sm:$0xf]
        %v1984 = vld [vmem:[%s4 + $0x24] sm:$0xf]
        %v1985 = vld [vmem:[%s4 + $0x28] sm:$0xf]
        %v1986 = vld [vmem:[%s4 + $0x2c] sm:$0xf]
        %v1987 = vld [vmem:[%s4 + $0x30] sm:$0xf]
        %v1988 = vld [vmem:[%s4 + $0x34] sm:$0xf]
        %v1989 = vld [vmem:[%s4 + $0x38] sm:$0xf]
        %v1990 = vld [vmem:[%s4 + $0x3c] sm:$0xf]
        %s1991 = scalar_lea.vmem [#allocation9], 1
        %v1992 = vld [vmem:[%s1991] sm:$0x1]
        %v1993 = vpack.c.bf16 %v1969, %v1968
        %v1994 = vpack.c.bf16 %v1971, %v1970
        %v1995 = vpack.c.bf16 %v1973, %v1972
        %v1996 = vpack.c.bf16 %v1974, %v1974
        %v1998 = vperm.slane %v1992, 0
        %v2016 = vunpack.c.l.b16 %v1975
        %v2017 = vunpack.c.l.b16 %v1976
        %v2018 = vunpack.c.l.b16 %v1977
        %v2019 = vunpack.c.l.b16 %v1978
        %v2020 = vunpack.c.l.b16 %v1979
        %v2021 = vunpack.c.l.b16 %v1980
        %v2022 = vunpack.c.l.b16 %v1981
        %v2023 = vunpack.c.l.b16 %v1982
        %v2024 = vunpack.c.l.b16 %v1983
        %v2025 = vunpack.c.l.b16 %v1984
        %v2026 = vunpack.c.l.b16 %v1985
        %v2027 = vunpack.c.l.b16 %v1986
        %v2028 = vunpack.c.l.b16 %v1987
        %v2029 = vunpack.c.l.b16 %v1988
        %v2030 = vunpack.c.l.b16 %v1989
        %v2031 = vunpack.c.l.b16 %v1990
        %v2032 = vpack.c.b16 %v2017, %v2016
        %v2033 = vpack.c.b16 %v2019, %v2018
        %v2034 = vpack.c.b16 %v2021, %v2020
        %v2035 = vpack.c.b16 %v2023, %v2022
        %v2036 = vpack.c.b16 %v2025, %v2024
        %v2037 = vpack.c.b16 %v2027, %v2026
        %v2038 = vpack.c.b16 %v2029, %v2028
        %v2039 = vpack.c.b16 %v2031, %v2030
        %2048 = vmatpush.bf16.msra.mxu0 %v2039
        %2049 = vmatpush.bf16.msra.mxu0 %v2038
        %2050 = vmatpush.bf16.msra.mxu0 %v2037
        %2051 = vmatpush.bf16.msra.mxu0 %v2036
        %2052 = vmatpush.bf16.msra.mxu0 %v2035
        %2053 = vmatpush.bf16.msra.mxu0 %v2034
        %2054 = vmatpush.bf16.msra.mxu0 %v2033
        %2055 = vmatpush.bf16.msra.mxu0 %v2032
        %2056 = vmatmul.bf16.gmra.mxu0 %v1993
        %v2057 = vpop.f32.mrf.mxu0
        %v2058 = vadd.f32 %v1998, %v2057
        %v2059 = vpop.f32.mrf.mxu0
        %v2060 = vadd.f32 %v1998, %v2059
        %2061 = vmatmul.bf16.gmra.mxu0 %v1994
        %v2062 = vpop.f32.mrf.mxu0
        %v2063 = vadd.f32 %v1998, %v2062
        %v2064 = vpop.f32.mrf.mxu0
        %v2065 = vadd.f32 %v1998, %v2064
        %2066 = vmatmul.bf16.gmra.mxu0 %v1995
        %v2067 = vpop.f32.mrf.mxu0
        %v2068 = vadd.f32 %v1998, %v2067
        %v2069 = vpop.f32.mrf.mxu0
        %v2070 = vadd.f32 %v1998, %v2069
        %2071 = vmatmul.bf16.gmra.mxu0 %v1996
        %v2072 = vpop.f32.mrf.mxu0
        %v2073 = vadd.f32 %v1998, %v2072
        %v2074 = vpop.f32.mrf.mxu0
        %2075 = vdwg.mxu0
        %v2076 = vmax.f32 %v2058, 0.0
        %v2077 = vmax.f32 %v2060, 0.0
        %v2078 = vmax.f32 %v2063, 0.0
        %v2079 = vmax.f32 %v2065, 0.0
        %v2080 = vmax.f32 %v2068, 0.0
        %v2081 = vmax.f32 %v2070, 0.0
        %v2082 = vmax.f32 %v2073, 0.0
        %s2083 = scalar_lea.vmem [#allocation9], 2
        %v2084 = vld [vmem:[%s2083] sm:$0x1]
        %v2085 = vpack.c.bf16 %v2077, %v2076
        %v2086 = vpack.c.bf16 %v2079, %v2078
        %v2087 = vpack.c.bf16 %v2081, %v2080
        %v2088 = vpack.c.bf16 %v2082, %v2082
        %v2089 = vld [vmem:[#allocation4] sm:$0xf]
        %v2090 = vld [vmem:[#allocation4 + $0x4] sm:$0xf]
        %v2091 = vld [vmem:[#allocation4 + $0x8] sm:$0xf]
        %v2092 = vld [vmem:[#allocation4 + $0xc] sm:$0xf]
        %v2093 = vld [vmem:[#allocation4 + $0x10] sm:$0xf]
        %v2094 = vld [vmem:[#allocation4 + $0x14] sm:$0xf]
        %v2095 = vld [vmem:[#allocation4 + $0x18] sm:$0x1]
        %v2103 = vunpack.c.l.b16 %v2089
        %v2104 = vunpack.c.l.b16 %v2090
        %v2105 = vunpack.c.l.b16 %v2091
        %v2106 = vunpack.c.l.b16 %v2092
        %v2107 = vunpack.c.l.b16 %v2093
        %v2108 = vunpack.c.l.b16 %v2094
        %v2109 = vunpack.c.l.b16 %v2095
        %v2110 = vpack.c.b16 %v2104, %v2103
        %v2111 = vpack.c.b16 %v2106, %v2105
        %v2112 = vpack.c.b16 %v2108, %v2107
        %v2113 = vpack.c.b16 %v2109, %v2109
        %vm2114 = vcmask 400384
        %v2116 = vsel %vm2114, %v2110, 0
        %v2119 = vsel %vm2114, %v2111, 0
        %v2122 = vsel %vm2114, %v2112, 0
        %v2125 = vsel %vm2114, %v2113, 0
        %vm2127 = vcmask 1040384
        %v2128 = vsel 0, 4294967295, 65535
        %v2129 = vsel %vm2127, %v2128, 0
        %v2131 = vand.u32 %v2088, %v2129
        %2133 = vmatpush.bf16.msra.mxu0 0
        %2134 = vmatpush.bf16.msra.mxu0 0
        %2135 = vmatpush.bf16.msra.mxu0 0
        %2136 = vmatpush.bf16.msra.mxu0 0
        %2137 = vmatpush.bf16.msra.mxu0 %v2131
        %2138 = vmatpush.bf16.msra.mxu0 %v2087
        %2139 = vmatpush.bf16.msra.mxu0 %v2086
        %2140 = vmatpush.bf16.msra.mxu0 %v2085
        %2141 = vmatmul.bf16.gmra.mxu0 %v2116
        %v2142 = vpop.f32.mrf.mxu0
        %v2143 = vadd.f32 0.0, %v2142
        %v2144 = vpop.f32.mrf.mxu0
        %v2145 = vadd.f32 0.0, %v2144
        %2146 = vmatmul.bf16.gmra.mxu0 %v2119
        %v2147 = vpop.f32.mrf.mxu0
        %v2148 = vadd.f32 0.0, %v2147
        %v2149 = vpop.f32.mrf.mxu0
        %v2150 = vadd.f32 0.0, %v2149
        %2151 = vmatmul.bf16.gmra.mxu0 %v2122
        %v2152 = vpop.f32.mrf.mxu0
        %v2153 = vadd.f32 0.0, %v2152
        %v2154 = vpop.f32.mrf.mxu0
        %v2155 = vadd.f32 0.0, %v2154
        %2156 = vmatmul.bf16.gmra.mxu0 %v2125
        %v2157 = vpop.f32.mrf.mxu0
        %v2158 = vadd.f32 0.0, %v2157
        %v2159 = vpop.f32.mrf.mxu0
        %2160 = vdwg.mxu0
        %v2161 = vld [vmem:[#allocation7] sm:$0x1]
        %v2163 = vperm.slane %v2161, 0
        %v2165 = vmul.f32 %v2143, %v2163
        %v2166 = vmul.f32 %v2145, %v2163
        %v2167 = vmul.f32 %v2148, %v2163
        %v2168 = vmul.f32 %v2150, %v2163
        %v2169 = vmul.f32 %v2153, %v2163
        %v2170 = vmul.f32 %v2155, %v2163
        %v2171 = vmul.f32 %v2158, %v2163
        %v2172 = vadd.f32 %v2165, 0.0
        %v2173 = vadd.f32 %v2166, 0.0
        %v2174 = vadd.f32 %v2167, 0.0
        %v2175 = vadd.f32 %v2168, 0.0
        %v2176 = vadd.f32 %v2169, 0.0
        %v2177 = vadd.f32 %v2170, 0.0
        %v2178 = vadd.f32 %v2171, 0.0
        %s2179 = scalar_lea.vmem [#allocation4], 28
        %v2180 = vld [vmem:[%s2179] sm:$0xf]
        %v2181 = vld [vmem:[%s2179 + $0x4] sm:$0xf]
        %v2182 = vld [vmem:[%s2179 + $0x8] sm:$0xf]
        %v2183 = vld [vmem:[%s2179 + $0xc] sm:$0xf]
        %v2184 = vld [vmem:[%s2179 + $0x10] sm:$0xf]
        %v2185 = vld [vmem:[%s2179 + $0x14] sm:$0xf]
        %v2186 = vld [vmem:[%s2179 + $0x18] sm:$0x1]
        %v2194 = vunpack.c.l.b16 %v2180
        %v2195 = vunpack.c.l.b16 %v2181
        %v2196 = vunpack.c.l.b16 %v2182
        %v2197 = vunpack.c.l.b16 %v2183
        %v2198 = vunpack.c.l.b16 %v2184
        %v2199 = vunpack.c.l.b16 %v2185
        %v2200 = vunpack.c.l.b16 %v2186
        %v2201 = vpack.c.b16 %v2195, %v2194
        %v2202 = vpack.c.b16 %v2197, %v2196
        %v2203 = vpack.c.b16 %v2199, %v2198
        %v2204 = vpack.c.b16 %v2200, %v2200
        %v2206 = vsel %vm2114, %v2201, 0
        %v2209 = vsel %vm2114, %v2202, 0
        %v2212 = vsel %vm2114, %v2203, 0
        %v2215 = vsel %vm2114, %v2204, 0
        %2217 = vmatpush.bf16.msra.mxu0 0
        %2218 = vmatpush.bf16.msra.mxu0 0
        %2219 = vmatpush.bf16.msra.mxu0 0
        %2220 = vmatpush.bf16.msra.mxu0 0
        %2221 = vmatpush.bf16.msra.mxu0 %v2131
        %2222 = vmatpush.bf16.msra.mxu0 %v2087
        %2223 = vmatpush.bf16.msra.mxu0 %v2086
        %2224 = vmatpush.bf16.msra.mxu0 %v2085
        %2225 = vmatmul.bf16.gmra.mxu0 %v2206
        %v2226 = vpop.f32.mrf.mxu0
        %v2227 = vadd.f32 0.0, %v2226
        %v2228 = vpop.f32.mrf.mxu0
        %v2229 = vadd.f32 0.0, %v2228
        %2230 = vmatmul.bf16.gmra.mxu0 %v2209
        %v2231 = vpop.f32.mrf.mxu0
        %v2232 = vadd.f32 0.0, %v2231
        %v2233 = vpop.f32.mrf.mxu0
        %v2234 = vadd.f32 0.0, %v2233
        %2235 = vmatmul.bf16.gmra.mxu0 %v2212
        %v2236 = vpop.f32.mrf.mxu0
        %v2237 = vadd.f32 0.0, %v2236
        %v2238 = vpop.f32.mrf.mxu0
        %v2239 = vadd.f32 0.0, %v2238
        %2240 = vmatmul.bf16.gmra.mxu0 %v2215
        %v2241 = vpop.f32.mrf.mxu0
        %v2242 = vadd.f32 0.0, %v2241
        %v2243 = vpop.f32.mrf.mxu0
        %2244 = vdwg.mxu0
        %s2245 = scalar_lea.vmem [#allocation7], 1
        %v2246 = vld [vmem:[%s2245] sm:$0x1]
        %v2248 = vperm.slane %v2246, 0
        %v2250 = vmul.f32 %v2227, %v2248
        %v2251 = vmul.f32 %v2229, %v2248
        %v2252 = vmul.f32 %v2232, %v2248
        %v2253 = vmul.f32 %v2234, %v2248
        %v2254 = vmul.f32 %v2237, %v2248
        %v2255 = vmul.f32 %v2239, %v2248
        %v2256 = vmul.f32 %v2242, %v2248
        %v2257 = vadd.f32 %v2172, %v2250
        %v2258 = vadd.f32 %v2173, %v2251
        %v2259 = vadd.f32 %v2174, %v2252
        %v2260 = vadd.f32 %v2175, %v2253
        %v2261 = vadd.f32 %v2176, %v2254
        %v2262 = vadd.f32 %v2177, %v2255
        %v2263 = vadd.f32 %v2178, %v2256
        %s2264 = scalar_lea.vmem [#allocation4], 56
        %v2265 = vld [vmem:[%s2264] sm:$0xf]
        %v2266 = vld [vmem:[%s2264 + $0x4] sm:$0xf]
        %v2267 = vld [vmem:[%s2264 + $0x8] sm:$0xf]
        %v2268 = vld [vmem:[%s2264 + $0xc] sm:$0xf]
        %v2269 = vld [vmem:[%s2264 + $0x10] sm:$0xf]
        %v2270 = vld [vmem:[%s2264 + $0x14] sm:$0xf]
        %v2271 = vld [vmem:[%s2264 + $0x18] sm:$0x1]
        %v2279 = vunpack.c.l.b16 %v2265
        %v2280 = vunpack.c.l.b16 %v2266
        %v2281 = vunpack.c.l.b16 %v2267
        %v2282 = vunpack.c.l.b16 %v2268
        %v2283 = vunpack.c.l.b16 %v2269
        %v2284 = vunpack.c.l.b16 %v2270
        %v2285 = vunpack.c.l.b16 %v2271
        %v2286 = vpack.c.b16 %v2280, %v2279
        %v2287 = vpack.c.b16 %v2282, %v2281
        %v2288 = vpack.c.b16 %v2284, %v2283
        %v2289 = vpack.c.b16 %v2285, %v2285
        %v2291 = vsel %vm2114, %v2286, 0
        %v2294 = vsel %vm2114, %v2287, 0
        %v2297 = vsel %vm2114, %v2288, 0
        %v2300 = vsel %vm2114, %v2289, 0
        %2302 = vmatpush.bf16.msra.mxu0 0
        %2303 = vmatpush.bf16.msra.mxu0 0
        %2304 = vmatpush.bf16.msra.mxu0 0
        %2305 = vmatpush.bf16.msra.mxu0 0
        %2306 = vmatpush.bf16.msra.mxu0 %v2131
        %2307 = vmatpush.bf16.msra.mxu0 %v2087
        %2308 = vmatpush.bf16.msra.mxu0 %v2086
        %2309 = vmatpush.bf16.msra.mxu0 %v2085
        %2310 = vmatmul.bf16.gmra.mxu0 %v2291
        %v2311 = vpop.f32.mrf.mxu0
        %v2312 = vadd.f32 0.0, %v2311
        %v2313 = vpop.f32.mrf.mxu0
        %v2314 = vadd.f32 0.0, %v2313
        %2315 = vmatmul.bf16.gmra.mxu0 %v2294
        %v2316 = vpop.f32.mrf.mxu0
        %v2317 = vadd.f32 0.0, %v2316
        %v2318 = vpop.f32.mrf.mxu0
        %v2319 = vadd.f32 0.0, %v2318
        %2320 = vmatmul.bf16.gmra.mxu0 %v2297
        %v2321 = vpop.f32.mrf.mxu0
        %v2322 = vadd.f32 0.0, %v2321
        %v2323 = vpop.f32.mrf.mxu0
        %v2324 = vadd.f32 0.0, %v2323
        %2325 = vmatmul.bf16.gmra.mxu0 %v2300
        %v2326 = vpop.f32.mrf.mxu0
        %v2327 = vadd.f32 0.0, %v2326
        %v2328 = vpop.f32.mrf.mxu0
        %2329 = vdwg.mxu0
        %s2330 = scalar_lea.vmem [#allocation7], 2
        %v2331 = vld [vmem:[%s2330] sm:$0x1]
        %v2333 = vperm.slane %v2331, 0
        %v2335 = vmul.f32 %v2312, %v2333
        %v2336 = vmul.f32 %v2314, %v2333
        %v2337 = vmul.f32 %v2317, %v2333
        %v2338 = vmul.f32 %v2319, %v2333
        %v2339 = vmul.f32 %v2322, %v2333
        %v2340 = vmul.f32 %v2324, %v2333
        %v2341 = vmul.f32 %v2327, %v2333
        %v2342 = vadd.f32 %v2257, %v2335
        %v2343 = vadd.f32 %v2258, %v2336
        %v2344 = vadd.f32 %v2259, %v2337
        %v2345 = vadd.f32 %v2260, %v2338
        %v2346 = vadd.f32 %v2261, %v2339
        %v2347 = vadd.f32 %v2262, %v2340
        %v2348 = vadd.f32 %v2263, %v2341
        %s2349 = scalar_lea.vmem [#allocation4], 84
        %v2350 = vld [vmem:[%s2349] sm:$0xf]
        %v2351 = vld [vmem:[%s2349 + $0x4] sm:$0xf]
        %v2352 = vld [vmem:[%s2349 + $0x8] sm:$0xf]
        %v2353 = vld [vmem:[%s2349 + $0xc] sm:$0xf]
        %v2354 = vld [vmem:[%s2349 + $0x10] sm:$0xf]
        %v2355 = vld [vmem:[%s2349 + $0x14] sm:$0xf]
        %v2356 = vld [vmem:[%s2349 + $0x18] sm:$0x1]
        %v2364 = vunpack.c.l.b16 %v2350
        %v2365 = vunpack.c.l.b16 %v2351
        %v2366 = vunpack.c.l.b16 %v2352
        %v2367 = vunpack.c.l.b16 %v2353
        %v2368 = vunpack.c.l.b16 %v2354
        %v2369 = vunpack.c.l.b16 %v2355
        %v2370 = vunpack.c.l.b16 %v2356
        %v2371 = vpack.c.b16 %v2365, %v2364
        %v2372 = vpack.c.b16 %v2367, %v2366
        %v2373 = vpack.c.b16 %v2369, %v2368
        %v2374 = vpack.c.b16 %v2370, %v2370
        %v2376 = vsel %vm2114, %v2371, 0
        %v2379 = vsel %vm2114, %v2372, 0
        %v2382 = vsel %vm2114, %v2373, 0
        %v2385 = vsel %vm2114, %v2374, 0
        %2387 = vmatpush.bf16.msra.mxu0 0
        %2388 = vmatpush.bf16.msra.mxu0 0
        %2389 = vmatpush.bf16.msra.mxu0 0
        %2390 = vmatpush.bf16.msra.mxu0 0
        %2391 = vmatpush.bf16.msra.mxu0 %v2131
        %2392 = vmatpush.bf16.msra.mxu0 %v2087
        %2393 = vmatpush.bf16.msra.mxu0 %v2086
        %2394 = vmatpush.bf16.msra.mxu0 %v2085
        %2395 = vmatmul.bf16.gmra.mxu0 %v2376
        %v2396 = vpop.f32.mrf.mxu0
        %v2397 = vadd.f32 0.0, %v2396
        %v2398 = vpop.f32.mrf.mxu0
        %v2399 = vadd.f32 0.0, %v2398
        %2400 = vmatmul.bf16.gmra.mxu0 %v2379
        %v2401 = vpop.f32.mrf.mxu0
        %v2402 = vadd.f32 0.0, %v2401
        %v2403 = vpop.f32.mrf.mxu0
        %v2404 = vadd.f32 0.0, %v2403
        %2405 = vmatmul.bf16.gmra.mxu0 %v2382
        %v2406 = vpop.f32.mrf.mxu0
        %v2407 = vadd.f32 0.0, %v2406
        %v2408 = vpop.f32.mrf.mxu0
        %v2409 = vadd.f32 0.0, %v2408
        %2410 = vmatmul.bf16.gmra.mxu0 %v2385
        %v2411 = vpop.f32.mrf.mxu0
        %v2412 = vadd.f32 0.0, %v2411
        %v2413 = vpop.f32.mrf.mxu0
        %2414 = vdwg.mxu0
        %s2415 = scalar_lea.vmem [#allocation7], 3
        %v2416 = vld [vmem:[%s2415] sm:$0x1]
        %v2418 = vperm.slane %v2416, 0
        %v2420 = vmul.f32 %v2397, %v2418
        %v2421 = vmul.f32 %v2399, %v2418
        %v2422 = vmul.f32 %v2402, %v2418
        %v2423 = vmul.f32 %v2404, %v2418
        %v2424 = vmul.f32 %v2407, %v2418
        %v2425 = vmul.f32 %v2409, %v2418
        %v2426 = vmul.f32 %v2412, %v2418
        %v2427 = vadd.f32 %v2342, %v2420
        %v2428 = vadd.f32 %v2343, %v2421
        %v2429 = vadd.f32 %v2344, %v2422
        %v2430 = vadd.f32 %v2345, %v2423
        %v2431 = vadd.f32 %v2346, %v2424
        %v2432 = vadd.f32 %v2347, %v2425
        %v2433 = vadd.f32 %v2348, %v2426
        %s2434 = scalar_lea.vmem [#allocation4], 112
        %v2435 = vld [vmem:[%s2434] sm:$0xf]
        %v2436 = vld [vmem:[%s2434 + $0x4] sm:$0xf]
        %v2437 = vld [vmem:[%s2434 + $0x8] sm:$0xf]
        %v2438 = vld [vmem:[%s2434 + $0xc] sm:$0xf]
        %v2439 = vld [vmem:[%s2434 + $0x10] sm:$0xf]
        %v2440 = vld [vmem:[%s2434 + $0x14] sm:$0xf]
        %v2441 = vld [vmem:[%s2434 + $0x18] sm:$0x1]
        %v2449 = vunpack.c.l.b16 %v2435
        %v2450 = vunpack.c.l.b16 %v2436
        %v2451 = vunpack.c.l.b16 %v2437
        %v2452 = vunpack.c.l.b16 %v2438
        %v2453 = vunpack.c.l.b16 %v2439
        %v2454 = vunpack.c.l.b16 %v2440
        %v2455 = vunpack.c.l.b16 %v2441
        %v2456 = vpack.c.b16 %v2450, %v2449
        %v2457 = vpack.c.b16 %v2452, %v2451
        %v2458 = vpack.c.b16 %v2454, %v2453
        %v2459 = vpack.c.b16 %v2455, %v2455
        %v2461 = vsel %vm2114, %v2456, 0
        %v2464 = vsel %vm2114, %v2457, 0
        %v2467 = vsel %vm2114, %v2458, 0
        %v2470 = vsel %vm2114, %v2459, 0
        %2472 = vmatpush.bf16.msra.mxu0 0
        %2473 = vmatpush.bf16.msra.mxu0 0
        %2474 = vmatpush.bf16.msra.mxu0 0
        %2475 = vmatpush.bf16.msra.mxu0 0
        %2476 = vmatpush.bf16.msra.mxu0 %v2131
        %2477 = vmatpush.bf16.msra.mxu0 %v2087
        %2478 = vmatpush.bf16.msra.mxu0 %v2086
        %2479 = vmatpush.bf16.msra.mxu0 %v2085
        %2480 = vmatmul.bf16.gmra.mxu0 %v2461
        %v2481 = vpop.f32.mrf.mxu0
        %v2482 = vadd.f32 0.0, %v2481
        %v2483 = vpop.f32.mrf.mxu0
        %v2484 = vadd.f32 0.0, %v2483
        %2485 = vmatmul.bf16.gmra.mxu0 %v2464
        %v2486 = vpop.f32.mrf.mxu0
        %v2487 = vadd.f32 0.0, %v2486
        %v2488 = vpop.f32.mrf.mxu0
        %v2489 = vadd.f32 0.0, %v2488
        %2490 = vmatmul.bf16.gmra.mxu0 %v2467
        %v2491 = vpop.f32.mrf.mxu0
        %v2492 = vadd.f32 0.0, %v2491
        %v2493 = vpop.f32.mrf.mxu0
        %v2494 = vadd.f32 0.0, %v2493
        %2495 = vmatmul.bf16.gmra.mxu0 %v2470
        %v2496 = vpop.f32.mrf.mxu0
        %v2497 = vadd.f32 0.0, %v2496
        %v2498 = vpop.f32.mrf.mxu0
        %2499 = vdwg.mxu0
        %s2500 = scalar_lea.vmem [#allocation7], 4
        %v2501 = vld [vmem:[%s2500] sm:$0x1]
        %v2503 = vperm.slane %v2501, 0
        %v2505 = vmul.f32 %v2482, %v2503
        %v2506 = vmul.f32 %v2484, %v2503
        %v2507 = vmul.f32 %v2487, %v2503
        %v2508 = vmul.f32 %v2489, %v2503
        %v2509 = vmul.f32 %v2492, %v2503
        %v2510 = vmul.f32 %v2494, %v2503
        %v2511 = vmul.f32 %v2497, %v2503
        %v2512 = vadd.f32 %v2427, %v2505
        %v2513 = vadd.f32 %v2428, %v2506
        %v2514 = vadd.f32 %v2429, %v2507
        %v2515 = vadd.f32 %v2430, %v2508
        %v2516 = vadd.f32 %v2431, %v2509
        %v2517 = vadd.f32 %v2432, %v2510
        %v2518 = vadd.f32 %v2433, %v2511
        %s2519 = scalar_lea.vmem [#allocation4], 140
        %v2520 = vld [vmem:[%s2519] sm:$0xf]
        %v2521 = vld [vmem:[%s2519 + $0x4] sm:$0xf]
        %v2522 = vld [vmem:[%s2519 + $0x8] sm:$0xf]
        %v2523 = vld [vmem:[%s2519 + $0xc] sm:$0xf]
        %v2524 = vld [vmem:[%s2519 + $0x10] sm:$0xf]
        %v2525 = vld [vmem:[%s2519 + $0x14] sm:$0xf]
        %v2526 = vld [vmem:[%s2519 + $0x18] sm:$0x1]
        %v2534 = vunpack.c.l.b16 %v2520
        %v2535 = vunpack.c.l.b16 %v2521
        %v2536 = vunpack.c.l.b16 %v2522
        %v2537 = vunpack.c.l.b16 %v2523
        %v2538 = vunpack.c.l.b16 %v2524
        %v2539 = vunpack.c.l.b16 %v2525
        %v2540 = vunpack.c.l.b16 %v2526
        %v2541 = vpack.c.b16 %v2535, %v2534
        %v2542 = vpack.c.b16 %v2537, %v2536
        %v2543 = vpack.c.b16 %v2539, %v2538
        %v2544 = vpack.c.b16 %v2540, %v2540
        %v2546 = vsel %vm2114, %v2541, 0
        %v2549 = vsel %vm2114, %v2542, 0
        %v2552 = vsel %vm2114, %v2543, 0
        %v2555 = vsel %vm2114, %v2544, 0
        %2557 = vmatpush.bf16.msra.mxu0 0
        %2558 = vmatpush.bf16.msra.mxu0 0
        %2559 = vmatpush.bf16.msra.mxu0 0
        %2560 = vmatpush.bf16.msra.mxu0 0
        %2561 = vmatpush.bf16.msra.mxu0 %v2131
        %2562 = vmatpush.bf16.msra.mxu0 %v2087
        %2563 = vmatpush.bf16.msra.mxu0 %v2086
        %2564 = vmatpush.bf16.msra.mxu0 %v2085
        %2565 = vmatmul.bf16.gmra.mxu0 %v2546
        %v2566 = vpop.f32.mrf.mxu0
        %v2567 = vadd.f32 0.0, %v2566
        %v2568 = vpop.f32.mrf.mxu0
        %v2569 = vadd.f32 0.0, %v2568
        %2570 = vmatmul.bf16.gmra.mxu0 %v2549
        %v2571 = vpop.f32.mrf.mxu0
        %v2572 = vadd.f32 0.0, %v2571
        %v2573 = vpop.f32.mrf.mxu0
        %v2574 = vadd.f32 0.0, %v2573
        %2575 = vmatmul.bf16.gmra.mxu0 %v2552
        %v2576 = vpop.f32.mrf.mxu0
        %v2577 = vadd.f32 0.0, %v2576
        %v2578 = vpop.f32.mrf.mxu0
        %v2579 = vadd.f32 0.0, %v2578
        %2580 = vmatmul.bf16.gmra.mxu0 %v2555
        %v2581 = vpop.f32.mrf.mxu0
        %v2582 = vadd.f32 0.0, %v2581
        %v2583 = vpop.f32.mrf.mxu0
        %2584 = vdwg.mxu0
        %s2585 = scalar_lea.vmem [#allocation7], 5
        %v2586 = vld [vmem:[%s2585] sm:$0x1]
        %v2588 = vperm.slane %v2586, 0
        %v2590 = vmul.f32 %v2567, %v2588
        %v2591 = vmul.f32 %v2569, %v2588
        %v2592 = vmul.f32 %v2572, %v2588
        %v2593 = vmul.f32 %v2574, %v2588
        %v2594 = vmul.f32 %v2577, %v2588
        %v2595 = vmul.f32 %v2579, %v2588
        %v2596 = vmul.f32 %v2582, %v2588
        %v2597 = vadd.f32 %v2512, %v2590
        %v2598 = vadd.f32 %v2513, %v2591
        %v2599 = vadd.f32 %v2514, %v2592
        %v2600 = vadd.f32 %v2515, %v2593
        %v2601 = vadd.f32 %v2516, %v2594
        %v2602 = vadd.f32 %v2517, %v2595
        %v2603 = vadd.f32 %v2518, %v2596
        %s2604 = scalar_lea.vmem [#allocation4], 168
        %v2605 = vld [vmem:[%s2604] sm:$0xf]
        %v2606 = vld [vmem:[%s2604 + $0x4] sm:$0xf]
        %v2607 = vld [vmem:[%s2604 + $0x8] sm:$0xf]
        %v2608 = vld [vmem:[%s2604 + $0xc] sm:$0xf]
        %v2609 = vld [vmem:[%s2604 + $0x10] sm:$0xf]
        %v2610 = vld [vmem:[%s2604 + $0x14] sm:$0xf]
        %v2611 = vld [vmem:[%s2604 + $0x18] sm:$0x1]
        %v2619 = vunpack.c.l.b16 %v2605
        %v2620 = vunpack.c.l.b16 %v2606
        %v2621 = vunpack.c.l.b16 %v2607
        %v2622 = vunpack.c.l.b16 %v2608
        %v2623 = vunpack.c.l.b16 %v2609
        %v2624 = vunpack.c.l.b16 %v2610
        %v2625 = vunpack.c.l.b16 %v2611
        %v2626 = vpack.c.b16 %v2620, %v2619
        %v2627 = vpack.c.b16 %v2622, %v2621
        %v2628 = vpack.c.b16 %v2624, %v2623
        %v2629 = vpack.c.b16 %v2625, %v2625
        %v2631 = vsel %vm2114, %v2626, 0
        %v2634 = vsel %vm2114, %v2627, 0
        %v2637 = vsel %vm2114, %v2628, 0
        %v2640 = vsel %vm2114, %v2629, 0
        %2642 = vmatpush.bf16.msra.mxu0 0
        %2643 = vmatpush.bf16.msra.mxu0 0
        %2644 = vmatpush.bf16.msra.mxu0 0
        %2645 = vmatpush.bf16.msra.mxu0 0
        %2646 = vmatpush.bf16.msra.mxu0 %v2131
        %2647 = vmatpush.bf16.msra.mxu0 %v2087
        %2648 = vmatpush.bf16.msra.mxu0 %v2086
        %2649 = vmatpush.bf16.msra.mxu0 %v2085
        %2650 = vmatmul.bf16.gmra.mxu0 %v2631
        %v2651 = vpop.f32.mrf.mxu0
        %v2652 = vadd.f32 0.0, %v2651
        %v2653 = vpop.f32.mrf.mxu0
        %v2654 = vadd.f32 0.0, %v2653
        %2655 = vmatmul.bf16.gmra.mxu0 %v2634
        %v2656 = vpop.f32.mrf.mxu0
        %v2657 = vadd.f32 0.0, %v2656
        %v2658 = vpop.f32.mrf.mxu0
        %v2659 = vadd.f32 0.0, %v2658
        %2660 = vmatmul.bf16.gmra.mxu0 %v2637
        %v2661 = vpop.f32.mrf.mxu0
        %v2662 = vadd.f32 0.0, %v2661
        %v2663 = vpop.f32.mrf.mxu0
        %v2664 = vadd.f32 0.0, %v2663
        %2665 = vmatmul.bf16.gmra.mxu0 %v2640
        %v2666 = vpop.f32.mrf.mxu0
        %v2667 = vadd.f32 0.0, %v2666
        %v2668 = vpop.f32.mrf.mxu0
        %2669 = vdwg.mxu0
        %s2670 = scalar_lea.vmem [#allocation7], 6
        %v2671 = vld [vmem:[%s2670] sm:$0x1]
        %v2673 = vperm.slane %v2671, 0
        %v2675 = vmul.f32 %v2652, %v2673
        %v2676 = vmul.f32 %v2654, %v2673
        %v2677 = vmul.f32 %v2657, %v2673
        %v2678 = vmul.f32 %v2659, %v2673
        %v2679 = vmul.f32 %v2662, %v2673
        %v2680 = vmul.f32 %v2664, %v2673
        %v2681 = vmul.f32 %v2667, %v2673
        %v2682 = vadd.f32 %v2597, %v2675
        %v2683 = vadd.f32 %v2598, %v2676
        %v2684 = vadd.f32 %v2599, %v2677
        %v2685 = vadd.f32 %v2600, %v2678
        %v2686 = vadd.f32 %v2601, %v2679
        %v2687 = vadd.f32 %v2602, %v2680
        %v2688 = vadd.f32 %v2603, %v2681
        %s2689 = scalar_lea.vmem [#allocation4], 196
        %v2690 = vld [vmem:[%s2689] sm:$0xf]
        %v2691 = vld [vmem:[%s2689 + $0x4] sm:$0xf]
        %v2692 = vld [vmem:[%s2689 + $0x8] sm:$0xf]
        %v2693 = vld [vmem:[%s2689 + $0xc] sm:$0xf]
        %v2694 = vld [vmem:[%s2689 + $0x10] sm:$0xf]
        %v2695 = vld [vmem:[%s2689 + $0x14] sm:$0xf]
        %v2696 = vld [vmem:[%s2689 + $0x18] sm:$0x1]
        %v2704 = vunpack.c.l.b16 %v2690
        %v2705 = vunpack.c.l.b16 %v2691
        %v2706 = vunpack.c.l.b16 %v2692
        %v2707 = vunpack.c.l.b16 %v2693
        %v2708 = vunpack.c.l.b16 %v2694
        %v2709 = vunpack.c.l.b16 %v2695
        %v2710 = vunpack.c.l.b16 %v2696
        %v2711 = vpack.c.b16 %v2705, %v2704
        %v2712 = vpack.c.b16 %v2707, %v2706
        %v2713 = vpack.c.b16 %v2709, %v2708
        %v2714 = vpack.c.b16 %v2710, %v2710
        %v2716 = vsel %vm2114, %v2711, 0
        %v2719 = vsel %vm2114, %v2712, 0
        %v2722 = vsel %vm2114, %v2713, 0
        %v2725 = vsel %vm2114, %v2714, 0
        %2727 = vmatpush.bf16.msra.mxu0 0
        %2728 = vmatpush.bf16.msra.mxu0 0
        %2729 = vmatpush.bf16.msra.mxu0 0
        %2730 = vmatpush.bf16.msra.mxu0 0
        %2731 = vmatpush.bf16.msra.mxu0 %v2131
        %2732 = vmatpush.bf16.msra.mxu0 %v2087
        %2733 = vmatpush.bf16.msra.mxu0 %v2086
        %2734 = vmatpush.bf16.msra.mxu0 %v2085
        %2735 = vmatmul.bf16.gmra.mxu0 %v2716
        %v2736 = vpop.f32.mrf.mxu0
        %v2737 = vadd.f32 0.0, %v2736
        %v2738 = vpop.f32.mrf.mxu0
        %v2739 = vadd.f32 0.0, %v2738
        %2740 = vmatmul.bf16.gmra.mxu0 %v2719
        %v2741 = vpop.f32.mrf.mxu0
        %v2742 = vadd.f32 0.0, %v2741
        %v2743 = vpop.f32.mrf.mxu0
        %v2744 = vadd.f32 0.0, %v2743
        %2745 = vmatmul.bf16.gmra.mxu0 %v2722
        %v2746 = vpop.f32.mrf.mxu0
        %v2747 = vadd.f32 0.0, %v2746
        %v2748 = vpop.f32.mrf.mxu0
        %v2749 = vadd.f32 0.0, %v2748
        %2750 = vmatmul.bf16.gmra.mxu0 %v2725
        %v2751 = vpop.f32.mrf.mxu0
        %v2752 = vadd.f32 0.0, %v2751
        %v2753 = vpop.f32.mrf.mxu0
        %2754 = vdwg.mxu0
        %s2755 = scalar_lea.vmem [#allocation7], 7
        %v2756 = vld [vmem:[%s2755] sm:$0x1]
        %v2758 = vperm.slane %v2756, 0
        %v2760 = vmul.f32 %v2737, %v2758
        %v2761 = vmul.f32 %v2739, %v2758
        %v2762 = vmul.f32 %v2742, %v2758
        %v2763 = vmul.f32 %v2744, %v2758
        %v2764 = vmul.f32 %v2747, %v2758
        %v2765 = vmul.f32 %v2749, %v2758
        %v2766 = vmul.f32 %v2752, %v2758
        %v2767 = vadd.f32 %v2682, %v2760
        %v2768 = vadd.f32 %v2683, %v2761
        %v2769 = vadd.f32 %v2684, %v2762
        %v2770 = vadd.f32 %v2685, %v2763
        %v2771 = vadd.f32 %v2686, %v2764
        %v2772 = vadd.f32 %v2687, %v2765
        %v2773 = vadd.f32 %v2688, %v2766
        %s2774 = scalar_lea.vmem [#allocation4], 224
        %v2775 = vld [vmem:[%s2774] sm:$0xf]
        %v2776 = vld [vmem:[%s2774 + $0x4] sm:$0xf]
        %v2777 = vld [vmem:[%s2774 + $0x8] sm:$0xf]
        %v2778 = vld [vmem:[%s2774 + $0xc] sm:$0xf]
        %v2779 = vld [vmem:[%s2774 + $0x10] sm:$0xf]
        %v2780 = vld [vmem:[%s2774 + $0x14] sm:$0xf]
        %v2781 = vld [vmem:[%s2774 + $0x18] sm:$0x1]
        %v2789 = vunpack.c.l.b16 %v2775
        %v2790 = vunpack.c.l.b16 %v2776
        %v2791 = vunpack.c.l.b16 %v2777
        %v2792 = vunpack.c.l.b16 %v2778
        %v2793 = vunpack.c.l.b16 %v2779
        %v2794 = vunpack.c.l.b16 %v2780
        %v2795 = vunpack.c.l.b16 %v2781
        %v2796 = vpack.c.b16 %v2790, %v2789
        %v2797 = vpack.c.b16 %v2792, %v2791
        %v2798 = vpack.c.b16 %v2794, %v2793
        %v2799 = vpack.c.b16 %v2795, %v2795
        %v2801 = vsel %vm2114, %v2796, 0
        %v2804 = vsel %vm2114, %v2797, 0
        %v2807 = vsel %vm2114, %v2798, 0
        %v2810 = vsel %vm2114, %v2799, 0
        %2812 = vmatpush.bf16.msra.mxu0 0
        %2813 = vmatpush.bf16.msra.mxu0 0
        %2814 = vmatpush.bf16.msra.mxu0 0
        %2815 = vmatpush.bf16.msra.mxu0 0
        %2816 = vmatpush.bf16.msra.mxu0 %v2131
        %2817 = vmatpush.bf16.msra.mxu0 %v2087
        %2818 = vmatpush.bf16.msra.mxu0 %v2086
        %2819 = vmatpush.bf16.msra.mxu0 %v2085
        %2820 = vmatmul.bf16.gmra.mxu0 %v2801
        %v2821 = vpop.f32.mrf.mxu0
        %v2822 = vadd.f32 0.0, %v2821
        %v2823 = vpop.f32.mrf.mxu0
        %v2824 = vadd.f32 0.0, %v2823
        %2825 = vmatmul.bf16.gmra.mxu0 %v2804
        %v2826 = vpop.f32.mrf.mxu0
        %v2827 = vadd.f32 0.0, %v2826
        %v2828 = vpop.f32.mrf.mxu0
        %v2829 = vadd.f32 0.0, %v2828
        %2830 = vmatmul.bf16.gmra.mxu0 %v2807
        %v2831 = vpop.f32.mrf.mxu0
        %v2832 = vadd.f32 0.0, %v2831
        %v2833 = vpop.f32.mrf.mxu0
        %v2834 = vadd.f32 0.0, %v2833
        %2835 = vmatmul.bf16.gmra.mxu0 %v2810
        %v2836 = vpop.f32.mrf.mxu0
        %v2837 = vadd.f32 0.0, %v2836
        %v2838 = vpop.f32.mrf.mxu0
        %2839 = vdwg.mxu0
        %s2840 = scalar_lea.vmem [#allocation7], 8
        %v2841 = vld [vmem:[%s2840] sm:$0x1]
        %v2843 = vperm.slane %v2841, 0
        %v2845 = vmul.f32 %v2822, %v2843
        %v2846 = vmul.f32 %v2824, %v2843
        %v2847 = vmul.f32 %v2827, %v2843
        %v2848 = vmul.f32 %v2829, %v2843
        %v2849 = vmul.f32 %v2832, %v2843
        %v2850 = vmul.f32 %v2834, %v2843
        %v2851 = vmul.f32 %v2837, %v2843
        %v2852 = vadd.f32 %v2767, %v2845
        %v2853 = vadd.f32 %v2768, %v2846
        %v2854 = vadd.f32 %v2769, %v2847
        %v2855 = vadd.f32 %v2770, %v2848
        %v2856 = vadd.f32 %v2771, %v2849
        %v2857 = vadd.f32 %v2772, %v2850
        %v2858 = vadd.f32 %v2773, %v2851
        %v2860 = vperm.slane %v2084, 0
        %v2862 = vadd.f32 %v2852, %v2860
        %v2863 = vadd.f32 %v2853, %v2860
        %v2864 = vadd.f32 %v2854, %v2860
        %v2865 = vadd.f32 %v2855, %v2860
        %v2866 = vadd.f32 %v2856, %v2860
        %v2867 = vadd.f32 %v2857, %v2860
        %v2868 = vadd.f32 %v2858, %v2860
        %v2869 = vmax.f32 %v2862, 0.0
        %v2870 = vmax.f32 %v2863, 0.0
        %v2871 = vmax.f32 %v2864, 0.0
        %v2872 = vmax.f32 %v2865, 0.0
        %v2873 = vmax.f32 %v2866, 0.0
        %v2874 = vmax.f32 %v2867, 0.0
        %v2875 = vmax.f32 %v2868, 0.0
        %s2876 = scalar_lea.vmem %s4, 64
        %v2877 = vld [vmem:[%s2876] sm:$0xf]
        %v2878 = vld [vmem:[%s2876 + $0x4] sm:$0xf]
        %v2879 = vld [vmem:[%s2876 + $0x8] sm:$0xf]
        %v2880 = vld [vmem:[%s2876 + $0xc] sm:$0xf]
        %v2881 = vld [vmem:[%s2876 + $0x10] sm:$0xf]
        %v2882 = vld [vmem:[%s2876 + $0x14] sm:$0xf]
        %v2883 = vld [vmem:[%s2876 + $0x18] sm:$0xf]
        %v2884 = vld [vmem:[%s2876 + $0x1c] sm:$0xf]
        %v2885 = vld [vmem:[%s2876 + $0x20] sm:$0xf]
        %v2886 = vld [vmem:[%s2876 + $0x24] sm:$0xf]
        %v2887 = vld [vmem:[%s2876 + $0x28] sm:$0xf]
        %v2888 = vld [vmem:[%s2876 + $0x2c] sm:$0xf]
        %v2889 = vld [vmem:[%s2876 + $0x30] sm:$0xf]
        %v2890 = vld [vmem:[%s2876 + $0x34] sm:$0xf]
        %v2891 = vld [vmem:[%s2876 + $0x38] sm:$0xf]
        %v2892 = vld [vmem:[%s2876 + $0x3c] sm:$0xf]
        %s2893 = scalar_lea.vmem [#allocation9], 3
        %v2894 = vld [vmem:[%s2893] sm:$0x1]
        %v2895 = vpack.c.bf16 %v2870, %v2869
        %v2896 = vpack.c.bf16 %v2872, %v2871
        %v2897 = vpack.c.bf16 %v2874, %v2873
        %v2898 = vpack.c.bf16 %v2875, %v2875
        %v2900 = vperm.slane %v2894, 0
        %v2918 = vunpack.c.l.b16 %v2877
        %v2919 = vunpack.c.l.b16 %v2878
        %v2920 = vunpack.c.l.b16 %v2879
        %v2921 = vunpack.c.l.b16 %v2880
        %v2922 = vunpack.c.l.b16 %v2881
        %v2923 = vunpack.c.l.b16 %v2882
        %v2924 = vunpack.c.l.b16 %v2883
        %v2925 = vunpack.c.l.b16 %v2884
        %v2926 = vunpack.c.l.b16 %v2885
        %v2927 = vunpack.c.l.b16 %v2886
        %v2928 = vunpack.c.l.b16 %v2887
        %v2929 = vunpack.c.l.b16 %v2888
        %v2930 = vunpack.c.l.b16 %v2889
        %v2931 = vunpack.c.l.b16 %v2890
        %v2932 = vunpack.c.l.b16 %v2891
        %v2933 = vunpack.c.l.b16 %v2892
        %v2934 = vpack.c.b16 %v2919, %v2918
        %v2935 = vpack.c.b16 %v2921, %v2920
        %v2936 = vpack.c.b16 %v2923, %v2922
        %v2937 = vpack.c.b16 %v2925, %v2924
        %v2938 = vpack.c.b16 %v2927, %v2926
        %v2939 = vpack.c.b16 %v2929, %v2928
        %v2940 = vpack.c.b16 %v2931, %v2930
        %v2941 = vpack.c.b16 %v2933, %v2932
        %2950 = vmatpush.bf16.msra.mxu0 %v2941
        %2951 = vmatpush.bf16.msra.mxu0 %v2940
        %2952 = vmatpush.bf16.msra.mxu0 %v2939
        %2953 = vmatpush.bf16.msra.mxu0 %v2938
        %2954 = vmatpush.bf16.msra.mxu0 %v2937
        %2955 = vmatpush.bf16.msra.mxu0 %v2936
        %2956 = vmatpush.bf16.msra.mxu0 %v2935
        %2957 = vmatpush.bf16.msra.mxu0 %v2934
        %2958 = vmatmul.bf16.gmra.mxu0 %v2895
        %v2959 = vpop.f32.mrf.mxu0
        %v2960 = vadd.f32 %v2900, %v2959
        %v2961 = vpop.f32.mrf.mxu0
        %v2962 = vadd.f32 %v2900, %v2961
        %2963 = vmatmul.bf16.gmra.mxu0 %v2896
        %v2964 = vpop.f32.mrf.mxu0
        %v2965 = vadd.f32 %v2900, %v2964
        %v2966 = vpop.f32.mrf.mxu0
        %v2967 = vadd.f32 %v2900, %v2966
        %2968 = vmatmul.bf16.gmra.mxu0 %v2897
        %v2969 = vpop.f32.mrf.mxu0
        %v2970 = vadd.f32 %v2900, %v2969
        %v2971 = vpop.f32.mrf.mxu0
        %v2972 = vadd.f32 %v2900, %v2971
        %2973 = vmatmul.bf16.gmra.mxu0 %v2898
        %v2974 = vpop.f32.mrf.mxu0
        %v2975 = vadd.f32 %v2900, %v2974
        %v2976 = vpop.f32.mrf.mxu0
        %2977 = vdwg.mxu0
        %v2978 = vmax.f32 %v2960, 0.0
        %v2979 = vmax.f32 %v2962, 0.0
        %v2980 = vmax.f32 %v2965, 0.0
        %v2981 = vmax.f32 %v2967, 0.0
        %v2982 = vmax.f32 %v2970, 0.0
        %v2983 = vmax.f32 %v2972, 0.0
        %v2984 = vmax.f32 %v2975, 0.0
        %s2985 = scalar_lea.vmem %s4, 128
        %v2986 = vld [vmem:[%s2985] sm:$0xf]
        %v2987 = vld [vmem:[%s2985 + $0x4] sm:$0xf]
        %v2988 = vld [vmem:[%s2985 + $0x8] sm:$0xf]
        %v2989 = vld [vmem:[%s2985 + $0xc] sm:$0xf]
        %v2990 = vld [vmem:[%s2985 + $0x10] sm:$0xf]
        %v2991 = vld [vmem:[%s2985 + $0x14] sm:$0xf]
        %v2992 = vld [vmem:[%s2985 + $0x18] sm:$0xf]
        %v2993 = vld [vmem:[%s2985 + $0x1c] sm:$0xf]
        %v2994 = vld [vmem:[%s2985 + $0x20] sm:$0xf]
        %v2995 = vld [vmem:[%s2985 + $0x24] sm:$0xf]
        %v2996 = vld [vmem:[%s2985 + $0x28] sm:$0xf]
        %v2997 = vld [vmem:[%s2985 + $0x2c] sm:$0xf]
        %v2998 = vld [vmem:[%s2985 + $0x30] sm:$0xf]
        %v2999 = vld [vmem:[%s2985 + $0x34] sm:$0xf]
        %v3000 = vld [vmem:[%s2985 + $0x38] sm:$0xf]
        %v3001 = vld [vmem:[%s2985 + $0x3c] sm:$0xf]
        %s3002 = scalar_lea.vmem [#allocation9], 4
        %v3003 = vld [vmem:[%s3002] sm:$0x1]
        %v3004 = vpack.c.bf16 %v2979, %v2978
        %v3005 = vpack.c.bf16 %v2981, %v2980
        %v3006 = vpack.c.bf16 %v2983, %v2982
        %v3007 = vpack.c.bf16 %v2984, %v2984
        %v3009 = vperm.slane %v3003, 0
        %v3027 = vunpack.c.l.b16 %v2986
        %v3028 = vunpack.c.l.b16 %v2987
        %v3029 = vunpack.c.l.b16 %v2988
        %v3030 = vunpack.c.l.b16 %v2989
        %v3031 = vunpack.c.l.b16 %v2990
        %v3032 = vunpack.c.l.b16 %v2991
        %v3033 = vunpack.c.l.b16 %v2992
        %v3034 = vunpack.c.l.b16 %v2993
        %v3035 = vunpack.c.l.b16 %v2994
        %v3036 = vunpack.c.l.b16 %v2995
        %v3037 = vunpack.c.l.b16 %v2996
        %v3038 = vunpack.c.l.b16 %v2997
        %v3039 = vunpack.c.l.b16 %v2998
        %v3040 = vunpack.c.l.b16 %v2999
        %v3041 = vunpack.c.l.b16 %v3000
        %v3042 = vunpack.c.l.b16 %v3001
        %v3043 = vpack.c.b16 %v3028, %v3027
        %v3044 = vpack.c.b16 %v3030, %v3029
        %v3045 = vpack.c.b16 %v3032, %v3031
        %v3046 = vpack.c.b16 %v3034, %v3033
        %v3047 = vpack.c.b16 %v3036, %v3035
        %v3048 = vpack.c.b16 %v3038, %v3037
        %v3049 = vpack.c.b16 %v3040, %v3039
        %v3050 = vpack.c.b16 %v3042, %v3041
        %3059 = vmatpush.bf16.msra.mxu0 %v3050
        %3060 = vmatpush.bf16.msra.mxu0 %v3049
        %3061 = vmatpush.bf16.msra.mxu0 %v3048
        %3062 = vmatpush.bf16.msra.mxu0 %v3047
        %3063 = vmatpush.bf16.msra.mxu0 %v3046
        %3064 = vmatpush.bf16.msra.mxu0 %v3045
        %3065 = vmatpush.bf16.msra.mxu0 %v3044
        %3066 = vmatpush.bf16.msra.mxu0 %v3043
        %3067 = vmatmul.bf16.gmra.mxu0 %v3004
        %v3068 = vpop.f32.mrf.mxu0
        %v3069 = vadd.f32 %v3009, %v3068
        %v3070 = vpop.f32.mrf.mxu0
        %v3071 = vadd.f32 %v3009, %v3070
        %3072 = vmatmul.bf16.gmra.mxu0 %v3005
        %v3073 = vpop.f32.mrf.mxu0
        %v3074 = vadd.f32 %v3009, %v3073
        %v3075 = vpop.f32.mrf.mxu0
        %v3076 = vadd.f32 %v3009, %v3075
        %3077 = vmatmul.bf16.gmra.mxu0 %v3006
        %v3078 = vpop.f32.mrf.mxu0
        %v3079 = vadd.f32 %v3009, %v3078
        %v3080 = vpop.f32.mrf.mxu0
        %v3081 = vadd.f32 %v3009, %v3080
        %3082 = vmatmul.bf16.gmra.mxu0 %v3007
        %v3083 = vpop.f32.mrf.mxu0
        %v3084 = vadd.f32 %v3009, %v3083
        %v3085 = vpop.f32.mrf.mxu0
        %3086 = vdwg.mxu0
        %v3087 = vadd.f32 %v3069, %v1968
        %v3088 = vadd.f32 %v3071, %v1969
        %v3089 = vadd.f32 %v3074, %v1970
        %v3090 = vadd.f32 %v3076, %v1971
        %v3091 = vadd.f32 %v3079, %v1972
        %v3092 = vadd.f32 %v3081, %v1973
        %v3093 = vadd.f32 %v3084, %v1974
        %s3094 = scalar_lea.vmem [#allocation9], 5
        %v3095 = vld [vmem:[%s3094] sm:$0x1]
        %v3096 = vpack.c.bf16 %v3088, %v3087
        %v3097 = vpack.c.bf16 %v3090, %v3089
        %v3098 = vpack.c.bf16 %v3092, %v3091
        %v3099 = vpack.c.bf16 %v3093, %v3093
        %v3101 = vand.u32 %v3099, %v2129
        %3103 = vmatpush.bf16.msra.mxu0 0
        %3104 = vmatpush.bf16.msra.mxu0 0
        %3105 = vmatpush.bf16.msra.mxu0 0
        %3106 = vmatpush.bf16.msra.mxu0 0
        %3107 = vmatpush.bf16.msra.mxu0 %v3101
        %3108 = vmatpush.bf16.msra.mxu0 %v3098
        %3109 = vmatpush.bf16.msra.mxu0 %v3097
        %3110 = vmatpush.bf16.msra.mxu0 %v3096
        %3111 = vmatmul.bf16.gmra.mxu0 %v2116
        %v3112 = vpop.f32.mrf.mxu0
        %v3113 = vadd.f32 0.0, %v3112
        %v3114 = vpop.f32.mrf.mxu0
        %v3115 = vadd.f32 0.0, %v3114
        %3116 = vmatmul.bf16.gmra.mxu0 %v2119
        %v3117 = vpop.f32.mrf.mxu0
        %v3118 = vadd.f32 0.0, %v3117
        %v3119 = vpop.f32.mrf.mxu0
        %v3120 = vadd.f32 0.0, %v3119
        %3121 = vmatmul.bf16.gmra.mxu0 %v2122
        %v3122 = vpop.f32.mrf.mxu0
        %v3123 = vadd.f32 0.0, %v3122
        %v3124 = vpop.f32.mrf.mxu0
        %v3125 = vadd.f32 0.0, %v3124
        %3126 = vmatmul.bf16.gmra.mxu0 %v2125
        %v3127 = vpop.f32.mrf.mxu0
        %v3128 = vadd.f32 0.0, %v3127
        %v3129 = vpop.f32.mrf.mxu0
        %3130 = vdwg.mxu0
        %v3131 = vpack.c.bf16 %v3115, %v3113
        %v3132 = vpack.c.bf16 %v3120, %v3118
        %v3133 = vpack.c.bf16 %v3125, %v3123
        %v3134 = vpack.c.bf16 %v3128, %v3128
        %v3135 = vld [vmem:[%s5] sm:$0xf]
        %v3136 = vld [vmem:[%s5 + $0x4] sm:$0xf]
        %v3137 = vld [vmem:[%s5 + $0x8] sm:$0xf]
        %v3138 = vld [vmem:[%s5 + $0xc] sm:$0xf]
        %v3139 = vld [vmem:[%s5 + $0x10] sm:$0xf]
        %v3140 = vld [vmem:[%s5 + $0x14] sm:$0xf]
        %v3141 = vld [vmem:[%s5 + $0x18] sm:$0xf]
        %v3142 = vld [vmem:[%s5 + $0x1c] sm:$0xf]
        %v3143 = vld [vmem:[%s5 + $0x20] sm:$0xf]
        %v3144 = vld [vmem:[%s5 + $0x24] sm:$0xf]
        %v3145 = vld [vmem:[%s5 + $0x28] sm:$0xf]
        %v3146 = vld [vmem:[%s5 + $0x2c] sm:$0xf]
        %v3147 = vld [vmem:[%s5 + $0x30] sm:$0xf]
        %v3148 = vld [vmem:[%s5 + $0x34] sm:$0xf]
        %v3149 = vld [vmem:[%s5 + $0x38] sm:$0xf]
        %v3150 = vld [vmem:[%s5 + $0x3c] sm:$0xf]
        %3151 = vmatpush.bf16.msra.mxu0 0
        %3152 = vmatpush.bf16.msra.mxu0 0
        %3153 = vmatpush.bf16.msra.mxu0 0
        %3154 = vmatpush.bf16.msra.mxu0 0
        %3155 = vmatpush.bf16.msra.mxu0 %v3101
        %3156 = vmatpush.bf16.msra.mxu0 %v3098
        %3157 = vmatpush.bf16.msra.mxu0 %v3097
        %3158 = vmatpush.bf16.msra.mxu0 %v3096
        %3159 = vmatmul.bf16.gmra.mxu0 %v2206
        %v3160 = vpop.f32.mrf.mxu0
        %v3161 = vadd.f32 0.0, %v3160
        %v3162 = vpop.f32.mrf.mxu0
        %v3163 = vadd.f32 0.0, %v3162
        %3164 = vmatmul.bf16.gmra.mxu0 %v2209
        %v3165 = vpop.f32.mrf.mxu0
        %v3166 = vadd.f32 0.0, %v3165
        %v3167 = vpop.f32.mrf.mxu0
        %v3168 = vadd.f32 0.0, %v3167
        %3169 = vmatmul.bf16.gmra.mxu0 %v2212
        %v3170 = vpop.f32.mrf.mxu0
        %v3171 = vadd.f32 0.0, %v3170
        %v3172 = vpop.f32.mrf.mxu0
        %v3173 = vadd.f32 0.0, %v3172
        %3174 = vmatmul.bf16.gmra.mxu0 %v2215
        %v3175 = vpop.f32.mrf.mxu0
        %v3176 = vadd.f32 0.0, %v3175
        %v3177 = vpop.f32.mrf.mxu0
        %3178 = vdwg.mxu0
        %v3179 = vpack.c.bf16 %v3163, %v3161
        %v3180 = vpack.c.bf16 %v3168, %v3166
        %v3181 = vpack.c.bf16 %v3173, %v3171
        %v3182 = vpack.c.bf16 %v3176, %v3176
        %s3183 = scalar_lea.vmem %s5, 64
        %v3184 = vld [vmem:[%s3183] sm:$0xf]
        %v3185 = vld [vmem:[%s3183 + $0x4] sm:$0xf]
        %v3186 = vld [vmem:[%s3183 + $0x8] sm:$0xf]
        %v3187 = vld [vmem:[%s3183 + $0xc] sm:$0xf]
        %v3188 = vld [vmem:[%s3183 + $0x10] sm:$0xf]
        %v3189 = vld [vmem:[%s3183 + $0x14] sm:$0xf]
        %v3190 = vld [vmem:[%s3183 + $0x18] sm:$0xf]
        %v3191 = vld [vmem:[%s3183 + $0x1c] sm:$0xf]
        %v3192 = vld [vmem:[%s3183 + $0x20] sm:$0xf]
        %v3193 = vld [vmem:[%s3183 + $0x24] sm:$0xf]
        %v3194 = vld [vmem:[%s3183 + $0x28] sm:$0xf]
        %v3195 = vld [vmem:[%s3183 + $0x2c] sm:$0xf]
        %v3196 = vld [vmem:[%s3183 + $0x30] sm:$0xf]
        %v3197 = vld [vmem:[%s3183 + $0x34] sm:$0xf]
        %v3198 = vld [vmem:[%s3183 + $0x38] sm:$0xf]
        %v3199 = vld [vmem:[%s3183 + $0x3c] sm:$0xf]
        %v3216 = vunpack.c.l.b16 %v3184
        %v3217 = vunpack.c.l.b16 %v3185
        %v3218 = vunpack.c.l.b16 %v3186
        %v3219 = vunpack.c.l.b16 %v3187
        %v3220 = vunpack.c.l.b16 %v3188
        %v3221 = vunpack.c.l.b16 %v3189
        %v3222 = vunpack.c.l.b16 %v3190
        %v3223 = vunpack.c.l.b16 %v3191
        %v3224 = vunpack.c.l.b16 %v3192
        %v3225 = vunpack.c.l.b16 %v3193
        %v3226 = vunpack.c.l.b16 %v3194
        %v3227 = vunpack.c.l.b16 %v3195
        %v3228 = vunpack.c.l.b16 %v3196
        %v3229 = vunpack.c.l.b16 %v3197
        %v3230 = vunpack.c.l.b16 %v3198
        %v3231 = vunpack.c.l.b16 %v3199
        %v3232 = vpack.c.b16 %v3217, %v3216
        %v3233 = vpack.c.b16 %v3219, %v3218
        %v3234 = vpack.c.b16 %v3221, %v3220
        %v3235 = vpack.c.b16 %v3223, %v3222
        %v3236 = vpack.c.b16 %v3225, %v3224
        %v3237 = vpack.c.b16 %v3227, %v3226
        %v3238 = vpack.c.b16 %v3229, %v3228
        %v3239 = vpack.c.b16 %v3231, %v3230
        %3248 = vmatpush.bf16.msra.mxu0 %v3239
        %3249 = vmatpush.bf16.msra.mxu0 %v3238
        %3250 = vmatpush.bf16.msra.mxu0 %v3237
        %3251 = vmatpush.bf16.msra.mxu0 %v3236
        %3252 = vmatpush.bf16.msra.mxu0 %v3235
        %3253 = vmatpush.bf16.msra.mxu0 %v3234
        %3254 = vmatpush.bf16.msra.mxu0 %v3233
        %3255 = vmatpush.bf16.msra.mxu0 %v3232
        %3256 = vmatmul.bf16.gmra.mxu0 %v3179
        %v3257 = vpop.f32.mrf.mxu0
        %v3258 = vadd.f32 0.0, %v3257
        %v3259 = vpop.f32.mrf.mxu0
        %v3260 = vadd.f32 0.0, %v3259
        %3261 = vmatmul.bf16.gmra.mxu0 %v3180
        %v3262 = vpop.f32.mrf.mxu0
        %v3263 = vadd.f32 0.0, %v3262
        %v3264 = vpop.f32.mrf.mxu0
        %v3265 = vadd.f32 0.0, %v3264
        %3266 = vmatmul.bf16.gmra.mxu0 %v3181
        %v3267 = vpop.f32.mrf.mxu0
        %v3268 = vadd.f32 0.0, %v3267
        %v3269 = vpop.f32.mrf.mxu0
        %v3270 = vadd.f32 0.0, %v3269
        %3271 = vmatmul.bf16.gmra.mxu0 %v3182
        %v3272 = vpop.f32.mrf.mxu0
        %v3273 = vadd.f32 0.0, %v3272
        %v3274 = vpop.f32.mrf.mxu0
        %3275 = vdwg.mxu0
        %v3292 = vunpack.c.l.b16 %v3135
        %v3293 = vunpack.c.l.b16 %v3136
        %v3294 = vunpack.c.l.b16 %v3137
        %v3295 = vunpack.c.l.b16 %v3138
        %v3296 = vunpack.c.l.b16 %v3139
        %v3297 = vunpack.c.l.b16 %v3140
        %v3298 = vunpack.c.l.b16 %v3141
        %v3299 = vunpack.c.l.b16 %v3142
        %v3300 = vunpack.c.l.b16 %v3143
        %v3301 = vunpack.c.l.b16 %v3144
        %v3302 = vunpack.c.l.b16 %v3145
        %v3303 = vunpack.c.l.b16 %v3146
        %v3304 = vunpack.c.l.b16 %v3147
        %v3305 = vunpack.c.l.b16 %v3148
        %v3306 = vunpack.c.l.b16 %v3149
        %v3307 = vunpack.c.l.b16 %v3150
        %v3308 = vpack.c.b16 %v3293, %v3292
        %v3309 = vpack.c.b16 %v3295, %v3294
        %v3310 = vpack.c.b16 %v3297, %v3296
        %v3311 = vpack.c.b16 %v3299, %v3298
        %v3312 = vpack.c.b16 %v3301, %v3300
        %v3313 = vpack.c.b16 %v3303, %v3302
        %v3314 = vpack.c.b16 %v3305, %v3304
        %v3315 = vpack.c.b16 %v3307, %v3306
        %3324 = vmatpush.bf16.msra.mxu0 %v3315
        %3325 = vmatpush.bf16.msra.mxu0 %v3314
        %3326 = vmatpush.bf16.msra.mxu0 %v3313
        %3327 = vmatpush.bf16.msra.mxu0 %v3312
        %3328 = vmatpush.bf16.msra.mxu0 %v3311
        %3329 = vmatpush.bf16.msra.mxu0 %v3310
        %3330 = vmatpush.bf16.msra.mxu0 %v3309
        %3331 = vmatpush.bf16.msra.mxu0 %v3308
        %3332 = vmatmul.bf16.gmra.mxu0 %v3131
        %v3333 = vpop.f32.mrf.mxu0
        %v3334 = vadd.f32 %v3258, %v3333
        %v3335 = vpop.f32.mrf.mxu0
        %v3336 = vadd.f32 %v3260, %v3335
        %3337 = vmatmul.bf16.gmra.mxu0 %v3132
        %v3338 = vpop.f32.mrf.mxu0
        %v3339 = vadd.f32 %v3263, %v3338
        %v3340 = vpop.f32.mrf.mxu0
        %v3341 = vadd.f32 %v3265, %v3340
        %3342 = vmatmul.bf16.gmra.mxu0 %v3133
        %v3343 = vpop.f32.mrf.mxu0
        %v3344 = vadd.f32 %v3268, %v3343
        %v3345 = vpop.f32.mrf.mxu0
        %v3346 = vadd.f32 %v3270, %v3345
        %3347 = vmatmul.bf16.gmra.mxu0 %v3134
        %v3348 = vpop.f32.mrf.mxu0
        %v3349 = vadd.f32 %v3273, %v3348
        %v3350 = vpop.f32.mrf.mxu0
        %3351 = vdwg.mxu0
        %3352 = vmatpush.bf16.msra.mxu0 0
        %3353 = vmatpush.bf16.msra.mxu0 0
        %3354 = vmatpush.bf16.msra.mxu0 0
        %3355 = vmatpush.bf16.msra.mxu0 0
        %3356 = vmatpush.bf16.msra.mxu0 %v3101
        %3357 = vmatpush.bf16.msra.mxu0 %v3098
        %3358 = vmatpush.bf16.msra.mxu0 %v3097
        %3359 = vmatpush.bf16.msra.mxu0 %v3096
        %3360 = vmatmul.bf16.gmra.mxu0 %v2291
        %v3361 = vpop.f32.mrf.mxu0
        %v3362 = vadd.f32 0.0, %v3361
        %v3363 = vpop.f32.mrf.mxu0
        %v3364 = vadd.f32 0.0, %v3363
        %3365 = vmatmul.bf16.gmra.mxu0 %v2294
        %v3366 = vpop.f32.mrf.mxu0
        %v3367 = vadd.f32 0.0, %v3366
        %v3368 = vpop.f32.mrf.mxu0
        %v3369 = vadd.f32 0.0, %v3368
        %3370 = vmatmul.bf16.gmra.mxu0 %v2297
        %v3371 = vpop.f32.mrf.mxu0
        %v3372 = vadd.f32 0.0, %v3371
        %v3373 = vpop.f32.mrf.mxu0
        %v3374 = vadd.f32 0.0, %v3373
        %3375 = vmatmul.bf16.gmra.mxu0 %v2300
        %v3376 = vpop.f32.mrf.mxu0
        %v3377 = vadd.f32 0.0, %v3376
        %v3378 = vpop.f32.mrf.mxu0
        %3379 = vdwg.mxu0
        %v3380 = vpack.c.bf16 %v3364, %v3362
        %v3381 = vpack.c.bf16 %v3369, %v3367
        %v3382 = vpack.c.bf16 %v3374, %v3372
        %v3383 = vpack.c.bf16 %v3377, %v3377
        %s3384 = scalar_lea.vmem %s5, 128
        %v3385 = vld [vmem:[%s3384] sm:$0xf]
        %v3386 = vld [vmem:[%s3384 + $0x4] sm:$0xf]
        %v3387 = vld [vmem:[%s3384 + $0x8] sm:$0xf]
        %v3388 = vld [vmem:[%s3384 + $0xc] sm:$0xf]
        %v3389 = vld [vmem:[%s3384 + $0x10] sm:$0xf]
        %v3390 = vld [vmem:[%s3384 + $0x14] sm:$0xf]
        %v3391 = vld [vmem:[%s3384 + $0x18] sm:$0xf]
        %v3392 = vld [vmem:[%s3384 + $0x1c] sm:$0xf]
        %v3393 = vld [vmem:[%s3384 + $0x20] sm:$0xf]
        %v3394 = vld [vmem:[%s3384 + $0x24] sm:$0xf]
        %v3395 = vld [vmem:[%s3384 + $0x28] sm:$0xf]
        %v3396 = vld [vmem:[%s3384 + $0x2c] sm:$0xf]
        %v3397 = vld [vmem:[%s3384 + $0x30] sm:$0xf]
        %v3398 = vld [vmem:[%s3384 + $0x34] sm:$0xf]
        %v3399 = vld [vmem:[%s3384 + $0x38] sm:$0xf]
        %v3400 = vld [vmem:[%s3384 + $0x3c] sm:$0xf]
        %v3417 = vunpack.c.l.b16 %v3385
        %v3418 = vunpack.c.l.b16 %v3386
        %v3419 = vunpack.c.l.b16 %v3387
        %v3420 = vunpack.c.l.b16 %v3388
        %v3421 = vunpack.c.l.b16 %v3389
        %v3422 = vunpack.c.l.b16 %v3390
        %v3423 = vunpack.c.l.b16 %v3391
        %v3424 = vunpack.c.l.b16 %v3392
        %v3425 = vunpack.c.l.b16 %v3393
        %v3426 = vunpack.c.l.b16 %v3394
        %v3427 = vunpack.c.l.b16 %v3395
        %v3428 = vunpack.c.l.b16 %v3396
        %v3429 = vunpack.c.l.b16 %v3397
        %v3430 = vunpack.c.l.b16 %v3398
        %v3431 = vunpack.c.l.b16 %v3399
        %v3432 = vunpack.c.l.b16 %v3400
        %v3433 = vpack.c.b16 %v3418, %v3417
        %v3434 = vpack.c.b16 %v3420, %v3419
        %v3435 = vpack.c.b16 %v3422, %v3421
        %v3436 = vpack.c.b16 %v3424, %v3423
        %v3437 = vpack.c.b16 %v3426, %v3425
        %v3438 = vpack.c.b16 %v3428, %v3427
        %v3439 = vpack.c.b16 %v3430, %v3429
        %v3440 = vpack.c.b16 %v3432, %v3431
        %3449 = vmatpush.bf16.msra.mxu0 %v3440
        %3450 = vmatpush.bf16.msra.mxu0 %v3439
        %3451 = vmatpush.bf16.msra.mxu0 %v3438
        %3452 = vmatpush.bf16.msra.mxu0 %v3437
        %3453 = vmatpush.bf16.msra.mxu0 %v3436
        %3454 = vmatpush.bf16.msra.mxu0 %v3435
        %3455 = vmatpush.bf16.msra.mxu0 %v3434
        %3456 = vmatpush.bf16.msra.mxu0 %v3433
        %3457 = vmatmul.bf16.gmra.mxu0 %v3380
        %v3458 = vpop.f32.mrf.mxu0
        %v3459 = vadd.f32 0.0, %v3458
        %v3460 = vpop.f32.mrf.mxu0
        %v3461 = vadd.f32 0.0, %v3460
        %3462 = vmatmul.bf16.gmra.mxu0 %v3381
        %v3463 = vpop.f32.mrf.mxu0
        %v3464 = vadd.f32 0.0, %v3463
        %v3465 = vpop.f32.mrf.mxu0
        %v3466 = vadd.f32 0.0, %v3465
        %3467 = vmatmul.bf16.gmra.mxu0 %v3382
        %v3468 = vpop.f32.mrf.mxu0
        %v3469 = vadd.f32 0.0, %v3468
        %v3470 = vpop.f32.mrf.mxu0
        %v3471 = vadd.f32 0.0, %v3470
        %3472 = vmatmul.bf16.gmra.mxu0 %v3383
        %v3473 = vpop.f32.mrf.mxu0
        %v3474 = vadd.f32 0.0, %v3473
        %v3475 = vpop.f32.mrf.mxu0
        %3476 = vdwg.mxu0
        %v3477 = vadd.f32 %v3334, %v3459
        %v3478 = vadd.f32 %v3336, %v3461
        %v3479 = vadd.f32 %v3339, %v3464
        %v3480 = vadd.f32 %v3341, %v3466
        %v3481 = vadd.f32 %v3344, %v3469
        %v3482 = vadd.f32 %v3346, %v3471
        %v3483 = vadd.f32 %v3349, %v3474
        %3484 = vmatpush.bf16.msra.mxu0 0
        %3485 = vmatpush.bf16.msra.mxu0 0
        %3486 = vmatpush.bf16.msra.mxu0 0
        %3487 = vmatpush.bf16.msra.mxu0 0
        %3488 = vmatpush.bf16.msra.mxu0 %v3101
        %3489 = vmatpush.bf16.msra.mxu0 %v3098
        %3490 = vmatpush.bf16.msra.mxu0 %v3097
        %3491 = vmatpush.bf16.msra.mxu0 %v3096
        %3492 = vmatmul.bf16.gmra.mxu0 %v2376
        %v3493 = vpop.f32.mrf.mxu0
        %v3494 = vadd.f32 0.0, %v3493
        %v3495 = vpop.f32.mrf.mxu0
        %v3496 = vadd.f32 0.0, %v3495
        %3497 = vmatmul.bf16.gmra.mxu0 %v2379
        %v3498 = vpop.f32.mrf.mxu0
        %v3499 = vadd.f32 0.0, %v3498
        %v3500 = vpop.f32.mrf.mxu0
        %v3501 = vadd.f32 0.0, %v3500
        %3502 = vmatmul.bf16.gmra.mxu0 %v2382
        %v3503 = vpop.f32.mrf.mxu0
        %v3504 = vadd.f32 0.0, %v3503
        %v3505 = vpop.f32.mrf.mxu0
        %v3506 = vadd.f32 0.0, %v3505
        %3507 = vmatmul.bf16.gmra.mxu0 %v2385
        %v3508 = vpop.f32.mrf.mxu0
        %v3509 = vadd.f32 0.0, %v3508
        %v3510 = vpop.f32.mrf.mxu0
        %3511 = vdwg.mxu0
        %v3512 = vpack.c.bf16 %v3496, %v3494
        %v3513 = vpack.c.bf16 %v3501, %v3499
        %v3514 = vpack.c.bf16 %v3506, %v3504
        %v3515 = vpack.c.bf16 %v3509, %v3509
        %s3516 = scalar_lea.vmem %s5, 192
        %v3517 = vld [vmem:[%s3516] sm:$0xf]
        %v3518 = vld [vmem:[%s3516 + $0x4] sm:$0xf]
        %v3519 = vld [vmem:[%s3516 + $0x8] sm:$0xf]
        %v3520 = vld [vmem:[%s3516 + $0xc] sm:$0xf]
        %v3521 = vld [vmem:[%s3516 + $0x10] sm:$0xf]
        %v3522 = vld [vmem:[%s3516 + $0x14] sm:$0xf]
        %v3523 = vld [vmem:[%s3516 + $0x18] sm:$0xf]
        %v3524 = vld [vmem:[%s3516 + $0x1c] sm:$0xf]
        %v3525 = vld [vmem:[%s3516 + $0x20] sm:$0xf]
        %v3526 = vld [vmem:[%s3516 + $0x24] sm:$0xf]
        %v3527 = vld [vmem:[%s3516 + $0x28] sm:$0xf]
        %v3528 = vld [vmem:[%s3516 + $0x2c] sm:$0xf]
        %v3529 = vld [vmem:[%s3516 + $0x30] sm:$0xf]
        %v3530 = vld [vmem:[%s3516 + $0x34] sm:$0xf]
        %v3531 = vld [vmem:[%s3516 + $0x38] sm:$0xf]
        %v3532 = vld [vmem:[%s3516 + $0x3c] sm:$0xf]
        %v3549 = vunpack.c.l.b16 %v3517
        %v3550 = vunpack.c.l.b16 %v3518
        %v3551 = vunpack.c.l.b16 %v3519
        %v3552 = vunpack.c.l.b16 %v3520
        %v3553 = vunpack.c.l.b16 %v3521
        %v3554 = vunpack.c.l.b16 %v3522
        %v3555 = vunpack.c.l.b16 %v3523
        %v3556 = vunpack.c.l.b16 %v3524
        %v3557 = vunpack.c.l.b16 %v3525
        %v3558 = vunpack.c.l.b16 %v3526
        %v3559 = vunpack.c.l.b16 %v3527
        %v3560 = vunpack.c.l.b16 %v3528
        %v3561 = vunpack.c.l.b16 %v3529
        %v3562 = vunpack.c.l.b16 %v3530
        %v3563 = vunpack.c.l.b16 %v3531
        %v3564 = vunpack.c.l.b16 %v3532
        %v3565 = vpack.c.b16 %v3550, %v3549
        %v3566 = vpack.c.b16 %v3552, %v3551
        %v3567 = vpack.c.b16 %v3554, %v3553
        %v3568 = vpack.c.b16 %v3556, %v3555
        %v3569 = vpack.c.b16 %v3558, %v3557
        %v3570 = vpack.c.b16 %v3560, %v3559
        %v3571 = vpack.c.b16 %v3562, %v3561
        %v3572 = vpack.c.b16 %v3564, %v3563
        %3581 = vmatpush.bf16.msra.mxu0 %v3572
        %3582 = vmatpush.bf16.msra.mxu0 %v3571
        %3583 = vmatpush.bf16.msra.mxu0 %v3570
        %3584 = vmatpush.bf16.msra.mxu0 %v3569
        %3585 = vmatpush.bf16.msra.mxu0 %v3568
        %3586 = vmatpush.bf16.msra.mxu0 %v3567
        %3587 = vmatpush.bf16.msra.mxu0 %v3566
        %3588 = vmatpush.bf16.msra.mxu0 %v3565
        %3589 = vmatmul.bf16.gmra.mxu0 %v3512
        %v3590 = vpop.f32.mrf.mxu0
        %v3591 = vadd.f32 0.0, %v3590
        %v3592 = vpop.f32.mrf.mxu0
        %v3593 = vadd.f32 0.0, %v3592
        %3594 = vmatmul.bf16.gmra.mxu0 %v3513
        %v3595 = vpop.f32.mrf.mxu0
        %v3596 = vadd.f32 0.0, %v3595
        %v3597 = vpop.f32.mrf.mxu0
        %v3598 = vadd.f32 0.0, %v3597
        %3599 = vmatmul.bf16.gmra.mxu0 %v3514
        %v3600 = vpop.f32.mrf.mxu0
        %v3601 = vadd.f32 0.0, %v3600
        %v3602 = vpop.f32.mrf.mxu0
        %v3603 = vadd.f32 0.0, %v3602
        %3604 = vmatmul.bf16.gmra.mxu0 %v3515
        %v3605 = vpop.f32.mrf.mxu0
        %v3606 = vadd.f32 0.0, %v3605
        %v3607 = vpop.f32.mrf.mxu0
        %3608 = vdwg.mxu0
        %v3609 = vadd.f32 %v3477, %v3591
        %v3610 = vadd.f32 %v3478, %v3593
        %v3611 = vadd.f32 %v3479, %v3596
        %v3612 = vadd.f32 %v3480, %v3598
        %v3613 = vadd.f32 %v3481, %v3601
        %v3614 = vadd.f32 %v3482, %v3603
        %v3615 = vadd.f32 %v3483, %v3606
        %3616 = vmatpush.bf16.msra.mxu0 0
        %3617 = vmatpush.bf16.msra.mxu0 0
        %3618 = vmatpush.bf16.msra.mxu0 0
        %3619 = vmatpush.bf16.msra.mxu0 0
        %3620 = vmatpush.bf16.msra.mxu0 %v3101
        %3621 = vmatpush.bf16.msra.mxu0 %v3098
        %3622 = vmatpush.bf16.msra.mxu0 %v3097
        %3623 = vmatpush.bf16.msra.mxu0 %v3096
        %3624 = vmatmul.bf16.gmra.mxu0 %v2461
        %v3625 = vpop.f32.mrf.mxu0
        %v3626 = vadd.f32 0.0, %v3625
        %v3627 = vpop.f32.mrf.mxu0
        %v3628 = vadd.f32 0.0, %v3627
        %3629 = vmatmul.bf16.gmra.mxu0 %v2464
        %v3630 = vpop.f32.mrf.mxu0
        %v3631 = vadd.f32 0.0, %v3630
        %v3632 = vpop.f32.mrf.mxu0
        %v3633 = vadd.f32 0.0, %v3632
        %3634 = vmatmul.bf16.gmra.mxu0 %v2467
        %v3635 = vpop.f32.mrf.mxu0
        %v3636 = vadd.f32 0.0, %v3635
        %v3637 = vpop.f32.mrf.mxu0
        %v3638 = vadd.f32 0.0, %v3637
        %3639 = vmatmul.bf16.gmra.mxu0 %v2470
        %v3640 = vpop.f32.mrf.mxu0
        %v3641 = vadd.f32 0.0, %v3640
        %v3642 = vpop.f32.mrf.mxu0
        %3643 = vdwg.mxu0
        %v3644 = vpack.c.bf16 %v3628, %v3626
        %v3645 = vpack.c.bf16 %v3633, %v3631
        %v3646 = vpack.c.bf16 %v3638, %v3636
        %v3647 = vpack.c.bf16 %v3641, %v3641
        %s3648 = scalar_lea.vmem %s5, 256
        %v3649 = vld [vmem:[%s3648] sm:$0xf]
        %v3650 = vld [vmem:[%s3648 + $0x4] sm:$0xf]
        %v3651 = vld [vmem:[%s3648 + $0x8] sm:$0xf]
        %v3652 = vld [vmem:[%s3648 + $0xc] sm:$0xf]
        %v3653 = vld [vmem:[%s3648 + $0x10] sm:$0xf]
        %v3654 = vld [vmem:[%s3648 + $0x14] sm:$0xf]
        %v3655 = vld [vmem:[%s3648 + $0x18] sm:$0xf]
        %v3656 = vld [vmem:[%s3648 + $0x1c] sm:$0xf]
        %v3657 = vld [vmem:[%s3648 + $0x20] sm:$0xf]
        %v3658 = vld [vmem:[%s3648 + $0x24] sm:$0xf]
        %v3659 = vld [vmem:[%s3648 + $0x28] sm:$0xf]
        %v3660 = vld [vmem:[%s3648 + $0x2c] sm:$0xf]
        %v3661 = vld [vmem:[%s3648 + $0x30] sm:$0xf]
        %v3662 = vld [vmem:[%s3648 + $0x34] sm:$0xf]
        %v3663 = vld [vmem:[%s3648 + $0x38] sm:$0xf]
        %v3664 = vld [vmem:[%s3648 + $0x3c] sm:$0xf]
        %v3681 = vunpack.c.l.b16 %v3649
        %v3682 = vunpack.c.l.b16 %v3650
        %v3683 = vunpack.c.l.b16 %v3651
        %v3684 = vunpack.c.l.b16 %v3652
        %v3685 = vunpack.c.l.b16 %v3653
        %v3686 = vunpack.c.l.b16 %v3654
        %v3687 = vunpack.c.l.b16 %v3655
        %v3688 = vunpack.c.l.b16 %v3656
        %v3689 = vunpack.c.l.b16 %v3657
        %v3690 = vunpack.c.l.b16 %v3658
        %v3691 = vunpack.c.l.b16 %v3659
        %v3692 = vunpack.c.l.b16 %v3660
        %v3693 = vunpack.c.l.b16 %v3661
        %v3694 = vunpack.c.l.b16 %v3662
        %v3695 = vunpack.c.l.b16 %v3663
        %v3696 = vunpack.c.l.b16 %v3664
        %v3697 = vpack.c.b16 %v3682, %v3681
        %v3698 = vpack.c.b16 %v3684, %v3683
        %v3699 = vpack.c.b16 %v3686, %v3685
        %v3700 = vpack.c.b16 %v3688, %v3687
        %v3701 = vpack.c.b16 %v3690, %v3689
        %v3702 = vpack.c.b16 %v3692, %v3691
        %v3703 = vpack.c.b16 %v3694, %v3693
        %v3704 = vpack.c.b16 %v3696, %v3695
        %3713 = vmatpush.bf16.msra.mxu0 %v3704
        %3714 = vmatpush.bf16.msra.mxu0 %v3703
        %3715 = vmatpush.bf16.msra.mxu0 %v3702
        %3716 = vmatpush.bf16.msra.mxu0 %v3701
        %3717 = vmatpush.bf16.msra.mxu0 %v3700
        %3718 = vmatpush.bf16.msra.mxu0 %v3699
        %3719 = vmatpush.bf16.msra.mxu0 %v3698
        %3720 = vmatpush.bf16.msra.mxu0 %v3697
        %3721 = vmatmul.bf16.gmra.mxu0 %v3644
        %v3722 = vpop.f32.mrf.mxu0
        %v3723 = vadd.f32 0.0, %v3722
        %v3724 = vpop.f32.mrf.mxu0
        %v3725 = vadd.f32 0.0, %v3724
        %3726 = vmatmul.bf16.gmra.mxu0 %v3645
        %v3727 = vpop.f32.mrf.mxu0
        %v3728 = vadd.f32 0.0, %v3727
        %v3729 = vpop.f32.mrf.mxu0
        %v3730 = vadd.f32 0.0, %v3729
        %3731 = vmatmul.bf16.gmra.mxu0 %v3646
        %v3732 = vpop.f32.mrf.mxu0
        %v3733 = vadd.f32 0.0, %v3732
        %v3734 = vpop.f32.mrf.mxu0
        %v3735 = vadd.f32 0.0, %v3734
        %3736 = vmatmul.bf16.gmra.mxu0 %v3647
        %v3737 = vpop.f32.mrf.mxu0
        %v3738 = vadd.f32 0.0, %v3737
        %v3739 = vpop.f32.mrf.mxu0
        %3740 = vdwg.mxu0
        %v3741 = vadd.f32 %v3609, %v3723
        %v3742 = vadd.f32 %v3610, %v3725
        %v3743 = vadd.f32 %v3611, %v3728
        %v3744 = vadd.f32 %v3612, %v3730
        %v3745 = vadd.f32 %v3613, %v3733
        %v3746 = vadd.f32 %v3614, %v3735
        %v3747 = vadd.f32 %v3615, %v3738
        %3748 = vmatpush.bf16.msra.mxu0 0
        %3749 = vmatpush.bf16.msra.mxu0 0
        %3750 = vmatpush.bf16.msra.mxu0 0
        %3751 = vmatpush.bf16.msra.mxu0 0
        %3752 = vmatpush.bf16.msra.mxu0 %v3101
        %3753 = vmatpush.bf16.msra.mxu0 %v3098
        %3754 = vmatpush.bf16.msra.mxu0 %v3097
        %3755 = vmatpush.bf16.msra.mxu0 %v3096
        %3756 = vmatmul.bf16.gmra.mxu0 %v2546
        %v3757 = vpop.f32.mrf.mxu0
        %v3758 = vadd.f32 0.0, %v3757
        %v3759 = vpop.f32.mrf.mxu0
        %v3760 = vadd.f32 0.0, %v3759
        %3761 = vmatmul.bf16.gmra.mxu0 %v2549
        %v3762 = vpop.f32.mrf.mxu0
        %v3763 = vadd.f32 0.0, %v3762
        %v3764 = vpop.f32.mrf.mxu0
        %v3765 = vadd.f32 0.0, %v3764
        %3766 = vmatmul.bf16.gmra.mxu0 %v2552
        %v3767 = vpop.f32.mrf.mxu0
        %v3768 = vadd.f32 0.0, %v3767
        %v3769 = vpop.f32.mrf.mxu0
        %v3770 = vadd.f32 0.0, %v3769
        %3771 = vmatmul.bf16.gmra.mxu0 %v2555
        %v3772 = vpop.f32.mrf.mxu0
        %v3773 = vadd.f32 0.0, %v3772
        %v3774 = vpop.f32.mrf.mxu0
        %3775 = vdwg.mxu0
        %v3776 = vpack.c.bf16 %v3760, %v3758
        %v3777 = vpack.c.bf16 %v3765, %v3763
        %v3778 = vpack.c.bf16 %v3770, %v3768
        %v3779 = vpack.c.bf16 %v3773, %v3773
        %s3780 = scalar_lea.vmem %s5, 320
        %v3781 = vld [vmem:[%s3780] sm:$0xf]
        %v3782 = vld [vmem:[%s3780 + $0x4] sm:$0xf]
        %v3783 = vld [vmem:[%s3780 + $0x8] sm:$0xf]
        %v3784 = vld [vmem:[%s3780 + $0xc] sm:$0xf]
        %v3785 = vld [vmem:[%s3780 + $0x10] sm:$0xf]
        %v3786 = vld [vmem:[%s3780 + $0x14] sm:$0xf]
        %v3787 = vld [vmem:[%s3780 + $0x18] sm:$0xf]
        %v3788 = vld [vmem:[%s3780 + $0x1c] sm:$0xf]
        %v3789 = vld [vmem:[%s3780 + $0x20] sm:$0xf]
        %v3790 = vld [vmem:[%s3780 + $0x24] sm:$0xf]
        %v3791 = vld [vmem:[%s3780 + $0x28] sm:$0xf]
        %v3792 = vld [vmem:[%s3780 + $0x2c] sm:$0xf]
        %v3793 = vld [vmem:[%s3780 + $0x30] sm:$0xf]
        %v3794 = vld [vmem:[%s3780 + $0x34] sm:$0xf]
        %v3795 = vld [vmem:[%s3780 + $0x38] sm:$0xf]
        %v3796 = vld [vmem:[%s3780 + $0x3c] sm:$0xf]
        %v3813 = vunpack.c.l.b16 %v3781
        %v3814 = vunpack.c.l.b16 %v3782
        %v3815 = vunpack.c.l.b16 %v3783
        %v3816 = vunpack.c.l.b16 %v3784
        %v3817 = vunpack.c.l.b16 %v3785
        %v3818 = vunpack.c.l.b16 %v3786
        %v3819 = vunpack.c.l.b16 %v3787
        %v3820 = vunpack.c.l.b16 %v3788
        %v3821 = vunpack.c.l.b16 %v3789
        %v3822 = vunpack.c.l.b16 %v3790
        %v3823 = vunpack.c.l.b16 %v3791
        %v3824 = vunpack.c.l.b16 %v3792
        %v3825 = vunpack.c.l.b16 %v3793
        %v3826 = vunpack.c.l.b16 %v3794
        %v3827 = vunpack.c.l.b16 %v3795
        %v3828 = vunpack.c.l.b16 %v3796
        %v3829 = vpack.c.b16 %v3814, %v3813
        %v3830 = vpack.c.b16 %v3816, %v3815
        %v3831 = vpack.c.b16 %v3818, %v3817
        %v3832 = vpack.c.b16 %v3820, %v3819
        %v3833 = vpack.c.b16 %v3822, %v3821
        %v3834 = vpack.c.b16 %v3824, %v3823
        %v3835 = vpack.c.b16 %v3826, %v3825
        %v3836 = vpack.c.b16 %v3828, %v3827
        %3845 = vmatpush.bf16.msra.mxu0 %v3836
        %3846 = vmatpush.bf16.msra.mxu0 %v3835
        %3847 = vmatpush.bf16.msra.mxu0 %v3834
        %3848 = vmatpush.bf16.msra.mxu0 %v3833
        %3849 = vmatpush.bf16.msra.mxu0 %v3832
        %3850 = vmatpush.bf16.msra.mxu0 %v3831
        %3851 = vmatpush.bf16.msra.mxu0 %v3830
        %3852 = vmatpush.bf16.msra.mxu0 %v3829
        %3853 = vmatmul.bf16.gmra.mxu0 %v3776
        %v3854 = vpop.f32.mrf.mxu0
        %v3855 = vadd.f32 0.0, %v3854
        %v3856 = vpop.f32.mrf.mxu0
        %v3857 = vadd.f32 0.0, %v3856
        %3858 = vmatmul.bf16.gmra.mxu0 %v3777
        %v3859 = vpop.f32.mrf.mxu0
        %v3860 = vadd.f32 0.0, %v3859
        %v3861 = vpop.f32.mrf.mxu0
        %v3862 = vadd.f32 0.0, %v3861
        %3863 = vmatmul.bf16.gmra.mxu0 %v3778
        %v3864 = vpop.f32.mrf.mxu0
        %v3865 = vadd.f32 0.0, %v3864
        %v3866 = vpop.f32.mrf.mxu0
        %v3867 = vadd.f32 0.0, %v3866
        %3868 = vmatmul.bf16.gmra.mxu0 %v3779
        %v3869 = vpop.f32.mrf.mxu0
        %v3870 = vadd.f32 0.0, %v3869
        %v3871 = vpop.f32.mrf.mxu0
        %3872 = vdwg.mxu0
        %v3873 = vadd.f32 %v3741, %v3855
        %v3874 = vadd.f32 %v3742, %v3857
        %v3875 = vadd.f32 %v3743, %v3860
        %v3876 = vadd.f32 %v3744, %v3862
        %v3877 = vadd.f32 %v3745, %v3865
        %v3878 = vadd.f32 %v3746, %v3867
        %v3879 = vadd.f32 %v3747, %v3870
        %3880 = vmatpush.bf16.msra.mxu0 0
        %3881 = vmatpush.bf16.msra.mxu0 0
        %3882 = vmatpush.bf16.msra.mxu0 0
        %3883 = vmatpush.bf16.msra.mxu0 0
        %3884 = vmatpush.bf16.msra.mxu0 %v3101
        %3885 = vmatpush.bf16.msra.mxu0 %v3098
        %3886 = vmatpush.bf16.msra.mxu0 %v3097
        %3887 = vmatpush.bf16.msra.mxu0 %v3096
        %3888 = vmatmul.bf16.gmra.mxu0 %v2631
        %v3889 = vpop.f32.mrf.mxu0
        %v3890 = vadd.f32 0.0, %v3889
        %v3891 = vpop.f32.mrf.mxu0
        %v3892 = vadd.f32 0.0, %v3891
        %3893 = vmatmul.bf16.gmra.mxu0 %v2634
        %v3894 = vpop.f32.mrf.mxu0
        %v3895 = vadd.f32 0.0, %v3894
        %v3896 = vpop.f32.mrf.mxu0
        %v3897 = vadd.f32 0.0, %v3896
        %3898 = vmatmul.bf16.gmra.mxu0 %v2637
        %v3899 = vpop.f32.mrf.mxu0
        %v3900 = vadd.f32 0.0, %v3899
        %v3901 = vpop.f32.mrf.mxu0
        %v3902 = vadd.f32 0.0, %v3901
        %3903 = vmatmul.bf16.gmra.mxu0 %v2640
        %v3904 = vpop.f32.mrf.mxu0
        %v3905 = vadd.f32 0.0, %v3904
        %v3906 = vpop.f32.mrf.mxu0
        %3907 = vdwg.mxu0
        %v3908 = vpack.c.bf16 %v3892, %v3890
        %v3909 = vpack.c.bf16 %v3897, %v3895
        %v3910 = vpack.c.bf16 %v3902, %v3900
        %v3911 = vpack.c.bf16 %v3905, %v3905
        %s3912 = scalar_lea.vmem %s5, 384
        %v3913 = vld [vmem:[%s3912] sm:$0xf]
        %v3914 = vld [vmem:[%s3912 + $0x4] sm:$0xf]
        %v3915 = vld [vmem:[%s3912 + $0x8] sm:$0xf]
        %v3916 = vld [vmem:[%s3912 + $0xc] sm:$0xf]
        %v3917 = vld [vmem:[%s3912 + $0x10] sm:$0xf]
        %v3918 = vld [vmem:[%s3912 + $0x14] sm:$0xf]
        %v3919 = vld [vmem:[%s3912 + $0x18] sm:$0xf]
        %v3920 = vld [vmem:[%s3912 + $0x1c] sm:$0xf]
        %v3921 = vld [vmem:[%s3912 + $0x20] sm:$0xf]
        %v3922 = vld [vmem:[%s3912 + $0x24] sm:$0xf]
        %v3923 = vld [vmem:[%s3912 + $0x28] sm:$0xf]
        %v3924 = vld [vmem:[%s3912 + $0x2c] sm:$0xf]
        %v3925 = vld [vmem:[%s3912 + $0x30] sm:$0xf]
        %v3926 = vld [vmem:[%s3912 + $0x34] sm:$0xf]
        %v3927 = vld [vmem:[%s3912 + $0x38] sm:$0xf]
        %v3928 = vld [vmem:[%s3912 + $0x3c] sm:$0xf]
        %v3945 = vunpack.c.l.b16 %v3913
        %v3946 = vunpack.c.l.b16 %v3914
        %v3947 = vunpack.c.l.b16 %v3915
        %v3948 = vunpack.c.l.b16 %v3916
        %v3949 = vunpack.c.l.b16 %v3917
        %v3950 = vunpack.c.l.b16 %v3918
        %v3951 = vunpack.c.l.b16 %v3919
        %v3952 = vunpack.c.l.b16 %v3920
        %v3953 = vunpack.c.l.b16 %v3921
        %v3954 = vunpack.c.l.b16 %v3922
        %v3955 = vunpack.c.l.b16 %v3923
        %v3956 = vunpack.c.l.b16 %v3924
        %v3957 = vunpack.c.l.b16 %v3925
        %v3958 = vunpack.c.l.b16 %v3926
        %v3959 = vunpack.c.l.b16 %v3927
        %v3960 = vunpack.c.l.b16 %v3928
        %v3961 = vpack.c.b16 %v3946, %v3945
        %v3962 = vpack.c.b16 %v3948, %v3947
        %v3963 = vpack.c.b16 %v3950, %v3949
        %v3964 = vpack.c.b16 %v3952, %v3951
        %v3965 = vpack.c.b16 %v3954, %v3953
        %v3966 = vpack.c.b16 %v3956, %v3955
        %v3967 = vpack.c.b16 %v3958, %v3957
        %v3968 = vpack.c.b16 %v3960, %v3959
        %3977 = vmatpush.bf16.msra.mxu0 %v3968
        %3978 = vmatpush.bf16.msra.mxu0 %v3967
        %3979 = vmatpush.bf16.msra.mxu0 %v3966
        %3980 = vmatpush.bf16.msra.mxu0 %v3965
        %3981 = vmatpush.bf16.msra.mxu0 %v3964
        %3982 = vmatpush.bf16.msra.mxu0 %v3963
        %3983 = vmatpush.bf16.msra.mxu0 %v3962
        %3984 = vmatpush.bf16.msra.mxu0 %v3961
        %3985 = vmatmul.bf16.gmra.mxu0 %v3908
        %v3986 = vpop.f32.mrf.mxu0
        %v3987 = vadd.f32 0.0, %v3986
        %v3988 = vpop.f32.mrf.mxu0
        %v3989 = vadd.f32 0.0, %v3988
        %3990 = vmatmul.bf16.gmra.mxu0 %v3909
        %v3991 = vpop.f32.mrf.mxu0
        %v3992 = vadd.f32 0.0, %v3991
        %v3993 = vpop.f32.mrf.mxu0
        %v3994 = vadd.f32 0.0, %v3993
        %3995 = vmatmul.bf16.gmra.mxu0 %v3910
        %v3996 = vpop.f32.mrf.mxu0
        %v3997 = vadd.f32 0.0, %v3996
        %v3998 = vpop.f32.mrf.mxu0
        %v3999 = vadd.f32 0.0, %v3998
        %4000 = vmatmul.bf16.gmra.mxu0 %v3911
        %v4001 = vpop.f32.mrf.mxu0
        %v4002 = vadd.f32 0.0, %v4001
        %v4003 = vpop.f32.mrf.mxu0
        %4004 = vdwg.mxu0
        %v4005 = vadd.f32 %v3873, %v3987
        %v4006 = vadd.f32 %v3874, %v3989
        %v4007 = vadd.f32 %v3875, %v3992
        %v4008 = vadd.f32 %v3876, %v3994
        %v4009 = vadd.f32 %v3877, %v3997
        %v4010 = vadd.f32 %v3878, %v3999
        %v4011 = vadd.f32 %v3879, %v4002
        %4012 = vmatpush.bf16.msra.mxu0 0
        %4013 = vmatpush.bf16.msra.mxu0 0
        %4014 = vmatpush.bf16.msra.mxu0 0
        %4015 = vmatpush.bf16.msra.mxu0 0
        %4016 = vmatpush.bf16.msra.mxu0 %v3101
        %4017 = vmatpush.bf16.msra.mxu0 %v3098
        %4018 = vmatpush.bf16.msra.mxu0 %v3097
        %4019 = vmatpush.bf16.msra.mxu0 %v3096
        %4020 = vmatmul.bf16.gmra.mxu0 %v2716
        %v4021 = vpop.f32.mrf.mxu0
        %v4022 = vadd.f32 0.0, %v4021
        %v4023 = vpop.f32.mrf.mxu0
        %v4024 = vadd.f32 0.0, %v4023
        %4025 = vmatmul.bf16.gmra.mxu0 %v2719
        %v4026 = vpop.f32.mrf.mxu0
        %v4027 = vadd.f32 0.0, %v4026
        %v4028 = vpop.f32.mrf.mxu0
        %v4029 = vadd.f32 0.0, %v4028
        %4030 = vmatmul.bf16.gmra.mxu0 %v2722
        %v4031 = vpop.f32.mrf.mxu0
        %v4032 = vadd.f32 0.0, %v4031
        %v4033 = vpop.f32.mrf.mxu0
        %v4034 = vadd.f32 0.0, %v4033
        %4035 = vmatmul.bf16.gmra.mxu0 %v2725
        %v4036 = vpop.f32.mrf.mxu0
        %v4037 = vadd.f32 0.0, %v4036
        %v4038 = vpop.f32.mrf.mxu0
        %4039 = vdwg.mxu0
        %v4040 = vpack.c.bf16 %v4024, %v4022
        %v4041 = vpack.c.bf16 %v4029, %v4027
        %v4042 = vpack.c.bf16 %v4034, %v4032
        %v4043 = vpack.c.bf16 %v4037, %v4037
        %s4044 = scalar_lea.vmem %s5, 448
        %v4045 = vld [vmem:[%s4044] sm:$0xf]
        %v4046 = vld [vmem:[%s4044 + $0x4] sm:$0xf]
        %v4047 = vld [vmem:[%s4044 + $0x8] sm:$0xf]
        %v4048 = vld [vmem:[%s4044 + $0xc] sm:$0xf]
        %v4049 = vld [vmem:[%s4044 + $0x10] sm:$0xf]
        %v4050 = vld [vmem:[%s4044 + $0x14] sm:$0xf]
        %v4051 = vld [vmem:[%s4044 + $0x18] sm:$0xf]
        %v4052 = vld [vmem:[%s4044 + $0x1c] sm:$0xf]
        %v4053 = vld [vmem:[%s4044 + $0x20] sm:$0xf]
        %v4054 = vld [vmem:[%s4044 + $0x24] sm:$0xf]
        %v4055 = vld [vmem:[%s4044 + $0x28] sm:$0xf]
        %v4056 = vld [vmem:[%s4044 + $0x2c] sm:$0xf]
        %v4057 = vld [vmem:[%s4044 + $0x30] sm:$0xf]
        %v4058 = vld [vmem:[%s4044 + $0x34] sm:$0xf]
        %v4059 = vld [vmem:[%s4044 + $0x38] sm:$0xf]
        %v4060 = vld [vmem:[%s4044 + $0x3c] sm:$0xf]
        %v4077 = vunpack.c.l.b16 %v4045
        %v4078 = vunpack.c.l.b16 %v4046
        %v4079 = vunpack.c.l.b16 %v4047
        %v4080 = vunpack.c.l.b16 %v4048
        %v4081 = vunpack.c.l.b16 %v4049
        %v4082 = vunpack.c.l.b16 %v4050
        %v4083 = vunpack.c.l.b16 %v4051
        %v4084 = vunpack.c.l.b16 %v4052
        %v4085 = vunpack.c.l.b16 %v4053
        %v4086 = vunpack.c.l.b16 %v4054
        %v4087 = vunpack.c.l.b16 %v4055
        %v4088 = vunpack.c.l.b16 %v4056
        %v4089 = vunpack.c.l.b16 %v4057
        %v4090 = vunpack.c.l.b16 %v4058
        %v4091 = vunpack.c.l.b16 %v4059
        %v4092 = vunpack.c.l.b16 %v4060
        %v4093 = vpack.c.b16 %v4078, %v4077
        %v4094 = vpack.c.b16 %v4080, %v4079
        %v4095 = vpack.c.b16 %v4082, %v4081
        %v4096 = vpack.c.b16 %v4084, %v4083
        %v4097 = vpack.c.b16 %v4086, %v4085
        %v4098 = vpack.c.b16 %v4088, %v4087
        %v4099 = vpack.c.b16 %v4090, %v4089
        %v4100 = vpack.c.b16 %v4092, %v4091
        %4109 = vmatpush.bf16.msra.mxu0 %v4100
        %4110 = vmatpush.bf16.msra.mxu0 %v4099
        %4111 = vmatpush.bf16.msra.mxu0 %v4098
        %4112 = vmatpush.bf16.msra.mxu0 %v4097
        %4113 = vmatpush.bf16.msra.mxu0 %v4096
        %4114 = vmatpush.bf16.msra.mxu0 %v4095
        %4115 = vmatpush.bf16.msra.mxu0 %v4094
        %4116 = vmatpush.bf16.msra.mxu0 %v4093
        %4117 = vmatmul.bf16.gmra.mxu0 %v4040
        %v4118 = vpop.f32.mrf.mxu0
        %v4119 = vadd.f32 0.0, %v4118
        %v4120 = vpop.f32.mrf.mxu0
        %v4121 = vadd.f32 0.0, %v4120
        %4122 = vmatmul.bf16.gmra.mxu0 %v4041
        %v4123 = vpop.f32.mrf.mxu0
        %v4124 = vadd.f32 0.0, %v4123
        %v4125 = vpop.f32.mrf.mxu0
        %v4126 = vadd.f32 0.0, %v4125
        %4127 = vmatmul.bf16.gmra.mxu0 %v4042
        %v4128 = vpop.f32.mrf.mxu0
        %v4129 = vadd.f32 0.0, %v4128
        %v4130 = vpop.f32.mrf.mxu0
        %v4131 = vadd.f32 0.0, %v4130
        %4132 = vmatmul.bf16.gmra.mxu0 %v4043
        %v4133 = vpop.f32.mrf.mxu0
        %v4134 = vadd.f32 0.0, %v4133
        %v4135 = vpop.f32.mrf.mxu0
        %4136 = vdwg.mxu0
        %v4137 = vadd.f32 %v4005, %v4119
        %v4138 = vadd.f32 %v4006, %v4121
        %v4139 = vadd.f32 %v4007, %v4124
        %v4140 = vadd.f32 %v4008, %v4126
        %v4141 = vadd.f32 %v4009, %v4129
        %v4142 = vadd.f32 %v4010, %v4131
        %v4143 = vadd.f32 %v4011, %v4134
        %4144 = vmatpush.bf16.msra.mxu0 0
        %4145 = vmatpush.bf16.msra.mxu0 0
        %4146 = vmatpush.bf16.msra.mxu0 0
        %4147 = vmatpush.bf16.msra.mxu0 0
        %4148 = vmatpush.bf16.msra.mxu0 %v3101
        %4149 = vmatpush.bf16.msra.mxu0 %v3098
        %4150 = vmatpush.bf16.msra.mxu0 %v3097
        %4151 = vmatpush.bf16.msra.mxu0 %v3096
        %4152 = vmatmul.bf16.gmra.mxu0 %v2801
        %v4153 = vpop.f32.mrf.mxu0
        %v4154 = vadd.f32 0.0, %v4153
        %v4155 = vpop.f32.mrf.mxu0
        %v4156 = vadd.f32 0.0, %v4155
        %4157 = vmatmul.bf16.gmra.mxu0 %v2804
        %v4158 = vpop.f32.mrf.mxu0
        %v4159 = vadd.f32 0.0, %v4158
        %v4160 = vpop.f32.mrf.mxu0
        %v4161 = vadd.f32 0.0, %v4160
        %4162 = vmatmul.bf16.gmra.mxu0 %v2807
        %v4163 = vpop.f32.mrf.mxu0
        %v4164 = vadd.f32 0.0, %v4163
        %v4165 = vpop.f32.mrf.mxu0
        %v4166 = vadd.f32 0.0, %v4165
        %4167 = vmatmul.bf16.gmra.mxu0 %v2810
        %v4168 = vpop.f32.mrf.mxu0
        %v4169 = vadd.f32 0.0, %v4168
        %v4170 = vpop.f32.mrf.mxu0
        %4171 = vdwg.mxu0
        %v4172 = vpack.c.bf16 %v4156, %v4154
        %v4173 = vpack.c.bf16 %v4161, %v4159
        %v4174 = vpack.c.bf16 %v4166, %v4164
        %v4175 = vpack.c.bf16 %v4169, %v4169
        %s4176 = scalar_lea.vmem %s5, 512
        %v4177 = vld [vmem:[%s4176] sm:$0xf]
        %v4178 = vld [vmem:[%s4176 + $0x4] sm:$0xf]
        %v4179 = vld [vmem:[%s4176 + $0x8] sm:$0xf]
        %v4180 = vld [vmem:[%s4176 + $0xc] sm:$0xf]
        %v4181 = vld [vmem:[%s4176 + $0x10] sm:$0xf]
        %v4182 = vld [vmem:[%s4176 + $0x14] sm:$0xf]
        %v4183 = vld [vmem:[%s4176 + $0x18] sm:$0xf]
        %v4184 = vld [vmem:[%s4176 + $0x1c] sm:$0xf]
        %v4185 = vld [vmem:[%s4176 + $0x20] sm:$0xf]
        %v4186 = vld [vmem:[%s4176 + $0x24] sm:$0xf]
        %v4187 = vld [vmem:[%s4176 + $0x28] sm:$0xf]
        %v4188 = vld [vmem:[%s4176 + $0x2c] sm:$0xf]
        %v4189 = vld [vmem:[%s4176 + $0x30] sm:$0xf]
        %v4190 = vld [vmem:[%s4176 + $0x34] sm:$0xf]
        %v4191 = vld [vmem:[%s4176 + $0x38] sm:$0xf]
        %v4192 = vld [vmem:[%s4176 + $0x3c] sm:$0xf]
        %v4209 = vunpack.c.l.b16 %v4177
        %v4210 = vunpack.c.l.b16 %v4178
        %v4211 = vunpack.c.l.b16 %v4179
        %v4212 = vunpack.c.l.b16 %v4180
        %v4213 = vunpack.c.l.b16 %v4181
        %v4214 = vunpack.c.l.b16 %v4182
        %v4215 = vunpack.c.l.b16 %v4183
        %v4216 = vunpack.c.l.b16 %v4184
        %v4217 = vunpack.c.l.b16 %v4185
        %v4218 = vunpack.c.l.b16 %v4186
        %v4219 = vunpack.c.l.b16 %v4187
        %v4220 = vunpack.c.l.b16 %v4188
        %v4221 = vunpack.c.l.b16 %v4189
        %v4222 = vunpack.c.l.b16 %v4190
        %v4223 = vunpack.c.l.b16 %v4191
        %v4224 = vunpack.c.l.b16 %v4192
        %v4225 = vpack.c.b16 %v4210, %v4209
        %v4226 = vpack.c.b16 %v4212, %v4211
        %v4227 = vpack.c.b16 %v4214, %v4213
        %v4228 = vpack.c.b16 %v4216, %v4215
        %v4229 = vpack.c.b16 %v4218, %v4217
        %v4230 = vpack.c.b16 %v4220, %v4219
        %v4231 = vpack.c.b16 %v4222, %v4221
        %v4232 = vpack.c.b16 %v4224, %v4223
        %4241 = vmatpush.bf16.msra.mxu0 %v4232
        %4242 = vmatpush.bf16.msra.mxu0 %v4231
        %4243 = vmatpush.bf16.msra.mxu0 %v4230
        %4244 = vmatpush.bf16.msra.mxu0 %v4229
        %4245 = vmatpush.bf16.msra.mxu0 %v4228
        %4246 = vmatpush.bf16.msra.mxu0 %v4227
        %4247 = vmatpush.bf16.msra.mxu0 %v4226
        %4248 = vmatpush.bf16.msra.mxu0 %v4225
        %4249 = vmatmul.bf16.gmra.mxu0 %v4172
        %v4250 = vpop.f32.mrf.mxu0
        %v4251 = vadd.f32 0.0, %v4250
        %v4252 = vpop.f32.mrf.mxu0
        %v4253 = vadd.f32 0.0, %v4252
        %4254 = vmatmul.bf16.gmra.mxu0 %v4173
        %v4255 = vpop.f32.mrf.mxu0
        %v4256 = vadd.f32 0.0, %v4255
        %v4257 = vpop.f32.mrf.mxu0
        %v4258 = vadd.f32 0.0, %v4257
        %4259 = vmatmul.bf16.gmra.mxu0 %v4174
        %v4260 = vpop.f32.mrf.mxu0
        %v4261 = vadd.f32 0.0, %v4260
        %v4262 = vpop.f32.mrf.mxu0
        %v4263 = vadd.f32 0.0, %v4262
        %4264 = vmatmul.bf16.gmra.mxu0 %v4175
        %v4265 = vpop.f32.mrf.mxu0
        %v4266 = vadd.f32 0.0, %v4265
        %v4267 = vpop.f32.mrf.mxu0
        %4268 = vdwg.mxu0
        %v4269 = vadd.f32 %v4137, %v4251
        %v4270 = vadd.f32 %v4138, %v4253
        %v4271 = vadd.f32 %v4139, %v4256
        %v4272 = vadd.f32 %v4140, %v4258
        %v4273 = vadd.f32 %v4141, %v4261
        %v4274 = vadd.f32 %v4142, %v4263
        %v4275 = vadd.f32 %v4143, %v4266
        %v4277 = vperm.slane %v3095, 0
        %v4279 = vadd.f32 %v4269, %v4277
        %v4280 = vadd.f32 %v4270, %v4277
        %v4281 = vadd.f32 %v4271, %v4277
        %v4282 = vadd.f32 %v4272, %v4277
        %v4283 = vadd.f32 %v4273, %v4277
        %v4284 = vadd.f32 %v4274, %v4277
        %v4285 = vadd.f32 %v4275, %v4277
        %v4286 = vmax.f32 %v4279, 0.0
        %v4287 = vmax.f32 %v4280, 0.0
        %v4288 = vmax.f32 %v4281, 0.0
        %v4289 = vmax.f32 %v4282, 0.0
        %v4290 = vmax.f32 %v4283, 0.0
        %v4291 = vmax.f32 %v4284, 0.0
        %v4292 = vmax.f32 %v4285, 0.0
        %s4293 = scalar_lea.vmem %s4, 192
        %v4294 = vld [vmem:[%s4293] sm:$0xf]
        %v4295 = vld [vmem:[%s4293 + $0x4] sm:$0xf]
        %v4296 = vld [vmem:[%s4293 + $0x8] sm:$0xf]
        %v4297 = vld [vmem:[%s4293 + $0xc] sm:$0xf]
        %v4298 = vld [vmem:[%s4293 + $0x10] sm:$0xf]
        %v4299 = vld [vmem:[%s4293 + $0x14] sm:$0xf]
        %v4300 = vld [vmem:[%s4293 + $0x18] sm:$0xf]
        %v4301 = vld [vmem:[%s4293 + $0x1c] sm:$0xf]
        %v4302 = vld [vmem:[%s4293 + $0x20] sm:$0xf]
        %v4303 = vld [vmem:[%s4293 + $0x24] sm:$0xf]
        %v4304 = vld [vmem:[%s4293 + $0x28] sm:$0xf]
        %v4305 = vld [vmem:[%s4293 + $0x2c] sm:$0xf]
        %v4306 = vld [vmem:[%s4293 + $0x30] sm:$0xf]
        %v4307 = vld [vmem:[%s4293 + $0x34] sm:$0xf]
        %v4308 = vld [vmem:[%s4293 + $0x38] sm:$0xf]
        %v4309 = vld [vmem:[%s4293 + $0x3c] sm:$0xf]
        %s4310 = scalar_lea.vmem [#allocation9], 6
        %v4311 = vld [vmem:[%s4310] sm:$0x1]
        %v4312 = vpack.c.bf16 %v4287, %v4286
        %v4313 = vpack.c.bf16 %v4289, %v4288
        %v4314 = vpack.c.bf16 %v4291, %v4290
        %v4315 = vpack.c.bf16 %v4292, %v4292
        %v4317 = vperm.slane %v4311, 0
        %v4335 = vunpack.c.l.b16 %v4294
        %v4336 = vunpack.c.l.b16 %v4295
        %v4337 = vunpack.c.l.b16 %v4296
        %v4338 = vunpack.c.l.b16 %v4297
        %v4339 = vunpack.c.l.b16 %v4298
        %v4340 = vunpack.c.l.b16 %v4299
        %v4341 = vunpack.c.l.b16 %v4300
        %v4342 = vunpack.c.l.b16 %v4301
        %v4343 = vunpack.c.l.b16 %v4302
        %v4344 = vunpack.c.l.b16 %v4303
        %v4345 = vunpack.c.l.b16 %v4304
        %v4346 = vunpack.c.l.b16 %v4305
        %v4347 = vunpack.c.l.b16 %v4306
        %v4348 = vunpack.c.l.b16 %v4307
        %v4349 = vunpack.c.l.b16 %v4308
        %v4350 = vunpack.c.l.b16 %v4309
        %v4351 = vpack.c.b16 %v4336, %v4335
        %v4352 = vpack.c.b16 %v4338, %v4337
        %v4353 = vpack.c.b16 %v4340, %v4339
        %v4354 = vpack.c.b16 %v4342, %v4341
        %v4355 = vpack.c.b16 %v4344, %v4343
        %v4356 = vpack.c.b16 %v4346, %v4345
        %v4357 = vpack.c.b16 %v4348, %v4347
        %v4358 = vpack.c.b16 %v4350, %v4349
        %4367 = vmatpush.bf16.msra.mxu0 %v4358
        %4368 = vmatpush.bf16.msra.mxu0 %v4357
        %4369 = vmatpush.bf16.msra.mxu0 %v4356
        %4370 = vmatpush.bf16.msra.mxu0 %v4355
        %4371 = vmatpush.bf16.msra.mxu0 %v4354
        %4372 = vmatpush.bf16.msra.mxu0 %v4353
        %4373 = vmatpush.bf16.msra.mxu0 %v4352
        %4374 = vmatpush.bf16.msra.mxu0 %v4351
        %4375 = vmatmul.bf16.gmra.mxu0 %v4312
        %v4376 = vpop.f32.mrf.mxu0
        %v4377 = vadd.f32 %v4317, %v4376
        %v4378 = vpop.f32.mrf.mxu0
        %v4379 = vadd.f32 %v4317, %v4378
        %4380 = vmatmul.bf16.gmra.mxu0 %v4313
        %v4381 = vpop.f32.mrf.mxu0
        %v4382 = vadd.f32 %v4317, %v4381
        %v4383 = vpop.f32.mrf.mxu0
        %v4384 = vadd.f32 %v4317, %v4383
        %4385 = vmatmul.bf16.gmra.mxu0 %v4314
        %v4386 = vpop.f32.mrf.mxu0
        %v4387 = vadd.f32 %v4317, %v4386
        %v4388 = vpop.f32.mrf.mxu0
        %v4389 = vadd.f32 %v4317, %v4388
        %4390 = vmatmul.bf16.gmra.mxu0 %v4315
        %v4391 = vpop.f32.mrf.mxu0
        %v4392 = vadd.f32 %v4317, %v4391
        %v4393 = vpop.f32.mrf.mxu0
        %4394 = vdwg.mxu0
        %v4395 = vmax.f32 %v4377, 0.0
        %v4396 = vmax.f32 %v4379, 0.0
        %v4397 = vmax.f32 %v4382, 0.0
        %v4398 = vmax.f32 %v4384, 0.0
        %v4399 = vmax.f32 %v4387, 0.0
        %v4400 = vmax.f32 %v4389, 0.0
        %v4401 = vmax.f32 %v4392, 0.0
        %s4402 = scalar_lea.vmem [#allocation9], 7
        %v4403 = vld [vmem:[%s4402] sm:$0x1]
        %v4404 = vpack.c.bf16 %v4396, %v4395
        %v4405 = vpack.c.bf16 %v4398, %v4397
        %v4406 = vpack.c.bf16 %v4400, %v4399
        %v4407 = vpack.c.bf16 %v4401, %v4401
        %v4409 = vand.u32 %v4407, %v2129
        %4411 = vmatpush.bf16.msra.mxu0 0
        %4412 = vmatpush.bf16.msra.mxu0 0
        %4413 = vmatpush.bf16.msra.mxu0 0
        %4414 = vmatpush.bf16.msra.mxu0 0
        %4415 = vmatpush.bf16.msra.mxu0 %v4409
        %4416 = vmatpush.bf16.msra.mxu0 %v4406
        %4417 = vmatpush.bf16.msra.mxu0 %v4405
        %4418 = vmatpush.bf16.msra.mxu0 %v4404
        %4419 = vmatmul.bf16.gmra.mxu0 %v2116
        %v4420 = vpop.f32.mrf.mxu0
        %v4421 = vadd.f32 0.0, %v4420
        %v4422 = vpop.f32.mrf.mxu0
        %v4423 = vadd.f32 0.0, %v4422
        %4424 = vmatmul.bf16.gmra.mxu0 %v2119
        %v4425 = vpop.f32.mrf.mxu0
        %v4426 = vadd.f32 0.0, %v4425
        %v4427 = vpop.f32.mrf.mxu0
        %v4428 = vadd.f32 0.0, %v4427
        %4429 = vmatmul.bf16.gmra.mxu0 %v2122
        %v4430 = vpop.f32.mrf.mxu0
        %v4431 = vadd.f32 0.0, %v4430
        %v4432 = vpop.f32.mrf.mxu0
        %v4433 = vadd.f32 0.0, %v4432
        %4434 = vmatmul.bf16.gmra.mxu0 %v2125
        %v4435 = vpop.f32.mrf.mxu0
        %v4436 = vadd.f32 0.0, %v4435
        %v4437 = vpop.f32.mrf.mxu0
        %4438 = vdwg.mxu0
        %s4439 = scalar_lea.vmem [#allocation7], 9
        %v4440 = vld [vmem:[%s4439] sm:$0x1]
        %v4442 = vperm.slane %v4440, 0
        %v4444 = vmul.f32 %v4421, %v4442
        %v4445 = vmul.f32 %v4423, %v4442
        %v4446 = vmul.f32 %v4426, %v4442
        %v4447 = vmul.f32 %v4428, %v4442
        %v4448 = vmul.f32 %v4431, %v4442
        %v4449 = vmul.f32 %v4433, %v4442
        %v4450 = vmul.f32 %v4436, %v4442
        %v4451 = vadd.f32 %v4444, 0.0
        %v4452 = vadd.f32 %v4445, 0.0
        %v4453 = vadd.f32 %v4446, 0.0
        %v4454 = vadd.f32 %v4447, 0.0
        %v4455 = vadd.f32 %v4448, 0.0
        %v4456 = vadd.f32 %v4449, 0.0
        %v4457 = vadd.f32 %v4450, 0.0
        %4458 = vmatpush.bf16.msra.mxu0 0
        %4459 = vmatpush.bf16.msra.mxu0 0
        %4460 = vmatpush.bf16.msra.mxu0 0
        %4461 = vmatpush.bf16.msra.mxu0 0
        %4462 = vmatpush.bf16.msra.mxu0 %v4409
        %4463 = vmatpush.bf16.msra.mxu0 %v4406
        %4464 = vmatpush.bf16.msra.mxu0 %v4405
        %4465 = vmatpush.bf16.msra.mxu0 %v4404
        %4466 = vmatmul.bf16.gmra.mxu0 %v2206
        %v4467 = vpop.f32.mrf.mxu0
        %v4468 = vadd.f32 0.0, %v4467
        %v4469 = vpop.f32.mrf.mxu0
        %v4470 = vadd.f32 0.0, %v4469
        %4471 = vmatmul.bf16.gmra.mxu0 %v2209
        %v4472 = vpop.f32.mrf.mxu0
        %v4473 = vadd.f32 0.0, %v4472
        %v4474 = vpop.f32.mrf.mxu0
        %v4475 = vadd.f32 0.0, %v4474
        %4476 = vmatmul.bf16.gmra.mxu0 %v2212
        %v4477 = vpop.f32.mrf.mxu0
        %v4478 = vadd.f32 0.0, %v4477
        %v4479 = vpop.f32.mrf.mxu0
        %v4480 = vadd.f32 0.0, %v4479
        %4481 = vmatmul.bf16.gmra.mxu0 %v2215
        %v4482 = vpop.f32.mrf.mxu0
        %v4483 = vadd.f32 0.0, %v4482
        %v4484 = vpop.f32.mrf.mxu0
        %4485 = vdwg.mxu0
        %s4486 = scalar_lea.vmem [#allocation7], 10
        %v4487 = vld [vmem:[%s4486] sm:$0x1]
        %v4489 = vperm.slane %v4487, 0
        %v4491 = vmul.f32 %v4468, %v4489
        %v4492 = vmul.f32 %v4470, %v4489
        %v4493 = vmul.f32 %v4473, %v4489
        %v4494 = vmul.f32 %v4475, %v4489
        %v4495 = vmul.f32 %v4478, %v4489
        %v4496 = vmul.f32 %v4480, %v4489
        %v4497 = vmul.f32 %v4483, %v4489
        %v4498 = vadd.f32 %v4451, %v4491
        %v4499 = vadd.f32 %v4452, %v4492
        %v4500 = vadd.f32 %v4453, %v4493
        %v4501 = vadd.f32 %v4454, %v4494
        %v4502 = vadd.f32 %v4455, %v4495
        %v4503 = vadd.f32 %v4456, %v4496
        %v4504 = vadd.f32 %v4457, %v4497
        %4505 = vmatpush.bf16.msra.mxu0 0
        %4506 = vmatpush.bf16.msra.mxu0 0
        %4507 = vmatpush.bf16.msra.mxu0 0
        %4508 = vmatpush.bf16.msra.mxu0 0
        %4509 = vmatpush.bf16.msra.mxu0 %v4409
        %4510 = vmatpush.bf16.msra.mxu0 %v4406
        %4511 = vmatpush.bf16.msra.mxu0 %v4405
        %4512 = vmatpush.bf16.msra.mxu0 %v4404
        %4513 = vmatmul.bf16.gmra.mxu0 %v2291
        %v4514 = vpop.f32.mrf.mxu0
        %v4515 = vadd.f32 0.0, %v4514
        %v4516 = vpop.f32.mrf.mxu0
        %v4517 = vadd.f32 0.0, %v4516
        %4518 = vmatmul.bf16.gmra.mxu0 %v2294
        %v4519 = vpop.f32.mrf.mxu0
        %v4520 = vadd.f32 0.0, %v4519
        %v4521 = vpop.f32.mrf.mxu0
        %v4522 = vadd.f32 0.0, %v4521
        %4523 = vmatmul.bf16.gmra.mxu0 %v2297
        %v4524 = vpop.f32.mrf.mxu0
        %v4525 = vadd.f32 0.0, %v4524
        %v4526 = vpop.f32.mrf.mxu0
        %v4527 = vadd.f32 0.0, %v4526
        %4528 = vmatmul.bf16.gmra.mxu0 %v2300
        %v4529 = vpop.f32.mrf.mxu0
        %v4530 = vadd.f32 0.0, %v4529
        %v4531 = vpop.f32.mrf.mxu0
        %4532 = vdwg.mxu0
        %s4533 = scalar_lea.vmem [#allocation7], 11
        %v4534 = vld [vmem:[%s4533] sm:$0x1]
        %v4536 = vperm.slane %v4534, 0
        %v4538 = vmul.f32 %v4515, %v4536
        %v4539 = vmul.f32 %v4517, %v4536
        %v4540 = vmul.f32 %v4520, %v4536
        %v4541 = vmul.f32 %v4522, %v4536
        %v4542 = vmul.f32 %v4525, %v4536
        %v4543 = vmul.f32 %v4527, %v4536
        %v4544 = vmul.f32 %v4530, %v4536
        %v4545 = vadd.f32 %v4498, %v4538
        %v4546 = vadd.f32 %v4499, %v4539
        %v4547 = vadd.f32 %v4500, %v4540
        %v4548 = vadd.f32 %v4501, %v4541
        %v4549 = vadd.f32 %v4502, %v4542
        %v4550 = vadd.f32 %v4503, %v4543
        %v4551 = vadd.f32 %v4504, %v4544
        %4552 = vmatpush.bf16.msra.mxu0 0
        %4553 = vmatpush.bf16.msra.mxu0 0
        %4554 = vmatpush.bf16.msra.mxu0 0
        %4555 = vmatpush.bf16.msra.mxu0 0
        %4556 = vmatpush.bf16.msra.mxu0 %v4409
        %4557 = vmatpush.bf16.msra.mxu0 %v4406
        %4558 = vmatpush.bf16.msra.mxu0 %v4405
        %4559 = vmatpush.bf16.msra.mxu0 %v4404
        %4560 = vmatmul.bf16.gmra.mxu0 %v2376
        %v4561 = vpop.f32.mrf.mxu0
        %v4562 = vadd.f32 0.0, %v4561
        %v4563 = vpop.f32.mrf.mxu0
        %v4564 = vadd.f32 0.0, %v4563
        %4565 = vmatmul.bf16.gmra.mxu0 %v2379
        %v4566 = vpop.f32.mrf.mxu0
        %v4567 = vadd.f32 0.0, %v4566
        %v4568 = vpop.f32.mrf.mxu0
        %v4569 = vadd.f32 0.0, %v4568
        %4570 = vmatmul.bf16.gmra.mxu0 %v2382
        %v4571 = vpop.f32.mrf.mxu0
        %v4572 = vadd.f32 0.0, %v4571
        %v4573 = vpop.f32.mrf.mxu0
        %v4574 = vadd.f32 0.0, %v4573
        %4575 = vmatmul.bf16.gmra.mxu0 %v2385
        %v4576 = vpop.f32.mrf.mxu0
        %v4577 = vadd.f32 0.0, %v4576
        %v4578 = vpop.f32.mrf.mxu0
        %4579 = vdwg.mxu0
        %s4580 = scalar_lea.vmem [#allocation7], 12
        %v4581 = vld [vmem:[%s4580] sm:$0x1]
        %v4583 = vperm.slane %v4581, 0
        %v4585 = vmul.f32 %v4562, %v4583
        %v4586 = vmul.f32 %v4564, %v4583
        %v4587 = vmul.f32 %v4567, %v4583
        %v4588 = vmul.f32 %v4569, %v4583
        %v4589 = vmul.f32 %v4572, %v4583
        %v4590 = vmul.f32 %v4574, %v4583
        %v4591 = vmul.f32 %v4577, %v4583
        %v4592 = vadd.f32 %v4545, %v4585
        %v4593 = vadd.f32 %v4546, %v4586
        %v4594 = vadd.f32 %v4547, %v4587
        %v4595 = vadd.f32 %v4548, %v4588
        %v4596 = vadd.f32 %v4549, %v4589
        %v4597 = vadd.f32 %v4550, %v4590
        %v4598 = vadd.f32 %v4551, %v4591
        %4599 = vmatpush.bf16.msra.mxu0 0
        %4600 = vmatpush.bf16.msra.mxu0 0
        %4601 = vmatpush.bf16.msra.mxu0 0
        %4602 = vmatpush.bf16.msra.mxu0 0
        %4603 = vmatpush.bf16.msra.mxu0 %v4409
        %4604 = vmatpush.bf16.msra.mxu0 %v4406
        %4605 = vmatpush.bf16.msra.mxu0 %v4405
        %4606 = vmatpush.bf16.msra.mxu0 %v4404
        %4607 = vmatmul.bf16.gmra.mxu0 %v2461
        %v4608 = vpop.f32.mrf.mxu0
        %v4609 = vadd.f32 0.0, %v4608
        %v4610 = vpop.f32.mrf.mxu0
        %v4611 = vadd.f32 0.0, %v4610
        %4612 = vmatmul.bf16.gmra.mxu0 %v2464
        %v4613 = vpop.f32.mrf.mxu0
        %v4614 = vadd.f32 0.0, %v4613
        %v4615 = vpop.f32.mrf.mxu0
        %v4616 = vadd.f32 0.0, %v4615
        %4617 = vmatmul.bf16.gmra.mxu0 %v2467
        %v4618 = vpop.f32.mrf.mxu0
        %v4619 = vadd.f32 0.0, %v4618
        %v4620 = vpop.f32.mrf.mxu0
        %v4621 = vadd.f32 0.0, %v4620
        %4622 = vmatmul.bf16.gmra.mxu0 %v2470
        %v4623 = vpop.f32.mrf.mxu0
        %v4624 = vadd.f32 0.0, %v4623
        %v4625 = vpop.f32.mrf.mxu0
        %4626 = vdwg.mxu0
        %s4627 = scalar_lea.vmem [#allocation7], 13
        %v4628 = vld [vmem:[%s4627] sm:$0x1]
        %v4630 = vperm.slane %v4628, 0
        %v4632 = vmul.f32 %v4609, %v4630
        %v4633 = vmul.f32 %v4611, %v4630
        %v4634 = vmul.f32 %v4614, %v4630
        %v4635 = vmul.f32 %v4616, %v4630
        %v4636 = vmul.f32 %v4619, %v4630
        %v4637 = vmul.f32 %v4621, %v4630
        %v4638 = vmul.f32 %v4624, %v4630
        %v4639 = vadd.f32 %v4592, %v4632
        %v4640 = vadd.f32 %v4593, %v4633
        %v4641 = vadd.f32 %v4594, %v4634
        %v4642 = vadd.f32 %v4595, %v4635
        %v4643 = vadd.f32 %v4596, %v4636
        %v4644 = vadd.f32 %v4597, %v4637
        %v4645 = vadd.f32 %v4598, %v4638
        %4646 = vmatpush.bf16.msra.mxu0 0
        %4647 = vmatpush.bf16.msra.mxu0 0
        %4648 = vmatpush.bf16.msra.mxu0 0
        %4649 = vmatpush.bf16.msra.mxu0 0
        %4650 = vmatpush.bf16.msra.mxu0 %v4409
        %4651 = vmatpush.bf16.msra.mxu0 %v4406
        %4652 = vmatpush.bf16.msra.mxu0 %v4405
        %4653 = vmatpush.bf16.msra.mxu0 %v4404
        %4654 = vmatmul.bf16.gmra.mxu0 %v2546
        %v4655 = vpop.f32.mrf.mxu0
        %v4656 = vadd.f32 0.0, %v4655
        %v4657 = vpop.f32.mrf.mxu0
        %v4658 = vadd.f32 0.0, %v4657
        %4659 = vmatmul.bf16.gmra.mxu0 %v2549
        %v4660 = vpop.f32.mrf.mxu0
        %v4661 = vadd.f32 0.0, %v4660
        %v4662 = vpop.f32.mrf.mxu0
        %v4663 = vadd.f32 0.0, %v4662
        %4664 = vmatmul.bf16.gmra.mxu0 %v2552
        %v4665 = vpop.f32.mrf.mxu0
        %v4666 = vadd.f32 0.0, %v4665
        %v4667 = vpop.f32.mrf.mxu0
        %v4668 = vadd.f32 0.0, %v4667
        %4669 = vmatmul.bf16.gmra.mxu0 %v2555
        %v4670 = vpop.f32.mrf.mxu0
        %v4671 = vadd.f32 0.0, %v4670
        %v4672 = vpop.f32.mrf.mxu0
        %4673 = vdwg.mxu0
        %s4674 = scalar_lea.vmem [#allocation7], 14
        %v4675 = vld [vmem:[%s4674] sm:$0x1]
        %v4677 = vperm.slane %v4675, 0
        %v4679 = vmul.f32 %v4656, %v4677
        %v4680 = vmul.f32 %v4658, %v4677
        %v4681 = vmul.f32 %v4661, %v4677
        %v4682 = vmul.f32 %v4663, %v4677
        %v4683 = vmul.f32 %v4666, %v4677
        %v4684 = vmul.f32 %v4668, %v4677
        %v4685 = vmul.f32 %v4671, %v4677
        %v4686 = vadd.f32 %v4639, %v4679
        %v4687 = vadd.f32 %v4640, %v4680
        %v4688 = vadd.f32 %v4641, %v4681
        %v4689 = vadd.f32 %v4642, %v4682
        %v4690 = vadd.f32 %v4643, %v4683
        %v4691 = vadd.f32 %v4644, %v4684
        %v4692 = vadd.f32 %v4645, %v4685
        %4693 = vmatpush.bf16.msra.mxu0 0
        %4694 = vmatpush.bf16.msra.mxu0 0
        %4695 = vmatpush.bf16.msra.mxu0 0
        %4696 = vmatpush.bf16.msra.mxu0 0
        %4697 = vmatpush.bf16.msra.mxu0 %v4409
        %4698 = vmatpush.bf16.msra.mxu0 %v4406
        %4699 = vmatpush.bf16.msra.mxu0 %v4405
        %4700 = vmatpush.bf16.msra.mxu0 %v4404
        %4701 = vmatmul.bf16.gmra.mxu0 %v2631
        %v4702 = vpop.f32.mrf.mxu0
        %v4703 = vadd.f32 0.0, %v4702
        %v4704 = vpop.f32.mrf.mxu0
        %v4705 = vadd.f32 0.0, %v4704
        %4706 = vmatmul.bf16.gmra.mxu0 %v2634
        %v4707 = vpop.f32.mrf.mxu0
        %v4708 = vadd.f32 0.0, %v4707
        %v4709 = vpop.f32.mrf.mxu0
        %v4710 = vadd.f32 0.0, %v4709
        %4711 = vmatmul.bf16.gmra.mxu0 %v2637
        %v4712 = vpop.f32.mrf.mxu0
        %v4713 = vadd.f32 0.0, %v4712
        %v4714 = vpop.f32.mrf.mxu0
        %v4715 = vadd.f32 0.0, %v4714
        %4716 = vmatmul.bf16.gmra.mxu0 %v2640
        %v4717 = vpop.f32.mrf.mxu0
        %v4718 = vadd.f32 0.0, %v4717
        %v4719 = vpop.f32.mrf.mxu0
        %4720 = vdwg.mxu0
        %s4721 = scalar_lea.vmem [#allocation7], 15
        %v4722 = vld [vmem:[%s4721] sm:$0x1]
        %v4724 = vperm.slane %v4722, 0
        %v4726 = vmul.f32 %v4703, %v4724
        %v4727 = vmul.f32 %v4705, %v4724
        %v4728 = vmul.f32 %v4708, %v4724
        %v4729 = vmul.f32 %v4710, %v4724
        %v4730 = vmul.f32 %v4713, %v4724
        %v4731 = vmul.f32 %v4715, %v4724
        %v4732 = vmul.f32 %v4718, %v4724
        %v4733 = vadd.f32 %v4686, %v4726
        %v4734 = vadd.f32 %v4687, %v4727
        %v4735 = vadd.f32 %v4688, %v4728
        %v4736 = vadd.f32 %v4689, %v4729
        %v4737 = vadd.f32 %v4690, %v4730
        %v4738 = vadd.f32 %v4691, %v4731
        %v4739 = vadd.f32 %v4692, %v4732
        %4740 = vmatpush.bf16.msra.mxu0 0
        %4741 = vmatpush.bf16.msra.mxu0 0
        %4742 = vmatpush.bf16.msra.mxu0 0
        %4743 = vmatpush.bf16.msra.mxu0 0
        %4744 = vmatpush.bf16.msra.mxu0 %v4409
        %4745 = vmatpush.bf16.msra.mxu0 %v4406
        %4746 = vmatpush.bf16.msra.mxu0 %v4405
        %4747 = vmatpush.bf16.msra.mxu0 %v4404
        %4748 = vmatmul.bf16.gmra.mxu0 %v2716
        %v4749 = vpop.f32.mrf.mxu0
        %v4750 = vadd.f32 0.0, %v4749
        %v4751 = vpop.f32.mrf.mxu0
        %v4752 = vadd.f32 0.0, %v4751
        %4753 = vmatmul.bf16.gmra.mxu0 %v2719
        %v4754 = vpop.f32.mrf.mxu0
        %v4755 = vadd.f32 0.0, %v4754
        %v4756 = vpop.f32.mrf.mxu0
        %v4757 = vadd.f32 0.0, %v4756
        %4758 = vmatmul.bf16.gmra.mxu0 %v2722
        %v4759 = vpop.f32.mrf.mxu0
        %v4760 = vadd.f32 0.0, %v4759
        %v4761 = vpop.f32.mrf.mxu0
        %v4762 = vadd.f32 0.0, %v4761
        %4763 = vmatmul.bf16.gmra.mxu0 %v2725
        %v4764 = vpop.f32.mrf.mxu0
        %v4765 = vadd.f32 0.0, %v4764
        %v4766 = vpop.f32.mrf.mxu0
        %4767 = vdwg.mxu0
        %s4768 = scalar_lea.vmem [#allocation7], 16
        %v4769 = vld [vmem:[%s4768] sm:$0x1]
        %v4771 = vperm.slane %v4769, 0
        %v4773 = vmul.f32 %v4750, %v4771
        %v4774 = vmul.f32 %v4752, %v4771
        %v4775 = vmul.f32 %v4755, %v4771
        %v4776 = vmul.f32 %v4757, %v4771
        %v4777 = vmul.f32 %v4760, %v4771
        %v4778 = vmul.f32 %v4762, %v4771
        %v4779 = vmul.f32 %v4765, %v4771
        %v4780 = vadd.f32 %v4733, %v4773
        %v4781 = vadd.f32 %v4734, %v4774
        %v4782 = vadd.f32 %v4735, %v4775
        %v4783 = vadd.f32 %v4736, %v4776
        %v4784 = vadd.f32 %v4737, %v4777
        %v4785 = vadd.f32 %v4738, %v4778
        %v4786 = vadd.f32 %v4739, %v4779
        %4787 = vmatpush.bf16.msra.mxu0 0
        %4788 = vmatpush.bf16.msra.mxu0 0
        %4789 = vmatpush.bf16.msra.mxu0 0
        %4790 = vmatpush.bf16.msra.mxu0 0
        %4791 = vmatpush.bf16.msra.mxu0 %v4409
        %4792 = vmatpush.bf16.msra.mxu0 %v4406
        %4793 = vmatpush.bf16.msra.mxu0 %v4405
        %4794 = vmatpush.bf16.msra.mxu0 %v4404
        %4795 = vmatmul.bf16.gmra.mxu0 %v2801
        %v4796 = vpop.f32.mrf.mxu0
        %v4797 = vadd.f32 0.0, %v4796
        %v4798 = vpop.f32.mrf.mxu0
        %v4799 = vadd.f32 0.0, %v4798
        %4800 = vmatmul.bf16.gmra.mxu0 %v2804
        %v4801 = vpop.f32.mrf.mxu0
        %v4802 = vadd.f32 0.0, %v4801
        %v4803 = vpop.f32.mrf.mxu0
        %v4804 = vadd.f32 0.0, %v4803
        %4805 = vmatmul.bf16.gmra.mxu0 %v2807
        %v4806 = vpop.f32.mrf.mxu0
        %v4807 = vadd.f32 0.0, %v4806
        %v4808 = vpop.f32.mrf.mxu0
        %v4809 = vadd.f32 0.0, %v4808
        %4810 = vmatmul.bf16.gmra.mxu0 %v2810
        %v4811 = vpop.f32.mrf.mxu0
        %v4812 = vadd.f32 0.0, %v4811
        %v4813 = vpop.f32.mrf.mxu0
        %4814 = vdwg.mxu0
        %s4815 = scalar_lea.vmem [#allocation7], 17
        %v4816 = vld [vmem:[%s4815] sm:$0x1]
        %v4818 = vperm.slane %v4816, 0
        %v4820 = vmul.f32 %v4797, %v4818
        %v4821 = vmul.f32 %v4799, %v4818
        %v4822 = vmul.f32 %v4802, %v4818
        %v4823 = vmul.f32 %v4804, %v4818
        %v4824 = vmul.f32 %v4807, %v4818
        %v4825 = vmul.f32 %v4809, %v4818
        %v4826 = vmul.f32 %v4812, %v4818
        %v4827 = vadd.f32 %v4780, %v4820
        %v4828 = vadd.f32 %v4781, %v4821
        %v4829 = vadd.f32 %v4782, %v4822
        %v4830 = vadd.f32 %v4783, %v4823
        %v4831 = vadd.f32 %v4784, %v4824
        %v4832 = vadd.f32 %v4785, %v4825
        %v4833 = vadd.f32 %v4786, %v4826
        %v4835 = vperm.slane %v4403, 0
        %v4837 = vadd.f32 %v4827, %v4835
        %v4838 = vadd.f32 %v4828, %v4835
        %v4839 = vadd.f32 %v4829, %v4835
        %v4840 = vadd.f32 %v4830, %v4835
        %v4841 = vadd.f32 %v4831, %v4835
        %v4842 = vadd.f32 %v4832, %v4835
        %v4843 = vadd.f32 %v4833, %v4835
        %v4844 = vmax.f32 %v4837, 0.0
        %v4845 = vmax.f32 %v4838, 0.0
        %v4846 = vmax.f32 %v4839, 0.0
        %v4847 = vmax.f32 %v4840, 0.0
        %v4848 = vmax.f32 %v4841, 0.0
        %v4849 = vmax.f32 %v4842, 0.0
        %v4850 = vmax.f32 %v4843, 0.0
        %s4851 = scalar_lea.vmem %s4, 256
        %v4852 = vld [vmem:[%s4851] sm:$0xf]
        %v4853 = vld [vmem:[%s4851 + $0x4] sm:$0xf]
        %v4854 = vld [vmem:[%s4851 + $0x8] sm:$0xf]
        %v4855 = vld [vmem:[%s4851 + $0xc] sm:$0xf]
        %v4856 = vld [vmem:[%s4851 + $0x10] sm:$0xf]
        %v4857 = vld [vmem:[%s4851 + $0x14] sm:$0xf]
        %v4858 = vld [vmem:[%s4851 + $0x18] sm:$0xf]
        %v4859 = vld [vmem:[%s4851 + $0x1c] sm:$0xf]
        %v4860 = vld [vmem:[%s4851 + $0x20] sm:$0xf]
        %v4861 = vld [vmem:[%s4851 + $0x24] sm:$0xf]
        %v4862 = vld [vmem:[%s4851 + $0x28] sm:$0xf]
        %v4863 = vld [vmem:[%s4851 + $0x2c] sm:$0xf]
        %v4864 = vld [vmem:[%s4851 + $0x30] sm:$0xf]
        %v4865 = vld [vmem:[%s4851 + $0x34] sm:$0xf]
        %v4866 = vld [vmem:[%s4851 + $0x38] sm:$0xf]
        %v4867 = vld [vmem:[%s4851 + $0x3c] sm:$0xf]
        %s4868 = scalar_lea.vmem [#allocation9], 8
        %v4869 = vld [vmem:[%s4868] sm:$0x1]
        %v4870 = vpack.c.bf16 %v4845, %v4844
        %v4871 = vpack.c.bf16 %v4847, %v4846
        %v4872 = vpack.c.bf16 %v4849, %v4848
        %v4873 = vpack.c.bf16 %v4850, %v4850
        %v4875 = vperm.slane %v4869, 0
        %v4893 = vunpack.c.l.b16 %v4852
        %v4894 = vunpack.c.l.b16 %v4853
        %v4895 = vunpack.c.l.b16 %v4854
        %v4896 = vunpack.c.l.b16 %v4855
        %v4897 = vunpack.c.l.b16 %v4856
        %v4898 = vunpack.c.l.b16 %v4857
        %v4899 = vunpack.c.l.b16 %v4858
        %v4900 = vunpack.c.l.b16 %v4859
        %v4901 = vunpack.c.l.b16 %v4860
        %v4902 = vunpack.c.l.b16 %v4861
        %v4903 = vunpack.c.l.b16 %v4862
        %v4904 = vunpack.c.l.b16 %v4863
        %v4905 = vunpack.c.l.b16 %v4864
        %v4906 = vunpack.c.l.b16 %v4865
        %v4907 = vunpack.c.l.b16 %v4866
        %v4908 = vunpack.c.l.b16 %v4867
        %v4909 = vpack.c.b16 %v4894, %v4893
        %v4910 = vpack.c.b16 %v4896, %v4895
        %v4911 = vpack.c.b16 %v4898, %v4897
        %v4912 = vpack.c.b16 %v4900, %v4899
        %v4913 = vpack.c.b16 %v4902, %v4901
        %v4914 = vpack.c.b16 %v4904, %v4903
        %v4915 = vpack.c.b16 %v4906, %v4905
        %v4916 = vpack.c.b16 %v4908, %v4907
        %4925 = vmatpush.bf16.msra.mxu0 %v4916
        %4926 = vmatpush.bf16.msra.mxu0 %v4915
        %4927 = vmatpush.bf16.msra.mxu0 %v4914
        %4928 = vmatpush.bf16.msra.mxu0 %v4913
        %4929 = vmatpush.bf16.msra.mxu0 %v4912
        %4930 = vmatpush.bf16.msra.mxu0 %v4911
        %4931 = vmatpush.bf16.msra.mxu0 %v4910
        %4932 = vmatpush.bf16.msra.mxu0 %v4909
        %4933 = vmatmul.bf16.gmra.mxu0 %v4870
        %v4934 = vpop.f32.mrf.mxu0
        %v4935 = vadd.f32 %v4875, %v4934
        %v4936 = vpop.f32.mrf.mxu0
        %v4937 = vadd.f32 %v4875, %v4936
        %4938 = vmatmul.bf16.gmra.mxu0 %v4871
        %v4939 = vpop.f32.mrf.mxu0
        %v4940 = vadd.f32 %v4875, %v4939
        %v4941 = vpop.f32.mrf.mxu0
        %v4942 = vadd.f32 %v4875, %v4941
        %4943 = vmatmul.bf16.gmra.mxu0 %v4872
        %v4944 = vpop.f32.mrf.mxu0
        %v4945 = vadd.f32 %v4875, %v4944
        %v4946 = vpop.f32.mrf.mxu0
        %v4947 = vadd.f32 %v4875, %v4946
        %4948 = vmatmul.bf16.gmra.mxu0 %v4873
        %v4949 = vpop.f32.mrf.mxu0
        %v4950 = vadd.f32 %v4875, %v4949
        %v4951 = vpop.f32.mrf.mxu0
        %4952 = vdwg.mxu0
        %v4953 = vmax.f32 %v4935, 0.0
        %v4954 = vmax.f32 %v4937, 0.0
        %v4955 = vmax.f32 %v4940, 0.0
        %v4956 = vmax.f32 %v4942, 0.0
        %v4957 = vmax.f32 %v4945, 0.0
        %v4958 = vmax.f32 %v4947, 0.0
        %v4959 = vmax.f32 %v4950, 0.0
        %s4960 = scalar_lea.vmem %s4, 320
        %v4961 = vld [vmem:[%s4960] sm:$0xf]
        %v4962 = vld [vmem:[%s4960 + $0x4] sm:$0xf]
        %v4963 = vld [vmem:[%s4960 + $0x8] sm:$0xf]
        %v4964 = vld [vmem:[%s4960 + $0xc] sm:$0xf]
        %v4965 = vld [vmem:[%s4960 + $0x10] sm:$0xf]
        %v4966 = vld [vmem:[%s4960 + $0x14] sm:$0xf]
        %v4967 = vld [vmem:[%s4960 + $0x18] sm:$0xf]
        %v4968 = vld [vmem:[%s4960 + $0x1c] sm:$0xf]
        %v4969 = vld [vmem:[%s4960 + $0x20] sm:$0xf]
        %v4970 = vld [vmem:[%s4960 + $0x24] sm:$0xf]
        %v4971 = vld [vmem:[%s4960 + $0x28] sm:$0xf]
        %v4972 = vld [vmem:[%s4960 + $0x2c] sm:$0xf]
        %v4973 = vld [vmem:[%s4960 + $0x30] sm:$0xf]
        %v4974 = vld [vmem:[%s4960 + $0x34] sm:$0xf]
        %v4975 = vld [vmem:[%s4960 + $0x38] sm:$0xf]
        %v4976 = vld [vmem:[%s4960 + $0x3c] sm:$0xf]
        %s4977 = scalar_lea.vmem [#allocation9], 9
        %v4978 = vld [vmem:[%s4977] sm:$0x1]
        %v4979 = vpack.c.bf16 %v4954, %v4953
        %v4980 = vpack.c.bf16 %v4956, %v4955
        %v4981 = vpack.c.bf16 %v4958, %v4957
        %v4982 = vpack.c.bf16 %v4959, %v4959
        %v4984 = vperm.slane %v4978, 0
        %v5002 = vunpack.c.l.b16 %v4961
        %v5003 = vunpack.c.l.b16 %v4962
        %v5004 = vunpack.c.l.b16 %v4963
        %v5005 = vunpack.c.l.b16 %v4964
        %v5006 = vunpack.c.l.b16 %v4965
        %v5007 = vunpack.c.l.b16 %v4966
        %v5008 = vunpack.c.l.b16 %v4967
        %v5009 = vunpack.c.l.b16 %v4968
        %v5010 = vunpack.c.l.b16 %v4969
        %v5011 = vunpack.c.l.b16 %v4970
        %v5012 = vunpack.c.l.b16 %v4971
        %v5013 = vunpack.c.l.b16 %v4972
        %v5014 = vunpack.c.l.b16 %v4973
        %v5015 = vunpack.c.l.b16 %v4974
        %v5016 = vunpack.c.l.b16 %v4975
        %v5017 = vunpack.c.l.b16 %v4976
        %v5018 = vpack.c.b16 %v5003, %v5002
        %v5019 = vpack.c.b16 %v5005, %v5004
        %v5020 = vpack.c.b16 %v5007, %v5006
        %v5021 = vpack.c.b16 %v5009, %v5008
        %v5022 = vpack.c.b16 %v5011, %v5010
        %v5023 = vpack.c.b16 %v5013, %v5012
        %v5024 = vpack.c.b16 %v5015, %v5014
        %v5025 = vpack.c.b16 %v5017, %v5016
        %5034 = vmatpush.bf16.msra.mxu0 %v5025
        %5035 = vmatpush.bf16.msra.mxu0 %v5024
        %5036 = vmatpush.bf16.msra.mxu0 %v5023
        %5037 = vmatpush.bf16.msra.mxu0 %v5022
        %5038 = vmatpush.bf16.msra.mxu0 %v5021
        %5039 = vmatpush.bf16.msra.mxu0 %v5020
        %5040 = vmatpush.bf16.msra.mxu0 %v5019
        %5041 = vmatpush.bf16.msra.mxu0 %v5018
        %5042 = vmatmul.bf16.gmra.mxu0 %v4979
        %v5043 = vpop.f32.mrf.mxu0
        %v5044 = vadd.f32 %v4984, %v5043
        %v5045 = vpop.f32.mrf.mxu0
        %v5046 = vadd.f32 %v4984, %v5045
        %5047 = vmatmul.bf16.gmra.mxu0 %v4980
        %v5048 = vpop.f32.mrf.mxu0
        %v5049 = vadd.f32 %v4984, %v5048
        %v5050 = vpop.f32.mrf.mxu0
        %v5051 = vadd.f32 %v4984, %v5050
        %5052 = vmatmul.bf16.gmra.mxu0 %v4981
        %v5053 = vpop.f32.mrf.mxu0
        %v5054 = vadd.f32 %v4984, %v5053
        %v5055 = vpop.f32.mrf.mxu0
        %v5056 = vadd.f32 %v4984, %v5055
        %5057 = vmatmul.bf16.gmra.mxu0 %v4982
        %v5058 = vpop.f32.mrf.mxu0
        %v5059 = vadd.f32 %v4984, %v5058
        %v5060 = vpop.f32.mrf.mxu0
        %5061 = vdwg.mxu0
        %v5062 = vadd.f32 %v5044, %v4286
        %v5063 = vadd.f32 %v5046, %v4287
        %v5064 = vadd.f32 %v5049, %v4288
        %v5065 = vadd.f32 %v5051, %v4289
        %v5066 = vadd.f32 %v5054, %v4290
        %v5067 = vadd.f32 %v5056, %v4291
        %v5068 = vadd.f32 %v5059, %v4292
        %s5069 = scalar_lea.vmem %s4, 384
        %v5070 = vld [vmem:[%s5069] sm:$0xf]
        %v5071 = vld [vmem:[%s5069 + $0x4] sm:$0xf]
        %v5072 = vld [vmem:[%s5069 + $0x8] sm:$0xf]
        %v5073 = vld [vmem:[%s5069 + $0xc] sm:$0xf]
        %v5074 = vld [vmem:[%s5069 + $0x10] sm:$0xf]
        %v5075 = vld [vmem:[%s5069 + $0x14] sm:$0xf]
        %v5076 = vld [vmem:[%s5069 + $0x18] sm:$0xf]
        %v5077 = vld [vmem:[%s5069 + $0x1c] sm:$0xf]
        %v5078 = vld [vmem:[%s5069 + $0x20] sm:$0xf]
        %v5079 = vld [vmem:[%s5069 + $0x24] sm:$0xf]
        %v5080 = vld [vmem:[%s5069 + $0x28] sm:$0xf]
        %v5081 = vld [vmem:[%s5069 + $0x2c] sm:$0xf]
        %v5082 = vld [vmem:[%s5069 + $0x30] sm:$0xf]
        %v5083 = vld [vmem:[%s5069 + $0x34] sm:$0xf]
        %v5084 = vld [vmem:[%s5069 + $0x38] sm:$0xf]
        %v5085 = vld [vmem:[%s5069 + $0x3c] sm:$0xf]
        %v5102 = vunpack.c.l.b16 %v5070
        %v5103 = vunpack.c.l.b16 %v5071
        %v5104 = vunpack.c.l.b16 %v5072
        %v5105 = vunpack.c.l.b16 %v5073
        %v5106 = vunpack.c.l.b16 %v5074
        %v5107 = vunpack.c.l.b16 %v5075
        %v5108 = vunpack.c.l.b16 %v5076
        %v5109 = vunpack.c.l.b16 %v5077
        %v5110 = vunpack.c.l.b16 %v5078
        %v5111 = vunpack.c.l.b16 %v5079
        %v5112 = vunpack.c.l.b16 %v5080
        %v5113 = vunpack.c.l.b16 %v5081
        %v5114 = vunpack.c.l.b16 %v5082
        %v5115 = vunpack.c.l.b16 %v5083
        %v5116 = vunpack.c.l.b16 %v5084
        %v5117 = vunpack.c.l.b16 %v5085
        %v5118 = vpack.c.b16 %v5103, %v5102
        %v5119 = vpack.c.b16 %v5105, %v5104
        %v5120 = vpack.c.b16 %v5107, %v5106
        %v5121 = vpack.c.b16 %v5109, %v5108
        %v5122 = vpack.c.b16 %v5111, %v5110
        %v5123 = vpack.c.b16 %v5113, %v5112
        %v5124 = vpack.c.b16 %v5115, %v5114
        %v5125 = vpack.c.b16 %v5117, %v5116
        %5134 = vmatpush.bf16.msra.mxu0 %v5125
        %5135 = vmatpush.bf16.msra.mxu0 %v5124
        %5136 = vmatpush.bf16.msra.mxu0 %v5123
        %5137 = vmatpush.bf16.msra.mxu0 %v5122
        %5138 = vmatpush.bf16.msra.mxu0 %v5121
        %5139 = vmatpush.bf16.msra.mxu0 %v5120
        %5140 = vmatpush.bf16.msra.mxu0 %v5119
        %5141 = vmatpush.bf16.msra.mxu0 %v5118
        %5142 = vmatmul.bf16.gmra.mxu0 %v1993
        %v5143 = vpop.f32.mrf.mxu0
        %v5144 = vadd.f32 0.0, %v5143
        %v5145 = vpop.f32.mrf.mxu0
        %v5146 = vadd.f32 0.0, %v5145
        %5147 = vmatmul.bf16.gmra.mxu0 %v1994
        %v5148 = vpop.f32.mrf.mxu0
        %v5149 = vadd.f32 0.0, %v5148
        %v5150 = vpop.f32.mrf.mxu0
        %v5151 = vadd.f32 0.0, %v5150
        %5152 = vmatmul.bf16.gmra.mxu0 %v1995
        %v5153 = vpop.f32.mrf.mxu0
        %v5154 = vadd.f32 0.0, %v5153
        %v5155 = vpop.f32.mrf.mxu0
        %v5156 = vadd.f32 0.0, %v5155
        %5157 = vmatmul.bf16.gmra.mxu0 %v1996
        %v5158 = vpop.f32.mrf.mxu0
        %v5159 = vadd.f32 0.0, %v5158
        %v5160 = vpop.f32.mrf.mxu0
        %5161 = vdwg.mxu0
        %v5162 = vadd.f32 %v5062, %v5144
        %v5163 = vadd.f32 %v5063, %v5146
        %v5164 = vadd.f32 %v5064, %v5149
        %v5165 = vadd.f32 %v5065, %v5151
        %v5166 = vadd.f32 %v5066, %v5154
        %v5167 = vadd.f32 %v5067, %v5156
        %v5168 = vadd.f32 %v5068, %v5159
        %v5169 = vld [vmem:[#allocation10] sm:$0xff]
        %v5170 = vld [vmem:[#allocation10 + $0x8] sm:$0xff]
        %v5171 = vld [vmem:[#allocation10 + $0x10] sm:$0xff]
        %v5172 = vld [vmem:[#allocation10 + $0x18] sm:$0xff]
        %v5173 = vld [vmem:[#allocation10 + $0x20] sm:$0xff]
        %v5174 = vld [vmem:[#allocation10 + $0x28] sm:$0xff]
        %v5175 = vld [vmem:[#allocation10 + $0x30] sm:$0xff]
        %v5176 = vld [vmem:[#allocation10 + $0x38] sm:$0xff]
        %v5177 = vld [vmem:[#allocation10 + $0x40] sm:$0xff]
        %v5178 = vld [vmem:[#allocation10 + $0x48] sm:$0xff]
        %v5179 = vld [vmem:[#allocation10 + $0x50] sm:$0xff]
        %v5180 = vld [vmem:[#allocation10 + $0x58] sm:$0xff]
        %v5181 = vld [vmem:[#allocation10 + $0x60] sm:$0xff]
        %v5182 = vld [vmem:[#allocation10 + $0x68] sm:$0xff]
        %v5183 = vld [vmem:[#allocation10 + $0x70] sm:$0xff]
        %v5184 = vld [vmem:[#allocation10 + $0x78] sm:$0xff]
        %5185 = vmatpush.msra.mxu0 %v5184
        %5186 = vmatpush.msra.mxu0 %v5183
        %5187 = vmatpush.msra.mxu0 %v5182
        %5188 = vmatpush.msra.mxu0 %v5181
        %5189 = vmatpush.msra.mxu0 %v5180
        %5190 = vmatpush.msra.mxu0 %v5179
        %5191 = vmatpush.msra.mxu0 %v5178
        %5192 = vmatpush.msra.mxu0 %v5177
        %5193 = vmatpush.msra.mxu0 %v5176
        %5194 = vmatpush.msra.mxu0 %v5175
        %5195 = vmatpush.msra.mxu0 %v5174
        %5196 = vmatpush.msra.mxu0 %v5173
        %5197 = vmatpush.msra.mxu0 %v5172
        %5198 = vmatpush.msra.mxu0 %v5171
        %5199 = vmatpush.msra.mxu0 %v5170
        %5200 = vmatpush.msra.mxu0 %v5169
        %5201 = vmatmul.f32.gmra.mxu0 %v5162
        %v5202 = vpop.f32.mrf.mxu0
        %v5203 = vadd.f32 0.0, %v5202
        %5204 = vmatmul.f32.gmra.mxu0 %v5163
        %v5205 = vpop.f32.mrf.mxu0
        %v5206 = vadd.f32 0.0, %v5205
        %5207 = vmatmul.f32.gmra.mxu0 %v5164
        %v5208 = vpop.f32.mrf.mxu0
        %v5209 = vadd.f32 0.0, %v5208
        %5210 = vmatmul.f32.gmra.mxu0 %v5165
        %v5211 = vpop.f32.mrf.mxu0
        %v5212 = vadd.f32 0.0, %v5211
        %5213 = vmatmul.f32.gmra.mxu0 %v5166
        %v5214 = vpop.f32.mrf.mxu0
        %v5215 = vadd.f32 0.0, %v5214
        %5216 = vmatmul.f32.gmra.mxu0 %v5167
        %v5217 = vpop.f32.mrf.mxu0
        %v5218 = vadd.f32 0.0, %v5217
        %5219 = vmatmul.f32.gmra.mxu0 %v5168
        %v5220 = vpop.f32.mrf.mxu0
        %v5221 = vadd.f32 0.0, %v5220
        %5222 = vdwg.mxu0
        %v5223 = vadd.f32 %v5203, %v5206
        %v5224 = vadd.f32 %v5223, %v5209
        %v5225 = vadd.f32 %v5224, %v5212
        %v5226 = vadd.f32 %v5225, %v5215
        %v5227 = vadd.f32 %v5226, %v5218
        %v5228 = vsel %vm2127, %v5221, 0.0
        %v5229 = vadd.f32 %v5227, %v5228
        %v5230 = vrot.slane %v5229, 4
        %v5231 = vadd.f32 %v5229, %v5230
        %v5232 = vrot.slane %v5231, 2
        %v5233 = vadd.f32 %v5231, %v5232
        %v5234 = vrot.slane %v5233, 1
        %v5235 = vadd.f32 %v5233, %v5234
        %v5236 = vmul.f32 %v5235, 0.020408163
        %s5237 = scalar_lea.vmem [#allocation9], 10
        %v5238 = vld [vmem:[%s5237] sm:$0x1]
        %v5239 = vadd.f32 %v5236, %v5238
        %s5240 = scalar_lea.vmem [#allocation9], 11
        %v5241 = vld [vmem:[%s5240] sm:$0x1]
        %vm5242 = vcmp.gt.f32.partialorder %v5241, 0.0
        %v5243 = vmax.f32 %v5239, 0.0
        %v5244 = vsel %vm5242, %v5243, %v5239
        %5245 = vst [vmem:[%s428] sm:$0x1] %v5244
        %p5246 = scmp.lt.s32.totalorder %s24, 1
        %s5247 = scalar_select %p5246, %s24, 1
        %s5248 = scalar_lea.vmem %s9, %s5247
        // Predicated region
        $region81: #{fwd.1} parent=55 // pred_check
          %p5249 = pneg %p236
        $region82: #{fwd.1} parent=55 // pred_check_branch
          %5251 = sbr.rel (%p5249) target = $region84
        $region83: #{fwd.1} parent=55 // pred_region
          _
        $region84: #{fwd.1} parent=55 // pred_fallthru
          _
      $region56: #{fwd.1} parent=5 // pred_fallthru
        _
      %p5252 = scmp.le.s32.totalorder 2, %s19
      // Predicated region
      $region85: #{fwd.1} parent=5 // pred_check
        %p5253 = pneg %p5252
      $region86: #{fwd.1} parent=5 // pred_check_branch
        %5255 = sbr.rel (%p5253) target = $region88
      $region87: #{fwd.1} parent=5 // pred_region
        %s5256 = ssub.s32 %s19, 2
        // Predicated region
        $region89: #{fwd.1} parent=87 // pred_check
          %p5257 = pneg %p242
        $region90: #{fwd.1} parent=87 // pred_check_branch
          %5259 = sbr.rel (%p5257) target = $region92
        $region91: #{fwd.1} parent=87 // pred_region
          %p5260 = scmp.lt.s32.totalorder %s25, 1
          %s5261 = scalar_select %p5260, %s25, 1
          %s5262 = scalar_lea.vmem %s9, %s5261
        $region92: #{fwd.1} parent=87 // pred_fallthru
          _
      $region88: #{fwd.1} parent=5 // pred_fallthru
        _
    $region6: #{fwd.1} parent=1 // loop_footer
      %s23 = sadd.s32 1, %s19
    $region7: #{fwd.1} parent=1 // loop_footer_branch
      %18 = sbr.rel target = $region3
    $region8: #{fwd.1} parent=1 // loop_exit
      _
    %5263 = vsyncpa [#allocation3], 1
    %s5264 = scalar_lea.sflag [#allocation3], 1
    %5265 = vsyncpa %s5264, 1
    %5266 = vsyncpa [#allocation5], 1
    %5267 = vsyncpa [#allocation8], 1
    %5268 = vsyncpa [#allocation11], 1

</llo_original>
